<compile_context>
chip_gen: v6e
topology: v6e:2x2x1
jax: 0.10.0
libtpu: 0.0.40
codegen_flags: <defaults>
</compile_context>

<pallas_src>
import functools

import jax
import jax.numpy as jnp
from jax.experimental import pallas as pl
from jax.experimental.pallas import tpu as pltpu


def _round_up(x, m):
    return ((x + m - 1) // m) * m


def classifier_kernel(tok_ref, emb_hbm, w1_ref, b1_ref, w2_ref, b2_ref,
                      out_ref, ebuf, dma_sem, *, batch_tile, seq_len, nbuf):
    """One grid step = one tile of `batch_tile` batch rows.

    tok_ref : SMEM (b_pad*S,) int32        scalar-prefetched, flattened token ids
    emb_hbm : HBM  (V, h_pad) f32          embedding table, gathered via DMA
    w1/b1/w2/b2 : VMEM dense params        (weights bf16, biases f32)
    ebuf    : VMEM (nbuf, batch_tile, h_pad) f32   sliding gather window
    dma_sem : DMA semaphores (nbuf,)       one per window slot
    """
    b0 = pl.program_id(0) * batch_tile
    h_pad = ebuf.shape[2]

    def read_toks(s):
        # SMEM scalar reads for one sequence position across the batch tile.
        return [tok_ref[(b0 + b) * seq_len + s] for b in range(batch_tile)]

    def issue(slot, toks):
        # batch_tile independent single-row gathers, all signalling slot's sem.
        for b in range(batch_tile):
            pltpu.make_async_copy(
                emb_hbm.at[pl.ds(toks[b], 1), :],
                ebuf.at[slot, pl.ds(b, 1), :],
                dma_sem.at[slot],
            ).start()

    # Prime: issue gathers for the first `nbuf` sequence positions
    # (batch_tile * nbuf small row DMAs in flight; no per-row prime/drain).
    for s in range(min(nbuf, seq_len)):
        issue(s % nbuf, read_toks(s))

    acc = jnp.zeros((batch_tile, h_pad), jnp.float32)
    for s in range(seq_len):
        slot = s % nbuf
        s_next = s + nbuf
        # Hoist next-window SMEM token reads above the DMA waits
        # (.wait() breaks SMEM sst->sld forwarding).
        toks_next = read_toks(s_next) if s_next < seq_len else None

        # Drain this slot: one wait per issued copy, with a matching
        # (1, h_pad) descriptor so the semaphore accounting is exact.
        for b in range(batch_tile):
            pltpu.make_async_copy(
                emb_hbm.at[pl.ds(0, 1), :],
                ebuf.at[slot, pl.ds(b, 1), :],
                dma_sem.at[slot],
            ).wait()

        # Sublane-dense accumulate: a full (batch_tile, h_pad) slab per step.
        acc = acc + ebuf[slot]

        # Refill the freed slot (after the read above -> no RAW race).
        if toks_next is not None:
            issue(slot, toks_next)

    pooled = acc * (1.0 / seq_len)                      # mean pool, f32
    h = jnp.tanh(
        jnp.dot(pooled.astype(jnp.bfloat16), w1_ref[...],
                preferred_element_type=jnp.float32) + b1_ref[...])
    out_ref[...] = (
        jnp.dot(h.astype(jnp.bfloat16), w2_ref[...],
                preferred_element_type=jnp.float32) + b2_ref[...])


def prepare_text_classifier_params(emb_table, w1, b1, w2, b2):
    """One-time padding / casting of parameters, OUTSIDE the per-call path.

    Re-padding the whole vocab table on every invocation would dwarf the
    kernel at realistic vocab sizes, so it is done exactly once here.
    """
    V, H = emb_table.shape
    C = w2.shape[1]
    h_pad = _round_up(H, 128)           # lane-dense hidden dim
    c_pad = _round_up(C, 128)           # lane-dense logits (dense vst)

    # Embedding table kept f32: a single-row DMA destination inside a packed
    # bf16 (sublane-paired) VMEM tile is not cleanly expressible, and the
    # gather phase is latency- (not bandwidth-) bound at 512 B/row.
    emb_p = jnp.zeros((V, h_pad), jnp.float32).at[:, :H].set(
        emb_table.astype(jnp.float32))
    w1_p = jnp.zeros((h_pad, h_pad), jnp.bfloat16).at[:H, :H].set(
        w1.astype(jnp.bfloat16))
    b1_p = jnp.zeros((1, h_pad), jnp.float32).at[:, :H].set(
        b1.reshape(1, -1).astype(jnp.float32))
    w2_p = jnp.zeros((h_pad, c_pad), jnp.bfloat16).at[:H, :C].set(
        w2.astype(jnp.bfloat16))
    b2_p = jnp.zeros((1, c_pad), jnp.float32).at[:, :C].set(
        b2.reshape(1, -1).astype(jnp.float32))
    return {"emb": emb_p, "w1": w1_p, "b1": b1_p, "w2": w2_p, "b2": b2_p,
            "H": H, "C": C, "h_pad": h_pad, "c_pad": c_pad}


def text_classifier_logits(token_ids, params, *, batch_tile=None):
    B, S = token_ids.shape
    h_pad, c_pad, C = params["h_pad"], params["c_pad"], params["C"]

    if batch_tile is None:
        # Fill the MXU M dimension for large batches; stay tight for small B.
        batch_tile = min(128, max(8, _round_up(B, 8)))
    b_pad = _round_up(B, batch_tile)
    # Sliding window of gather slabs -> batch_tile * nbuf DMAs in flight
    # (== all of them when S <= 8).
    nbuf = min(S, 8)

    # Token ids flattened to 1-D so SMEM pads to next-pow2 only (a 2-D
    # (b_pad, S) int32 array would pad its minor dim to 128 words).
    tok_p = jnp.zeros((b_pad * S,), jnp.int32).at[:B * S].set(
        token_ids.astype(jnp.int32).reshape(-1))

    grid = (b_pad // batch_tile,)
    kernel = functools.partial(classifier_kernel, batch_tile=batch_tile,
                               seq_len=S, nbuf=nbuf)

    flops = (b_pad * S * h_pad                 # pooling adds
             + 2 * b_pad * h_pad * h_pad       # pooler dense
             + 2 * b_pad * h_pad * c_pad)      # classifier dense
    bytes_accessed = (b_pad * S * h_pad * 4    # gathered embedding rows (f32)
                      + h_pad * h_pad * 2 + h_pad * c_pad * 2   # bf16 weights
                      + h_pad * 4 + c_pad * 4                   # biases
                      + b_pad * S * 4 + b_pad * c_pad * 4)      # tokens + out

    out = pl.pallas_call(
        kernel,
        out_shape=jax.ShapeDtypeStruct((b_pad, c_pad), jnp.float32),
        grid_spec=pltpu.PrefetchScalarGridSpec(
            num_scalar_prefetch=1,             # token ids -> SMEM
            grid=grid,
            in_specs=[
                pl.BlockSpec(memory_space=pl.ANY),                    # emb table in HBM
                pl.BlockSpec((h_pad, h_pad), lambda i, tok: (0, 0)),  # w1
                pl.BlockSpec((1, h_pad), lambda i, tok: (0, 0)),      # b1
                pl.BlockSpec((h_pad, c_pad), lambda i, tok: (0, 0)),  # w2
                pl.BlockSpec((1, c_pad), lambda i, tok: (0, 0)),      # b2
            ],
            out_specs=pl.BlockSpec((batch_tile, c_pad), lambda i, tok: (i, 0)),
            scratch_shapes=[
                pltpu.VMEM((nbuf, batch_tile, h_pad), jnp.float32),  # gather window
                pltpu.SemaphoreType.DMA((nbuf,)),                    # one sem per slot
            ],
        ),
        compiler_params=pltpu.CompilerParams(
            dimension_semantics=("parallel",),  # megacore-shard batch tiles on v7x
            vmem_limit_bytes=32 * 1024 * 1024,  # safe on v5e / v6e / v7x
        ),
        cost_estimate=pl.CostEstimate(
            flops=flops, transcendentals=b_pad * h_pad,
            bytes_accessed=bytes_accessed),
    )(tok_p, params["emb"], params["w1"], params["b1"], params["w2"], params["b2"])

    return out[:B, :C]


def _reference_logits(token_ids, emb_table, w1, b1, w2, b2):
    # Mirrors the kernel numerics: f32 embeddings, bf16-stored weights,
    # f32 accumulation.
    emb = jnp.take(emb_table, token_ids, axis=0)
    pooled = jnp.mean(emb, axis=1)
    h = jnp.tanh(jnp.dot(pooled.astype(jnp.bfloat16), w1.astype(jnp.bfloat16),
                         preferred_element_type=jnp.float32) + b1)
    return jnp.dot(h.astype(jnp.bfloat16), w2.astype(jnp.bfloat16),
                   preferred_element_type=jnp.float32) + b2


if __name__ == "__main__":
    B, S, H, C, V = 2, 8, 32, 4, 100

    key = jax.random.PRNGKey(0)
    k_tok, k_emb, k_w1, k_w2 = jax.random.split(key, 4)

    token_ids = jax.random.randint(k_tok, (B, S), 0, V, dtype=jnp.int32)
    emb_table = jax.random.normal(k_emb, (V, H), jnp.float32) * 0.02
    w1 = jax.random.normal(k_w1, (H, H), jnp.float32) * 0.1
    b1 = jnp.zeros((1, H), jnp.float32)
    w2 = jax.random.normal(k_w2, (H, C), jnp.float32) * 0.1
    b2 = jnp.zeros((1, C), jnp.float32)

    params = prepare_text_classifier_params(emb_table, w1, b1, w2, b2)  # once

    logits = text_classifier_logits(token_ids, params)
    jax.block_until_ready(logits)

    ref = _reference_logits(token_ids, emb_table, w1, b1, w2, b2)
    assert logits.shape == (B, C)
    assert jnp.allclose(logits, ref, atol=3e-5, rtol=3e-5)

    print("KERNEL_OK")
</pallas_src>

<mosaic_0001>
module attributes {stable_mosaic.version = 11 : i64} {
  func.func @classifier_kernel(%arg0: i32, %arg1: memref<64xi32, #tpu.memory_space<smem>>, %arg2: memref<100x128xf32, #tpu.memory_space<any>>, %arg3: memref<128x128xbf16, #tpu.memory_space<vmem>>, %arg4: memref<1x128xf32, #tpu.memory_space<vmem>>, %arg5: memref<128x128xbf16, #tpu.memory_space<vmem>>, %arg6: memref<1x128xf32, #tpu.memory_space<vmem>>, %arg7: memref<8x128xf32, #tpu.memory_space<vmem>>, %arg8: memref<8x8x128xf32, #tpu.memory_space<vmem>>, %arg9: memref<8x!tpu.dma_semaphore, #tpu.memory_space<semaphore_mem>>) attributes {dimension_semantics = [#tpu.dimension_semantics<parallel>], iteration_bounds = array<i64: 1>, scalar_prefetch = 1 : i64, scratch_operands = 2 : i64, tpu.core_type = #tpu.core_type<tc>, window_params = [{}, {pipeline_mode = #tpu.pipeline_mode<synchronous>, transform_indices = @transform_1, window_bounds = array<i64: 128, 128>}, {pipeline_mode = #tpu.pipeline_mode<synchronous>, transform_indices = @transform_2, window_bounds = array<i64: 1, 128>}, {pipeline_mode = #tpu.pipeline_mode<synchronous>, transform_indices = @transform_3, window_bounds = array<i64: 128, 128>}, {pipeline_mode = #tpu.pipeline_mode<synchronous>, transform_indices = @transform_4, window_bounds = array<i64: 1, 128>}, {transform_indices = @transform_5, window_bounds = array<i64: 8, 128>}]} {
    %c8_i32 = arith.constant 8 : i32
    %0 = arith.muli %arg0, %c8_i32 : i32
    %c0_i32 = arith.constant 0 : i32
    %1 = arith.addi %0, %c0_i32 : i32
    %c8_i32_0 = arith.constant 8 : i32
    %2 = arith.muli %1, %c8_i32_0 : i32
    %c0_i32_1 = arith.constant 0 : i32
    %3 = arith.addi %2, %c0_i32_1 : i32
    %4 = arith.index_cast %3 : i32 to index
    %5 = memref.load %arg1[%4] : memref<64xi32, #tpu.memory_space<smem>>
    %c1_i32 = arith.constant 1 : i32
    %6 = arith.addi %0, %c1_i32 : i32
    %c8_i32_2 = arith.constant 8 : i32
    %7 = arith.muli %6, %c8_i32_2 : i32
    %c0_i32_3 = arith.constant 0 : i32
    %8 = arith.addi %7, %c0_i32_3 : i32
    %9 = arith.index_cast %8 : i32 to index
    %10 = memref.load %arg1[%9] : memref<64xi32, #tpu.memory_space<smem>>
    %c2_i32 = arith.constant 2 : i32
    %11 = arith.addi %0, %c2_i32 : i32
    %c8_i32_4 = arith.constant 8 : i32
    %12 = arith.muli %11, %c8_i32_4 : i32
    %c0_i32_5 = arith.constant 0 : i32
    %13 = arith.addi %12, %c0_i32_5 : i32
    %14 = arith.index_cast %13 : i32 to index
    %15 = memref.load %arg1[%14] : memref<64xi32, #tpu.memory_space<smem>>
    %c3_i32 = arith.constant 3 : i32
    %16 = arith.addi %0, %c3_i32 : i32
    %c8_i32_6 = arith.constant 8 : i32
    %17 = arith.muli %16, %c8_i32_6 : i32
    %c0_i32_7 = arith.constant 0 : i32
    %18 = arith.addi %17, %c0_i32_7 : i32
    %19 = arith.index_cast %18 : i32 to index
    %20 = memref.load %arg1[%19] : memref<64xi32, #tpu.memory_space<smem>>
    %c4_i32 = arith.constant 4 : i32
    %21 = arith.addi %0, %c4_i32 : i32
    %c8_i32_8 = arith.constant 8 : i32
    %22 = arith.muli %21, %c8_i32_8 : i32
    %c0_i32_9 = arith.constant 0 : i32
    %23 = arith.addi %22, %c0_i32_9 : i32
    %24 = arith.index_cast %23 : i32 to index
    %25 = memref.load %arg1[%24] : memref<64xi32, #tpu.memory_space<smem>>
    %c5_i32 = arith.constant 5 : i32
    %26 = arith.addi %0, %c5_i32 : i32
    %c8_i32_10 = arith.constant 8 : i32
    %27 = arith.muli %26, %c8_i32_10 : i32
    %c0_i32_11 = arith.constant 0 : i32
    %28 = arith.addi %27, %c0_i32_11 : i32
    %29 = arith.index_cast %28 : i32 to index
    %30 = memref.load %arg1[%29] : memref<64xi32, #tpu.memory_space<smem>>
    %c6_i32 = arith.constant 6 : i32
    %31 = arith.addi %0, %c6_i32 : i32
    %c8_i32_12 = arith.constant 8 : i32
    %32 = arith.muli %31, %c8_i32_12 : i32
    %c0_i32_13 = arith.constant 0 : i32
    %33 = arith.addi %32, %c0_i32_13 : i32
    %34 = arith.index_cast %33 : i32 to index
    %35 = memref.load %arg1[%34] : memref<64xi32, #tpu.memory_space<smem>>
    %c7_i32 = arith.constant 7 : i32
    %36 = arith.addi %0, %c7_i32 : i32
    %c8_i32_14 = arith.constant 8 : i32
    %37 = arith.muli %36, %c8_i32_14 : i32
    %c0_i32_15 = arith.constant 0 : i32
    %38 = arith.addi %37, %c0_i32_15 : i32
    %39 = arith.index_cast %38 : i32 to index
    %40 = memref.load %arg1[%39] : memref<64xi32, #tpu.memory_space<smem>>
    %c0_i32_16 = arith.constant 0 : i32
    %c0_i32_17 = arith.constant 0 : i32
    %c0_i32_18 = arith.constant 0 : i32
    %41 = tpu.memref_slice %arg2[%5, %c0_i32_18] : memref<100x128xf32, #tpu.memory_space<any>> -> memref<1x128xf32, #tpu.memory_space<any>>
    %c0_i32_19 = arith.constant 0 : i32
    %c0_i32_20 = arith.constant 0 : i32
    %42 = tpu.memref_slice %arg8[%c0_i32_16, %c0_i32_19, %c0_i32_20] : memref<8x8x128xf32, #tpu.memory_space<vmem>> -> memref<1x1x128xf32, #tpu.memory_space<vmem>>
    %43 = tpu.memref_squeeze %42 : memref<1x1x128xf32, #tpu.memory_space<vmem>> -> memref<1x128xf32, #tpu.memory_space<vmem>>
    %44 = tpu.memref_slice %arg9[%c0_i32_17] : memref<8x!tpu.dma_semaphore, #tpu.memory_space<semaphore_mem>> -> memref<1x!tpu.dma_semaphore, #tpu.memory_space<semaphore_mem>>
    %45 = tpu.memref_squeeze %44 : memref<1x!tpu.dma_semaphore, #tpu.memory_space<semaphore_mem>> -> memref<!tpu.dma_semaphore, #tpu.memory_space<semaphore_mem>>
    tpu.enqueue_dma source(%41 : memref<1x128xf32, #tpu.memory_space<any>>) target(%43 : memref<1x128xf32, #tpu.memory_space<vmem>>) target_semaphore(%45 : memref<!tpu.dma_semaphore, #tpu.memory_space<semaphore_mem>>)
    %c0_i32_21 = arith.constant 0 : i32
    %c0_i32_22 = arith.constant 0 : i32
    %c0_i32_23 = arith.constant 0 : i32
    %46 = tpu.memref_slice %arg2[%10, %c0_i32_23] : memref<100x128xf32, #tpu.memory_space<any>> -> memref<1x128xf32, #tpu.memory_space<any>>
    %c1_i32_24 = arith.constant 1 : i32
    %c0_i32_25 = arith.constant 0 : i32
    %47 = tpu.memref_slice %arg8[%c0_i32_21, %c1_i32_24, %c0_i32_25] : memref<8x8x128xf32, #tpu.memory_space<vmem>> -> memref<1x1x128xf32, #tpu.memory_space<vmem>>
    %48 = tpu.memref_squeeze %47 : memref<1x1x128xf32, #tpu.memory_space<vmem>> -> memref<1x128xf32, #tpu.memory_space<vmem>>
    %49 = tpu.memref_slice %arg9[%c0_i32_22] : memref<8x!tpu.dma_semaphore, #tpu.memory_space<semaphore_mem>> -> memref<1x!tpu.dma_semaphore, #tpu.memory_space<semaphore_mem>>
    %50 = tpu.memref_squeeze %49 : memref<1x!tpu.dma_semaphore, #tpu.memory_space<semaphore_mem>> -> memref<!tpu.dma_semaphore, #tpu.memory_space<semaphore_mem>>
    tpu.enqueue_dma source(%46 : memref<1x128xf32, #tpu.memory_space<any>>) target(%48 : memref<1x128xf32, #tpu.memory_space<vmem>>) target_semaphore(%50 : memref<!tpu.dma_semaphore, #tpu.memory_space<semaphore_mem>>)
    %c0_i32_26 = arith.constant 0 : i32
    %c0_i32_27 = arith.constant 0 : i32
    %c0_i32_28 = arith.constant 0 : i32
    %51 = tpu.memref_slice %arg2[%15, %c0_i32_28] : memref<100x128xf32, #tpu.memory_space<any>> -> memref<1x128xf32, #tpu.memory_space<any>>
    %c2_i32_29 = arith.constant 2 : i32
    %c0_i32_30 = arith.constant 0 : i32
    %52 = tpu.memref_slice %arg8[%c0_i32_26, %c2_i32_29, %c0_i32_30] : memref<8x8x128xf32, #tpu.memory_space<vmem>> -> memref<1x1x128xf32, #tpu.memory_space<vmem>>
    %53 = tpu.memref_squeeze %52 : memref<1x1x128xf32, #tpu.memory_space<vmem>> -> memref<1x128xf32, #tpu.memory_space<vmem>>
    %54 = tpu.memref_slice %arg9[%c0_i32_27] : memref<8x!tpu.dma_semaphore, #tpu.memory_space<semaphore_mem>> -> memref<1x!tpu.dma_semaphore, #tpu.memory_space<semaphore_mem>>
    %55 = tpu.memref_squeeze %54 : memref<1x!tpu.dma_semaphore, #tpu.memory_space<semaphore_mem>> -> memref<!tpu.dma_semaphore, #tpu.memory_space<semaphore_mem>>
    tpu.enqueue_dma source(%51 : memref<1x128xf32, #tpu.memory_space<any>>) target(%53 : memref<1x128xf32, #tpu.memory_space<vmem>>) target_semaphore(%55 : memref<!tpu.dma_semaphore, #tpu.memory_space<semaphore_mem>>)
    %c0_i32_31 = arith.constant 0 : i32
    %c0_i32_32 = arith.constant 0 : i32
    %c0_i32_33 = arith.constant 0 : i32
    %56 = tpu.memref_slice %arg2[%20, %c0_i32_33] : memref<100x128xf32, #tpu.memory_space<any>> -> memref<1x128xf32, #tpu.memory_space<any>>
    %c3_i32_34 = arith.constant 3 : i32
    %c0_i32_35 = arith.constant 0 : i32
    %57 = tpu.memref_slice %arg8[%c0_i32_31, %c3_i32_34, %c0_i32_35] : memref<8x8x128xf32, #tpu.memory_space<vmem>> -> memref<1x1x128xf32, #tpu.memory_space<vmem>>
    %58 = tpu.memref_squeeze %57 : memref<1x1x128xf32, #tpu.memory_space<vmem>> -> memref<1x128xf32, #tpu.memory_space<vmem>>
    %59 = tpu.memref_slice %arg9[%c0_i32_32] : memref<8x!tpu.dma_semaphore, #tpu.memory_space<semaphore_mem>> -> memref<1x!tpu.dma_semaphore, #tpu.memory_space<semaphore_mem>>
    %60 = tpu.memref_squeeze %59 : memref<1x!tpu.dma_semaphore, #tpu.memory_space<semaphore_mem>> -> memref<!tpu.dma_semaphore, #tpu.memory_space<semaphore_mem>>
    tpu.enqueue_dma source(%56 : memref<1x128xf32, #tpu.memory_space<any>>) target(%58 : memref<1x128xf32, #tpu.memory_space<vmem>>) target_semaphore(%60 : memref<!tpu.dma_semaphore, #tpu.memory_space<semaphore_mem>>)
    %c0_i32_36 = arith.constant 0 : i32
    %c0_i32_37 = arith.constant 0 : i32
    %c0_i32_38 = arith.constant 0 : i32
    %61 = tpu.memref_slice %arg2[%25, %c0_i32_38] : memref<100x128xf32, #tpu.memory_space<any>> -> memref<1x128xf32, #tpu.memory_space<any>>
    %c4_i32_39 = arith.constant 4 : i32
    %c0_i32_40 = arith.constant 0 : i32
    %62 = tpu.memref_slice %arg8[%c0_i32_36, %c4_i32_39, %c0_i32_40] : memref<8x8x128xf32, #tpu.memory_space<vmem>> -> memref<1x1x128xf32, #tpu.memory_space<vmem>>
    %63 = tpu.memref_squeeze %62 : memref<1x1x128xf32, #tpu.memory_space<vmem>> -> memref<1x128xf32, #tpu.memory_space<vmem>>
    %64 = tpu.memref_slice %arg9[%c0_i32_37] : memref<8x!tpu.dma_semaphore, #tpu.memory_space<semaphore_mem>> -> memref<1x!tpu.dma_semaphore, #tpu.memory_space<semaphore_mem>>
    %65 = tpu.memref_squeeze %64 : memref<1x!tpu.dma_semaphore, #tpu.memory_space<semaphore_mem>> -> memref<!tpu.dma_semaphore, #tpu.memory_space<semaphore_mem>>
    tpu.enqueue_dma source(%61 : memref<1x128xf32, #tpu.memory_space<any>>) target(%63 : memref<1x128xf32, #tpu.memory_space<vmem>>) target_semaphore(%65 : memref<!tpu.dma_semaphore, #tpu.memory_space<semaphore_mem>>)
    %c0_i32_41 = arith.constant 0 : i32
    %c0_i32_42 = arith.constant 0 : i32
    %c0_i32_43 = arith.constant 0 : i32
    %66 = tpu.memref_slice %arg2[%30, %c0_i32_43] : memref<100x128xf32, #tpu.memory_space<any>> -> memref<1x128xf32, #tpu.memory_space<any>>
    %c5_i32_44 = arith.constant 5 : i32
    %c0_i32_45 = arith.constant 0 : i32
    %67 = tpu.memref_slice %arg8[%c0_i32_41, %c5_i32_44, %c0_i32_45] : memref<8x8x128xf32, #tpu.memory_space<vmem>> -> memref<1x1x128xf32, #tpu.memory_space<vmem>>
    %68 = tpu.memref_squeeze %67 : memref<1x1x128xf32, #tpu.memory_space<vmem>> -> memref<1x128xf32, #tpu.memory_space<vmem>>
    %69 = tpu.memref_slice %arg9[%c0_i32_42] : memref<8x!tpu.dma_semaphore, #tpu.memory_space<semaphore_mem>> -> memref<1x!tpu.dma_semaphore, #tpu.memory_space<semaphore_mem>>
    %70 = tpu.memref_squeeze %69 : memref<1x!tpu.dma_semaphore, #tpu.memory_space<semaphore_mem>> -> memref<!tpu.dma_semaphore, #tpu.memory_space<semaphore_mem>>
    tpu.enqueue_dma source(%66 : memref<1x128xf32, #tpu.memory_space<any>>) target(%68 : memref<1x128xf32, #tpu.memory_space<vmem>>) target_semaphore(%70 : memref<!tpu.dma_semaphore, #tpu.memory_space<semaphore_mem>>)
    %c0_i32_46 = arith.constant 0 : i32
    %c0_i32_47 = arith.constant 0 : i32
    %c0_i32_48 = arith.constant 0 : i32
    %71 = tpu.memref_slice %arg2[%35, %c0_i32_48] : memref<100x128xf32, #tpu.memory_space<any>> -> memref<1x128xf32, #tpu.memory_space<any>>
    %c6_i32_49 = arith.constant 6 : i32
    %c0_i32_50 = arith.constant 0 : i32
    %72 = tpu.memref_slice %arg8[%c0_i32_46, %c6_i32_49, %c0_i32_50] : memref<8x8x128xf32, #tpu.memory_space<vmem>> -> memref<1x1x128xf32, #tpu.memory_space<vmem>>
    %73 = tpu.memref_squeeze %72 : memref<1x1x128xf32, #tpu.memory_space<vmem>> -> memref<1x128xf32, #tpu.memory_space<vmem>>
    %74 = tpu.memref_slice %arg9[%c0_i32_47] : memref<8x!tpu.dma_semaphore, #tpu.memory_space<semaphore_mem>> -> memref<1x!tpu.dma_semaphore, #tpu.memory_space<semaphore_mem>>
    %75 = tpu.memref_squeeze %74 : memref<1x!tpu.dma_semaphore, #tpu.memory_space<semaphore_mem>> -> memref<!tpu.dma_semaphore, #tpu.memory_space<semaphore_mem>>
    tpu.enqueue_dma source(%71 : memref<1x128xf32, #tpu.memory_space<any>>) target(%73 : memref<1x128xf32, #tpu.memory_space<vmem>>) target_semaphore(%75 : memref<!tpu.dma_semaphore, #tpu.memory_space<semaphore_mem>>)
    %c0_i32_51 = arith.constant 0 : i32
    %c0_i32_52 = arith.constant 0 : i32
    %c0_i32_53 = arith.constant 0 : i32
    %76 = tpu.memref_slice %arg2[%40, %c0_i32_53] : memref<100x128xf32, #tpu.memory_space<any>> -> memref<1x128xf32, #tpu.memory_space<any>>
    %c7_i32_54 = arith.constant 7 : i32
    %c0_i32_55 = arith.constant 0 : i32
    %77 = tpu.memref_slice %arg8[%c0_i32_51, %c7_i32_54, %c0_i32_55] : memref<8x8x128xf32, #tpu.memory_space<vmem>> -> memref<1x1x128xf32, #tpu.memory_space<vmem>>
    %78 = tpu.memref_squeeze %77 : memref<1x1x128xf32, #tpu.memory_space<vmem>> -> memref<1x128xf32, #tpu.memory_space<vmem>>
    %79 = tpu.memref_slice %arg9[%c0_i32_52] : memref<8x!tpu.dma_semaphore, #tpu.memory_space<semaphore_mem>> -> memref<1x!tpu.dma_semaphore, #tpu.memory_space<semaphore_mem>>
    %80 = tpu.memref_squeeze %79 : memref<1x!tpu.dma_semaphore, #tpu.memory_space<semaphore_mem>> -> memref<!tpu.dma_semaphore, #tpu.memory_space<semaphore_mem>>
    tpu.enqueue_dma source(%76 : memref<1x128xf32, #tpu.memory_space<any>>) target(%78 : memref<1x128xf32, #tpu.memory_space<vmem>>) target_semaphore(%80 : memref<!tpu.dma_semaphore, #tpu.memory_space<semaphore_mem>>)
    %c0_i32_56 = arith.constant 0 : i32
    %81 = arith.addi %0, %c0_i32_56 : i32
    %c8_i32_57 = arith.constant 8 : i32
    %82 = arith.muli %81, %c8_i32_57 : i32
    %c1_i32_58 = arith.constant 1 : i32
    %83 = arith.addi %82, %c1_i32_58 : i32
    %84 = arith.index_cast %83 : i32 to index
    %85 = memref.load %arg1[%84] : memref<64xi32, #tpu.memory_space<smem>>
    %c1_i32_59 = arith.constant 1 : i32
    %86 = arith.addi %0, %c1_i32_59 : i32
    %c8_i32_60 = arith.constant 8 : i32
    %87 = arith.muli %86, %c8_i32_60 : i32
    %c1_i32_61 = arith.constant 1 : i32
    %88 = arith.addi %87, %c1_i32_61 : i32
    %89 = arith.index_cast %88 : i32 to index
    %90 = memref.load %arg1[%89] : memref<64xi32, #tpu.memory_space<smem>>
    %c2_i32_62 = arith.constant 2 : i32
    %91 = arith.addi %0, %c2_i32_62 : i32
    %c8_i32_63 = arith.constant 8 : i32
    %92 = arith.muli %91, %c8_i32_63 : i32
    %c1_i32_64 = arith.constant 1 : i32
    %93 = arith.addi %92, %c1_i32_64 : i32
    %94 = arith.index_cast %93 : i32 to index
    %95 = memref.load %arg1[%94] : memref<64xi32, #tpu.memory_space<smem>>
    %c3_i32_65 = arith.constant 3 : i32
    %96 = arith.addi %0, %c3_i32_65 : i32
    %c8_i32_66 = arith.constant 8 : i32
    %97 = arith.muli %96, %c8_i32_66 : i32
    %c1_i32_67 = arith.constant 1 : i32
    %98 = arith.addi %97, %c1_i32_67 : i32
    %99 = arith.index_cast %98 : i32 to index
    %100 = memref.load %arg1[%99] : memref<64xi32, #tpu.memory_space<smem>>
    %c4_i32_68 = arith.constant 4 : i32
    %101 = arith.addi %0, %c4_i32_68 : i32
    %c8_i32_69 = arith.constant 8 : i32
    %102 = arith.muli %101, %c8_i32_69 : i32
    %c1_i32_70 = arith.constant 1 : i32
    %103 = arith.addi %102, %c1_i32_70 : i32
    %104 = arith.index_cast %103 : i32 to index
    %105 = memref.load %arg1[%104] : memref<64xi32, #tpu.memory_space<smem>>
    %c5_i32_71 = arith.constant 5 : i32
    %106 = arith.addi %0, %c5_i32_71 : i32
    %c8_i32_72 = arith.constant 8 : i32
    %107 = arith.muli %106, %c8_i32_72 : i32
    %c1_i32_73 = arith.constant 1 : i32
    %108 = arith.addi %107, %c1_i32_73 : i32
    %109 = arith.index_cast %108 : i32 to index
    %110 = memref.load %arg1[%109] : memref<64xi32, #tpu.memory_space<smem>>
    %c6_i32_74 = arith.constant 6 : i32
    %111 = arith.addi %0, %c6_i32_74 : i32
    %c8_i32_75 = arith.constant 8 : i32
    %112 = arith.muli %111, %c8_i32_75 : i32
    %c1_i32_76 = arith.constant 1 : i32
    %113 = arith.addi %112, %c1_i32_76 : i32
    %114 = arith.index_cast %113 : i32 to index
    %115 = memref.load %arg1[%114] : memref<64xi32, #tpu.memory_space<smem>>
    %c7_i32_77 = arith.constant 7 : i32
    %116 = arith.addi %0, %c7_i32_77 : i32
    %c8_i32_78 = arith.constant 8 : i32
    %117 = arith.muli %116, %c8_i32_78 : i32
    %c1_i32_79 = arith.constant 1 : i32
    %118 = arith.addi %117, %c1_i32_79 : i32
    %119 = arith.index_cast %118 : i32 to index
    %120 = memref.load %arg1[%119] : memref<64xi32, #tpu.memory_space<smem>>
    %c1_i32_80 = arith.constant 1 : i32
    %c1_i32_81 = arith.constant 1 : i32
    %c0_i32_82 = arith.constant 0 : i32
    %121 = tpu.memref_slice %arg2[%85, %c0_i32_82] : memref<100x128xf32, #tpu.memory_space<any>> -> memref<1x128xf32, #tpu.memory_space<any>>
    %c0_i32_83 = arith.constant 0 : i32
    %c0_i32_84 = arith.constant 0 : i32
    %122 = tpu.memref_slice %arg8[%c1_i32_80, %c0_i32_83, %c0_i32_84] : memref<8x8x128xf32, #tpu.memory_space<vmem>> -> memref<1x1x128xf32, #tpu.memory_space<vmem>>
    %123 = tpu.memref_squeeze %122 : memref<1x1x128xf32, #tpu.memory_space<vmem>> -> memref<1x128xf32, #tpu.memory_space<vmem>>
    %124 = tpu.memref_slice %arg9[%c1_i32_81] : memref<8x!tpu.dma_semaphore, #tpu.memory_space<semaphore_mem>> -> memref<1x!tpu.dma_semaphore, #tpu.memory_space<semaphore_mem>>
    %125 = tpu.memref_squeeze %124 : memref<1x!tpu.dma_semaphore, #tpu.memory_space<semaphore_mem>> -> memref<!tpu.dma_semaphore, #tpu.memory_space<semaphore_mem>>
    tpu.enqueue_dma source(%121 : memref<1x128xf32, #tpu.memory_space<any>>) target(%123 : memref<1x128xf32, #tpu.memory_space<vmem>>) target_semaphore(%125 : memref<!tpu.dma_semaphore, #tpu.memory_space<semaphore_mem>>)
    %c1_i32_85 = arith.constant 1 : i32
    %c1_i32_86 = arith.constant 1 : i32
    %c0_i32_87 = arith.constant 0 : i32
    %126 = tpu.memref_slice %arg2[%90, %c0_i32_87] : memref<100x128xf32, #tpu.memory_space<any>> -> memref<1x128xf32, #tpu.memory_space<any>>
    %c1_i32_88 = arith.constant 1 : i32
    %c0_i32_89 = arith.constant 0 : i32
    %127 = tpu.memref_slice %arg8[%c1_i32_85, %c1_i32_88, %c0_i32_89] : memref<8x8x128xf32, #tpu.memory_space<vmem>> -> memref<1x1x128xf32, #tpu.memory_space<vmem>>
    %128 = tpu.memref_squeeze %127 : memref<1x1x128xf32, #tpu.memory_space<vmem>> -> memref<1x128xf32, #tpu.memory_space<vmem>>
    %129 = tpu.memref_slice %arg9[%c1_i32_86] : memref<8x!tpu.dma_semaphore, #tpu.memory_space<semaphore_mem>> -> memref<1x!tpu.dma_semaphore, #tpu.memory_space<semaphore_mem>>
    %130 = tpu.memref_squeeze %129 : memref<1x!tpu.dma_semaphore, #tpu.memory_space<semaphore_mem>> -> memref<!tpu.dma_semaphore, #tpu.memory_space<semaphore_mem>>
    tpu.enqueue_dma source(%126 : memref<1x128xf32, #tpu.memory_space<any>>) target(%128 : memref<1x128xf32, #tpu.memory_space<vmem>>) target_semaphore(%130 : memref<!tpu.dma_semaphore, #tpu.memory_space<semaphore_mem>>)
    %c1_i32_90 = arith.constant 1 : i32
    %c1_i32_91 = arith.constant 1 : i32
    %c0_i32_92 = arith.constant 0 : i32
    %131 = tpu.memref_slice %arg2[%95, %c0_i32_92] : memref<100x128xf32, #tpu.memory_space<any>> -> memref<1x128xf32, #tpu.memory_space<any>>
    %c2_i32_93 = arith.constant 2 : i32
    %c0_i32_94 = arith.constant 0 : i32
    %132 = tpu.memref_slice %arg8[%c1_i32_90, %c2_i32_93, %c0_i32_94] : memref<8x8x128xf32, #tpu.memory_space<vmem>> -> memref<1x1x128xf32, #tpu.memory_space<vmem>>
    %133 = tpu.memref_squeeze %132 : memref<1x1x128xf32, #tpu.memory_space<vmem>> -> memref<1x128xf32, #tpu.memory_space<vmem>>
    %134 = tpu.memref_slice %arg9[%c1_i32_91] : memref<8x!tpu.dma_semaphore, #tpu.memory_space<semaphore_mem>> -> memref<1x!tpu.dma_semaphore, #tpu.memory_space<semaphore_mem>>
    %135 = tpu.memref_squeeze %134 : memref<1x!tpu.dma_semaphore, #tpu.memory_space<semaphore_mem>> -> memref<!tpu.dma_semaphore, #tpu.memory_space<semaphore_mem>>
    tpu.enqueue_dma source(%131 : memref<1x128xf32, #tpu.memory_space<any>>) target(%133 : memref<1x128xf32, #tpu.memory_space<vmem>>) target_semaphore(%135 : memref<!tpu.dma_semaphore, #tpu.memory_space<semaphore_mem>>)
    %c1_i32_95 = arith.constant 1 : i32
    %c1_i32_96 = arith.constant 1 : i32
    %c0_i32_97 = arith.constant 0 : i32
    %136 = tpu.memref_slice %arg2[%100, %c0_i32_97] : memref<100x128xf32, #tpu.memory_space<any>> -> memref<1x128xf32, #tpu.memory_space<any>>
    %c3_i32_98 = arith.constant 3 : i32
    %c0_i32_99 = arith.constant 0 : i32
    %137 = tpu.memref_slice %arg8[%c1_i32_95, %c3_i32_98, %c0_i32_99] : memref<8x8x128xf32, #tpu.memory_space<vmem>> -> memref<1x1x128xf32, #tpu.memory_space<vmem>>
    %138 = tpu.memref_squeeze %137 : memref<1x1x128xf32, #tpu.memory_space<vmem>> -> memref<1x128xf32, #tpu.memory_space<vmem>>
    %139 = tpu.memref_slice %arg9[%c1_i32_96] : memref<8x!tpu.dma_semaphore, #tpu.memory_space<semaphore_mem>> -> memref<1x!tpu.dma_semaphore, #tpu.memory_space<semaphore_mem>>
    %140 = tpu.memref_squeeze %139 : memref<1x!tpu.dma_semaphore, #tpu.memory_space<semaphore_mem>> -> memref<!tpu.dma_semaphore, #tpu.memory_space<semaphore_mem>>
    tpu.enqueue_dma source(%136 : memref<1x128xf32, #tpu.memory_space<any>>) target(%138 : memref<1x128xf32, #tpu.memory_space<vmem>>) target_semaphore(%140 : memref<!tpu.dma_semaphore, #tpu.memory_space<semaphore_mem>>)
    %c1_i32_100 = arith.constant 1 : i32
    %c1_i32_101 = arith.constant 1 : i32
    %c0_i32_102 = arith.constant 0 : i32
    %141 = tpu.memref_slice %arg2[%105, %c0_i32_102] : memref<100x128xf32, #tpu.memory_space<any>> -> memref<1x128xf32, #tpu.memory_space<any>>
    %c4_i32_103 = arith.constant 4 : i32
    %c0_i32_104 = arith.constant 0 : i32
    %142 = tpu.memref_slice %arg8[%c1_i32_100, %c4_i32_103, %c0_i32_104] : memref<8x8x128xf32, #tpu.memory_space<vmem>> -> memref<1x1x128xf32, #tpu.memory_space<vmem>>
    %143 = tpu.memref_squeeze %142 : memref<1x1x128xf32, #tpu.memory_space<vmem>> -> memref<1x128xf32, #tpu.memory_space<vmem>>
    %144 = tpu.memref_slice %arg9[%c1_i32_101] : memref<8x!tpu.dma_semaphore, #tpu.memory_space<semaphore_mem>> -> memref<1x!tpu.dma_semaphore, #tpu.memory_space<semaphore_mem>>
    %145 = tpu.memref_squeeze %144 : memref<1x!tpu.dma_semaphore, #tpu.memory_space<semaphore_mem>> -> memref<!tpu.dma_semaphore, #tpu.memory_space<semaphore_mem>>
    tpu.enqueue_dma source(%141 : memref<1x128xf32, #tpu.memory_space<any>>) target(%143 : memref<1x128xf32, #tpu.memory_space<vmem>>) target_semaphore(%145 : memref<!tpu.dma_semaphore, #tpu.memory_space<semaphore_mem>>)
    %c1_i32_105 = arith.constant 1 : i32
    %c1_i32_106 = arith.constant 1 : i32
    %c0_i32_107 = arith.constant 0 : i32
    %146 = tpu.memref_slice %arg2[%110, %c0_i32_107] : memref<100x128xf32, #tpu.memory_space<any>> -> memref<1x128xf32, #tpu.memory_space<any>>
    %c5_i32_108 = arith.constant 5 : i32
    %c0_i32_109 = arith.constant 0 : i32
    %147 = tpu.memref_slice %arg8[%c1_i32_105, %c5_i32_108, %c0_i32_109] : memref<8x8x128xf32, #tpu.memory_space<vmem>> -> memref<1x1x128xf32, #tpu.memory_space<vmem>>
    %148 = tpu.memref_squeeze %147 : memref<1x1x128xf32, #tpu.memory_space<vmem>> -> memref<1x128xf32, #tpu.memory_space<vmem>>
    %149 = tpu.memref_slice %arg9[%c1_i32_106] : memref<8x!tpu.dma_semaphore, #tpu.memory_space<semaphore_mem>> -> memref<1x!tpu.dma_semaphore, #tpu.memory_space<semaphore_mem>>
    %150 = tpu.memref_squeeze %149 : memref<1x!tpu.dma_semaphore, #tpu.memory_space<semaphore_mem>> -> memref<!tpu.dma_semaphore, #tpu.memory_space<semaphore_mem>>
    tpu.enqueue_dma source(%146 : memref<1x128xf32, #tpu.memory_space<any>>) target(%148 : memref<1x128xf32, #tpu.memory_space<vmem>>) target_semaphore(%150 : memref<!tpu.dma_semaphore, #tpu.memory_space<semaphore_mem>>)
    %c1_i32_110 = arith.constant 1 : i32
    %c1_i32_111 = arith.constant 1 : i32
    %c0_i32_112 = arith.constant 0 : i32
    %151 = tpu.memref_slice %arg2[%115, %c0_i32_112] : memref<100x128xf32, #tpu.memory_space<any>> -> memref<1x128xf32, #tpu.memory_space<any>>
    %c6_i32_113 = arith.constant 6 : i32
    %c0_i32_114 = arith.constant 0 : i32
    %152 = tpu.memref_slice %arg8[%c1_i32_110, %c6_i32_113, %c0_i32_114] : memref<8x8x128xf32, #tpu.memory_space<vmem>> -> memref<1x1x128xf32, #tpu.memory_space<vmem>>
    %153 = tpu.memref_squeeze %152 : memref<1x1x128xf32, #tpu.memory_space<vmem>> -> memref<1x128xf32, #tpu.memory_space<vmem>>
    %154 = tpu.memref_slice %arg9[%c1_i32_111] : memref<8x!tpu.dma_semaphore, #tpu.memory_space<semaphore_mem>> -> memref<1x!tpu.dma_semaphore, #tpu.memory_space<semaphore_mem>>
    %155 = tpu.memref_squeeze %154 : memref<1x!tpu.dma_semaphore, #tpu.memory_space<semaphore_mem>> -> memref<!tpu.dma_semaphore, #tpu.memory_space<semaphore_mem>>
    tpu.enqueue_dma source(%151 : memref<1x128xf32, #tpu.memory_space<any>>) target(%153 : memref<1x128xf32, #tpu.memory_space<vmem>>) target_semaphore(%155 : memref<!tpu.dma_semaphore, #tpu.memory_space<semaphore_mem>>)
    %c1_i32_115 = arith.constant 1 : i32
    %c1_i32_116 = arith.constant 1 : i32
    %c0_i32_117 = arith.constant 0 : i32
    %156 = tpu.memref_slice %arg2[%120, %c0_i32_117] : memref<100x128xf32, #tpu.memory_space<any>> -> memref<1x128xf32, #tpu.memory_space<any>>
    %c7_i32_118 = arith.constant 7 : i32
    %c0_i32_119 = arith.constant 0 : i32
    %157 = tpu.memref_slice %arg8[%c1_i32_115, %c7_i32_118, %c0_i32_119] : memref<8x8x128xf32, #tpu.memory_space<vmem>> -> memref<1x1x128xf32, #tpu.memory_space<vmem>>
    %158 = tpu.memref_squeeze %157 : memref<1x1x128xf32, #tpu.memory_space<vmem>> -> memref<1x128xf32, #tpu.memory_space<vmem>>
    %159 = tpu.memref_slice %arg9[%c1_i32_116] : memref<8x!tpu.dma_semaphore, #tpu.memory_space<semaphore_mem>> -> memref<1x!tpu.dma_semaphore, #tpu.memory_space<semaphore_mem>>
    %160 = tpu.memref_squeeze %159 : memref<1x!tpu.dma_semaphore, #tpu.memory_space<semaphore_mem>> -> memref<!tpu.dma_semaphore, #tpu.memory_space<semaphore_mem>>
    tpu.enqueue_dma source(%156 : memref<1x128xf32, #tpu.memory_space<any>>) target(%158 : memref<1x128xf32, #tpu.memory_space<vmem>>) target_semaphore(%160 : memref<!tpu.dma_semaphore, #tpu.memory_space<semaphore_mem>>)
    %c0_i32_120 = arith.constant 0 : i32
    %161 = arith.addi %0, %c0_i32_120 : i32
    %c8_i32_121 = arith.constant 8 : i32
    %162 = arith.muli %161, %c8_i32_121 : i32
    %c2_i32_122 = arith.constant 2 : i32
    %163 = arith.addi %162, %c2_i32_122 : i32
    %164 = arith.index_cast %163 : i32 to index
    %165 = memref.load %arg1[%164] : memref<64xi32, #tpu.memory_space<smem>>
    %c1_i32_123 = arith.constant 1 : i32
    %166 = arith.addi %0, %c1_i32_123 : i32
    %c8_i32_124 = arith.constant 8 : i32
    %167 = arith.muli %166, %c8_i32_124 : i32
    %c2_i32_125 = arith.constant 2 : i32
    %168 = arith.addi %167, %c2_i32_125 : i32
    %169 = arith.index_cast %168 : i32 to index
    %170 = memref.load %arg1[%169] : memref<64xi32, #tpu.memory_space<smem>>
    %c2_i32_126 = arith.constant 2 : i32
    %171 = arith.addi %0, %c2_i32_126 : i32
    %c8_i32_127 = arith.constant 8 : i32
    %172 = arith.muli %171, %c8_i32_127 : i32
    %c2_i32_128 = arith.constant 2 : i32
    %173 = arith.addi %172, %c2_i32_128 : i32
    %174 = arith.index_cast %173 : i32 to index
    %175 = memref.load %arg1[%174] : memref<64xi32, #tpu.memory_space<smem>>
    %c3_i32_129 = arith.constant 3 : i32
    %176 = arith.addi %0, %c3_i32_129 : i32
    %c8_i32_130 = arith.constant 8 : i32
    %177 = arith.muli %176, %c8_i32_130 : i32
    %c2_i32_131 = arith.constant 2 : i32
    %178 = arith.addi %177, %c2_i32_131 : i32
    %179 = arith.index_cast %178 : i32 to index
    %180 = memref.load %arg1[%179] : memref<64xi32, #tpu.memory_space<smem>>
    %c4_i32_132 = arith.constant 4 : i32
    %181 = arith.addi %0, %c4_i32_132 : i32
    %c8_i32_133 = arith.constant 8 : i32
    %182 = arith.muli %181, %c8_i32_133 : i32
    %c2_i32_134 = arith.constant 2 : i32
    %183 = arith.addi %182, %c2_i32_134 : i32
    %184 = arith.index_cast %183 : i32 to index
    %185 = memref.load %arg1[%184] : memref<64xi32, #tpu.memory_space<smem>>
    %c5_i32_135 = arith.constant 5 : i32
    %186 = arith.addi %0, %c5_i32_135 : i32
    %c8_i32_136 = arith.constant 8 : i32
    %187 = arith.muli %186, %c8_i32_136 : i32
    %c2_i32_137 = arith.constant 2 : i32
    %188 = arith.addi %187, %c2_i32_137 : i32
    %189 = arith.index_cast %188 : i32 to index
    %190 = memref.load %arg1[%189] : memref<64xi32, #tpu.memory_space<smem>>
    %c6_i32_138 = arith.constant 6 : i32
    %191 = arith.addi %0, %c6_i32_138 : i32
    %c8_i32_139 = arith.constant 8 : i32
    %192 = arith.muli %191, %c8_i32_139 : i32
    %c2_i32_140 = arith.constant 2 : i32
    %193 = arith.addi %192, %c2_i32_140 : i32
    %194 = arith.index_cast %193 : i32 to index
    %195 = memref.load %arg1[%194] : memref<64xi32, #tpu.memory_space<smem>>
    %c7_i32_141 = arith.constant 7 : i32
    %196 = arith.addi %0, %c7_i32_141 : i32
    %c8_i32_142 = arith.constant 8 : i32
    %197 = arith.muli %196, %c8_i32_142 : i32
    %c2_i32_143 = arith.constant 2 : i32
    %198 = arith.addi %197, %c2_i32_143 : i32
    %199 = arith.index_cast %198 : i32 to index
    %200 = memref.load %arg1[%199] : memref<64xi32, #tpu.memory_space<smem>>
    %c2_i32_144 = arith.constant 2 : i32
    %c2_i32_145 = arith.constant 2 : i32
    %c0_i32_146 = arith.constant 0 : i32
    %201 = tpu.memref_slice %arg2[%165, %c0_i32_146] : memref<100x128xf32, #tpu.memory_space<any>> -> memref<1x128xf32, #tpu.memory_space<any>>
    %c0_i32_147 = arith.constant 0 : i32
    %c0_i32_148 = arith.constant 0 : i32
    %202 = tpu.memref_slice %arg8[%c2_i32_144, %c0_i32_147, %c0_i32_148] : memref<8x8x128xf32, #tpu.memory_space<vmem>> -> memref<1x1x128xf32, #tpu.memory_space<vmem>>
    %203 = tpu.memref_squeeze %202 : memref<1x1x128xf32, #tpu.memory_space<vmem>> -> memref<1x128xf32, #tpu.memory_space<vmem>>
    %204 = tpu.memref_slice %arg9[%c2_i32_145] : memref<8x!tpu.dma_semaphore, #tpu.memory_space<semaphore_mem>> -> memref<1x!tpu.dma_semaphore, #tpu.memory_space<semaphore_mem>>
    %205 = tpu.memref_squeeze %204 : memref<1x!tpu.dma_semaphore, #tpu.memory_space<semaphore_mem>> -> memref<!tpu.dma_semaphore, #tpu.memory_space<semaphore_mem>>
    tpu.enqueue_dma source(%201 : memref<1x128xf32, #tpu.memory_space<any>>) target(%203 : memref<1x128xf32, #tpu.memory_space<vmem>>) target_semaphore(%205 : memref<!tpu.dma_semaphore, #tpu.memory_space<semaphore_mem>>)
    %c2_i32_149 = arith.constant 2 : i32
    %c2_i32_150 = arith.constant 2 : i32
    %c0_i32_151 = arith.constant 0 : i32
    %206 = tpu.memref_slice %arg2[%170, %c0_i32_151] : memref<100x128xf32, #tpu.memory_space<any>> -> memref<1x128xf32, #tpu.memory_space<any>>
    %c1_i32_152 = arith.constant 1 : i32
    %c0_i32_153 = arith.constant 0 : i32
    %207 = tpu.memref_slice %arg8[%c2_i32_149, %c1_i32_152, %c0_i32_153] : memref<8x8x128xf32, #tpu.memory_space<vmem>> -> memref<1x1x128xf32, #tpu.memory_space<vmem>>
    %208 = tpu.memref_squeeze %207 : memref<1x1x128xf32, #tpu.memory_space<vmem>> -> memref<1x128xf32, #tpu.memory_space<vmem>>
    %209 = tpu.memref_slice %arg9[%c2_i32_150] : memref<8x!tpu.dma_semaphore, #tpu.memory_space<semaphore_mem>> -> memref<1x!tpu.dma_semaphore, #tpu.memory_space<semaphore_mem>>
    %210 = tpu.memref_squeeze %209 : memref<1x!tpu.dma_semaphore, #tpu.memory_space<semaphore_mem>> -> memref<!tpu.dma_semaphore, #tpu.memory_space<semaphore_mem>>
    tpu.enqueue_dma source(%206 : memref<1x128xf32, #tpu.memory_space<any>>) target(%208 : memref<1x128xf32, #tpu.memory_space<vmem>>) target_semaphore(%210 : memref<!tpu.dma_semaphore, #tpu.memory_space<semaphore_mem>>)
    %c2_i32_154 = arith.constant 2 : i32
    %c2_i32_155 = arith.constant 2 : i32
    %c0_i32_156 = arith.constant 0 : i32
    %211 = tpu.memref_slice %arg2[%175, %c0_i32_156] : memref<100x128xf32, #tpu.memory_space<any>> -> memref<1x128xf32, #tpu.memory_space<any>>
    %c2_i32_157 = arith.constant 2 : i32
    %c0_i32_158 = arith.constant 0 : i32
    %212 = tpu.memref_slice %arg8[%c2_i32_154, %c2_i32_157, %c0_i32_158] : memref<8x8x128xf32, #tpu.memory_space<vmem>> -> memref<1x1x128xf32, #tpu.memory_space<vmem>>
    %213 = tpu.memref_squeeze %212 : memref<1x1x128xf32, #tpu.memory_space<vmem>> -> memref<1x128xf32, #tpu.memory_space<vmem>>
    %214 = tpu.memref_slice %arg9[%c2_i32_155] : memref<8x!tpu.dma_semaphore, #tpu.memory_space<semaphore_mem>> -> memref<1x!tpu.dma_semaphore, #tpu.memory_space<semaphore_mem>>
    %215 = tpu.memref_squeeze %214 : memref<1x!tpu.dma_semaphore, #tpu.memory_space<semaphore_mem>> -> memref<!tpu.dma_semaphore, #tpu.memory_space<semaphore_mem>>
    tpu.enqueue_dma source(%211 : memref<1x128xf32, #tpu.memory_space<any>>) target(%213 : memref<1x128xf32, #tpu.memory_space<vmem>>) target_semaphore(%215 : memref<!tpu.dma_semaphore, #tpu.memory_space<semaphore_mem>>)
    %c2_i32_159 = arith.constant 2 : i32
    %c2_i32_160 = arith.constant 2 : i32
    %c0_i32_161 = arith.constant 0 : i32
    %216 = tpu.memref_slice %arg2[%180, %c0_i32_161] : memref<100x128xf32, #tpu.memory_space<any>> -> memref<1x128xf32, #tpu.memory_space<any>>
    %c3_i32_162 = arith.constant 3 : i32
    %c0_i32_163 = arith.constant 0 : i32
    %217 = tpu.memref_slice %arg8[%c2_i32_159, %c3_i32_162, %c0_i32_163] : memref<8x8x128xf32, #tpu.memory_space<vmem>> -> memref<1x1x128xf32, #tpu.memory_space<vmem>>
    %218 = tpu.memref_squeeze %217 : memref<1x1x128xf32, #tpu.memory_space<vmem>> -> memref<1x128xf32, #tpu.memory_space<vmem>>
    %219 = tpu.memref_slice %arg9[%c2_i32_160] : memref<8x!tpu.dma_semaphore, #tpu.memory_space<semaphore_mem>> -> memref<1x!tpu.dma_semaphore, #tpu.memory_space<semaphore_mem>>
    %220 = tpu.memref_squeeze %219 : memref<1x!tpu.dma_semaphore, #tpu.memory_space<semaphore_mem>> -> memref<!tpu.dma_semaphore, #tpu.memory_space<semaphore_mem>>
    tpu.enqueue_dma source(%216 : memref<1x128xf32, #tpu.memory_space<any>>) target(%218 : memref<1x128xf32, #tpu.memory_space<vmem>>) target_semaphore(%220 : memref<!tpu.dma_semaphore, #tpu.memory_space<semaphore_mem>>)
    %c2_i32_164 = arith.constant 2 : i32
    %c2_i32_165 = arith.constant 2 : i32
    %c0_i32_166 = arith.constant 0 : i32
    %221 = tpu.memref_slice %arg2[%185, %c0_i32_166] : memref<100x128xf32, #tpu.memory_space<any>> -> memref<1x128xf32, #tpu.memory_space<any>>
    %c4_i32_167 = arith.constant 4 : i32
    %c0_i32_168 = arith.constant 0 : i32
    %222 = tpu.memref_slice %arg8[%c2_i32_164, %c4_i32_167, %c0_i32_168] : memref<8x8x128xf32, #tpu.memory_space<vmem>> -> memref<1x1x128xf32, #tpu.memory_space<vmem>>
    %223 = tpu.memref_squeeze %222 : memref<1x1x128xf32, #tpu.memory_space<vmem>> -> memref<1x128xf32, #tpu.memory_space<vmem>>
    %224 = tpu.memref_slice %arg9[%c2_i32_165] : memref<8x!tpu.dma_semaphore, #tpu.memory_space<semaphore_mem>> -> memref<1x!tpu.dma_semaphore, #tpu.memory_space<semaphore_mem>>
    %225 = tpu.memref_squeeze %224 : memref<1x!tpu.dma_semaphore, #tpu.memory_space<semaphore_mem>> -> memref<!tpu.dma_semaphore, #tpu.memory_space<semaphore_mem>>
    tpu.enqueue_dma source(%221 : memref<1x128xf32, #tpu.memory_space<any>>) target(%223 : memref<1x128xf32, #tpu.memory_space<vmem>>) target_semaphore(%225 : memref<!tpu.dma_semaphore, #tpu.memory_space<semaphore_mem>>)
    %c2_i32_169 = arith.constant 2 : i32
    %c2_i32_170 = arith.constant 2 : i32
    %c0_i32_171 = arith.constant 0 : i32
    %226 = tpu.memref_slice %arg2[%190, %c0_i32_171] : memref<100x128xf32, #tpu.memory_space<any>> -> memref<1x128xf32, #tpu.memory_space<any>>
    %c5_i32_172 = arith.constant 5 : i32
    %c0_i32_173 = arith.constant 0 : i32
    %227 = tpu.memref_slice %arg8[%c2_i32_169, %c5_i32_172, %c0_i32_173] : memref<8x8x128xf32, #tpu.memory_space<vmem>> -> memref<1x1x128xf32, #tpu.memory_space<vmem>>
    %228 = tpu.memref_squeeze %227 : memref<1x1x128xf32, #tpu.memory_space<vmem>> -> memref<1x128xf32, #tpu.memory_space<vmem>>
    %229 = tpu.memref_slice %arg9[%c2_i32_170] : memref<8x!tpu.dma_semaphore, #tpu.memory_space<semaphore_mem>> -> memref<1x!tpu.dma_semaphore, #tpu.memory_space<semaphore_mem>>
    %230 = tpu.memref_squeeze %229 : memref<1x!tpu.dma_semaphore, #tpu.memory_space<semaphore_mem>> -> memref<!tpu.dma_semaphore, #tpu.memory_space<semaphore_mem>>
    tpu.enqueue_dma source(%226 : memref<1x128xf32, #tpu.memory_space<any>>) target(%228 : memref<1x128xf32, #tpu.memory_space<vmem>>) target_semaphore(%230 : memref<!tpu.dma_semaphore, #tpu.memory_space<semaphore_mem>>)
    %c2_i32_174 = arith.constant 2 : i32
    %c2_i32_175 = arith.constant 2 : i32
    %c0_i32_176 = arith.constant 0 : i32
    %231 = tpu.memref_slice %arg2[%195, %c0_i32_176] : memref<100x128xf32, #tpu.memory_space<any>> -> memref<1x128xf32, #tpu.memory_space<any>>
    %c6_i32_177 = arith.constant 6 : i32
    %c0_i32_178 = arith.constant 0 : i32
    %232 = tpu.memref_slice %arg8[%c2_i32_174, %c6_i32_177, %c0_i32_178] : memref<8x8x128xf32, #tpu.memory_space<vmem>> -> memref<1x1x128xf32, #tpu.memory_space<vmem>>
    %233 = tpu.memref_squeeze %232 : memref<1x1x128xf32, #tpu.memory_space<vmem>> -> memref<1x128xf32, #tpu.memory_space<vmem>>
    %234 = tpu.memref_slice %arg9[%c2_i32_175] : memref<8x!tpu.dma_semaphore, #tpu.memory_space<semaphore_mem>> -> memref<1x!tpu.dma_semaphore, #tpu.memory_space<semaphore_mem>>
    %235 = tpu.memref_squeeze %234 : memref<1x!tpu.dma_semaphore, #tpu.memory_space<semaphore_mem>> -> memref<!tpu.dma_semaphore, #tpu.memory_space<semaphore_mem>>
    tpu.enqueue_dma source(%231 : memref<1x128xf32, #tpu.memory_space<any>>) target(%233 : memref<1x128xf32, #tpu.memory_space<vmem>>) target_semaphore(%235 : memref<!tpu.dma_semaphore, #tpu.memory_space<semaphore_mem>>)
    %c2_i32_179 = arith.constant 2 : i32
    %c2_i32_180 = arith.constant 2 : i32
    %c0_i32_181 = arith.constant 0 : i32
    %236 = tpu.memref_slice %arg2[%200, %c0_i32_181] : memref<100x128xf32, #tpu.memory_space<any>> -> memref<1x128xf32, #tpu.memory_space<any>>
    %c7_i32_182 = arith.constant 7 : i32
    %c0_i32_183 = arith.constant 0 : i32
    %237 = tpu.memref_slice %arg8[%c2_i32_179, %c7_i32_182, %c0_i32_183] : memref<8x8x128xf32, #tpu.memory_space<vmem>> -> memref<1x1x128xf32, #tpu.memory_space<vmem>>
    %238 = tpu.memref_squeeze %237 : memref<1x1x128xf32, #tpu.memory_space<vmem>> -> memref<1x128xf32, #tpu.memory_space<vmem>>
    %239 = tpu.memref_slice %arg9[%c2_i32_180] : memref<8x!tpu.dma_semaphore, #tpu.memory_space<semaphore_mem>> -> memref<1x!tpu.dma_semaphore, #tpu.memory_space<semaphore_mem>>
    %240 = tpu.memref_squeeze %239 : memref<1x!tpu.dma_semaphore, #tpu.memory_space<semaphore_mem>> -> memref<!tpu.dma_semaphore, #tpu.memory_space<semaphore_mem>>
    tpu.enqueue_dma source(%236 : memref<1x128xf32, #tpu.memory_space<any>>) target(%238 : memref<1x128xf32, #tpu.memory_space<vmem>>) target_semaphore(%240 : memref<!tpu.dma_semaphore, #tpu.memory_space<semaphore_mem>>)
    %c0_i32_184 = arith.constant 0 : i32
    %241 = arith.addi %0, %c0_i32_184 : i32
    %c8_i32_185 = arith.constant 8 : i32
    %242 = arith.muli %241, %c8_i32_185 : i32
    %c3_i32_186 = arith.constant 3 : i32
    %243 = arith.addi %242, %c3_i32_186 : i32
    %244 = arith.index_cast %243 : i32 to index
    %245 = memref.load %arg1[%244] : memref<64xi32, #tpu.memory_space<smem>>
    %c1_i32_187 = arith.constant 1 : i32
    %246 = arith.addi %0, %c1_i32_187 : i32
    %c8_i32_188 = arith.constant 8 : i32
    %247 = arith.muli %246, %c8_i32_188 : i32
    %c3_i32_189 = arith.constant 3 : i32
    %248 = arith.addi %247, %c3_i32_189 : i32
    %249 = arith.index_cast %248 : i32 to index
    %250 = memref.load %arg1[%249] : memref<64xi32, #tpu.memory_space<smem>>
    %c2_i32_190 = arith.constant 2 : i32
    %251 = arith.addi %0, %c2_i32_190 : i32
    %c8_i32_191 = arith.constant 8 : i32
    %252 = arith.muli %251, %c8_i32_191 : i32
    %c3_i32_192 = arith.constant 3 : i32
    %253 = arith.addi %252, %c3_i32_192 : i32
    %254 = arith.index_cast %253 : i32 to index
    %255 = memref.load %arg1[%254] : memref<64xi32, #tpu.memory_space<smem>>
    %c3_i32_193 = arith.constant 3 : i32
    %256 = arith.addi %0, %c3_i32_193 : i32
    %c8_i32_194 = arith.constant 8 : i32
    %257 = arith.muli %256, %c8_i32_194 : i32
    %c3_i32_195 = arith.constant 3 : i32
    %258 = arith.addi %257, %c3_i32_195 : i32
    %259 = arith.index_cast %258 : i32 to index
    %260 = memref.load %arg1[%259] : memref<64xi32, #tpu.memory_space<smem>>
    %c4_i32_196 = arith.constant 4 : i32
    %261 = arith.addi %0, %c4_i32_196 : i32
    %c8_i32_197 = arith.constant 8 : i32
    %262 = arith.muli %261, %c8_i32_197 : i32
    %c3_i32_198 = arith.constant 3 : i32
    %263 = arith.addi %262, %c3_i32_198 : i32
    %264 = arith.index_cast %263 : i32 to index
    %265 = memref.load %arg1[%264] : memref<64xi32, #tpu.memory_space<smem>>
    %c5_i32_199 = arith.constant 5 : i32
    %266 = arith.addi %0, %c5_i32_199 : i32
    %c8_i32_200 = arith.constant 8 : i32
    %267 = arith.muli %266, %c8_i32_200 : i32
    %c3_i32_201 = arith.constant 3 : i32
    %268 = arith.addi %267, %c3_i32_201 : i32
    %269 = arith.index_cast %268 : i32 to index
    %270 = memref.load %arg1[%269] : memref<64xi32, #tpu.memory_space<smem>>
    %c6_i32_202 = arith.constant 6 : i32
    %271 = arith.addi %0, %c6_i32_202 : i32
    %c8_i32_203 = arith.constant 8 : i32
    %272 = arith.muli %271, %c8_i32_203 : i32
    %c3_i32_204 = arith.constant 3 : i32
    %273 = arith.addi %272, %c3_i32_204 : i32
    %274 = arith.index_cast %273 : i32 to index
    %275 = memref.load %arg1[%274] : memref<64xi32, #tpu.memory_space<smem>>
    %c7_i32_205 = arith.constant 7 : i32
    %276 = arith.addi %0, %c7_i32_205 : i32
    %c8_i32_206 = arith.constant 8 : i32
    %277 = arith.muli %276, %c8_i32_206 : i32
    %c3_i32_207 = arith.constant 3 : i32
    %278 = arith.addi %277, %c3_i32_207 : i32
    %279 = arith.index_cast %278 : i32 to index
    %280 = memref.load %arg1[%279] : memref<64xi32, #tpu.memory_space<smem>>
    %c3_i32_208 = arith.constant 3 : i32
    %c3_i32_209 = arith.constant 3 : i32
    %c0_i32_210 = arith.constant 0 : i32
    %281 = tpu.memref_slice %arg2[%245, %c0_i32_210] : memref<100x128xf32, #tpu.memory_space<any>> -> memref<1x128xf32, #tpu.memory_space<any>>
    %c0_i32_211 = arith.constant 0 : i32
    %c0_i32_212 = arith.constant 0 : i32
    %282 = tpu.memref_slice %arg8[%c3_i32_208, %c0_i32_211, %c0_i32_212] : memref<8x8x128xf32, #tpu.memory_space<vmem>> -> memref<1x1x128xf32, #tpu.memory_space<vmem>>
    %283 = tpu.memref_squeeze %282 : memref<1x1x128xf32, #tpu.memory_space<vmem>> -> memref<1x128xf32, #tpu.memory_space<vmem>>
    %284 = tpu.memref_slice %arg9[%c3_i32_209] : memref<8x!tpu.dma_semaphore, #tpu.memory_space<semaphore_mem>> -> memref<1x!tpu.dma_semaphore, #tpu.memory_space<semaphore_mem>>
    %285 = tpu.memref_squeeze %284 : memref<1x!tpu.dma_semaphore, #tpu.memory_space<semaphore_mem>> -> memref<!tpu.dma_semaphore, #tpu.memory_space<semaphore_mem>>
    tpu.enqueue_dma source(%281 : memref<1x128xf32, #tpu.memory_space<any>>) target(%283 : memref<1x128xf32, #tpu.memory_space<vmem>>) target_semaphore(%285 : memref<!tpu.dma_semaphore, #tpu.memory_space<semaphore_mem>>)
    %c3_i32_213 = arith.constant 3 : i32
    %c3_i32_214 = arith.constant 3 : i32
    %c0_i32_215 = arith.constant 0 : i32
    %286 = tpu.memref_slice %arg2[%250, %c0_i32_215] : memref<100x128xf32, #tpu.memory_space<any>> -> memref<1x128xf32, #tpu.memory_space<any>>
    %c1_i32_216 = arith.constant 1 : i32
    %c0_i32_217 = arith.constant 0 : i32
    %287 = tpu.memref_slice %arg8[%c3_i32_213, %c1_i32_216, %c0_i32_217] : memref<8x8x128xf32, #tpu.memory_space<vmem>> -> memref<1x1x128xf32, #tpu.memory_space<vmem>>
    %288 = tpu.memref_squeeze %287 : memref<1x1x128xf32, #tpu.memory_space<vmem>> -> memref<1x128xf32, #tpu.memory_space<vmem>>
    %289 = tpu.memref_slice %arg9[%c3_i32_214] : memref<8x!tpu.dma_semaphore, #tpu.memory_space<semaphore_mem>> -> memref<1x!tpu.dma_semaphore, #tpu.memory_space<semaphore_mem>>
    %290 = tpu.memref_squeeze %289 : memref<1x!tpu.dma_semaphore, #tpu.memory_space<semaphore_mem>> -> memref<!tpu.dma_semaphore, #tpu.memory_space<semaphore_mem>>
    tpu.enqueue_dma source(%286 : memref<1x128xf32, #tpu.memory_space<any>>) target(%288 : memref<1x128xf32, #tpu.memory_space<vmem>>) target_semaphore(%290 : memref<!tpu.dma_semaphore, #tpu.memory_space<semaphore_mem>>)
    %c3_i32_218 = arith.constant 3 : i32
    %c3_i32_219 = arith.constant 3 : i32
    %c0_i32_220 = arith.constant 0 : i32
    %291 = tpu.memref_slice %arg2[%255, %c0_i32_220] : memref<100x128xf32, #tpu.memory_space<any>> -> memref<1x128xf32, #tpu.memory_space<any>>
    %c2_i32_221 = arith.constant 2 : i32
    %c0_i32_222 = arith.constant 0 : i32
    %292 = tpu.memref_slice %arg8[%c3_i32_218, %c2_i32_221, %c0_i32_222] : memref<8x8x128xf32, #tpu.memory_space<vmem>> -> memref<1x1x128xf32, #tpu.memory_space<vmem>>
    %293 = tpu.memref_squeeze %292 : memref<1x1x128xf32, #tpu.memory_space<vmem>> -> memref<1x128xf32, #tpu.memory_space<vmem>>
    %294 = tpu.memref_slice %arg9[%c3_i32_219] : memref<8x!tpu.dma_semaphore, #tpu.memory_space<semaphore_mem>> -> memref<1x!tpu.dma_semaphore, #tpu.memory_space<semaphore_mem>>
    %295 = tpu.memref_squeeze %294 : memref<1x!tpu.dma_semaphore, #tpu.memory_space<semaphore_mem>> -> memref<!tpu.dma_semaphore, #tpu.memory_space<semaphore_mem>>
    tpu.enqueue_dma source(%291 : memref<1x128xf32, #tpu.memory_space<any>>) target(%293 : memref<1x128xf32, #tpu.memory_space<vmem>>) target_semaphore(%295 : memref<!tpu.dma_semaphore, #tpu.memory_space<semaphore_mem>>)
    %c3_i32_223 = arith.constant 3 : i32
    %c3_i32_224 = arith.constant 3 : i32
    %c0_i32_225 = arith.constant 0 : i32
    %296 = tpu.memref_slice %arg2[%260, %c0_i32_225] : memref<100x128xf32, #tpu.memory_space<any>> -> memref<1x128xf32, #tpu.memory_space<any>>
    %c3_i32_226 = arith.constant 3 : i32
    %c0_i32_227 = arith.constant 0 : i32
    %297 = tpu.memref_slice %arg8[%c3_i32_223, %c3_i32_226, %c0_i32_227] : memref<8x8x128xf32, #tpu.memory_space<vmem>> -> memref<1x1x128xf32, #tpu.memory_space<vmem>>
    %298 = tpu.memref_squeeze %297 : memref<1x1x128xf32, #tpu.memory_space<vmem>> -> memref<1x128xf32, #tpu.memory_space<vmem>>
    %299 = tpu.memref_slice %arg9[%c3_i32_224] : memref<8x!tpu.dma_semaphore, #tpu.memory_space<semaphore_mem>> -> memref<1x!tpu.dma_semaphore, #tpu.memory_space<semaphore_mem>>
    %300 = tpu.memref_squeeze %299 : memref<1x!tpu.dma_semaphore, #tpu.memory_space<semaphore_mem>> -> memref<!tpu.dma_semaphore, #tpu.memory_space<semaphore_mem>>
    tpu.enqueue_dma source(%296 : memref<1x128xf32, #tpu.memory_space<any>>) target(%298 : memref<1x128xf32, #tpu.memory_space<vmem>>) target_semaphore(%300 : memref<!tpu.dma_semaphore, #tpu.memory_space<semaphore_mem>>)
    %c3_i32_228 = arith.constant 3 : i32
    %c3_i32_229 = arith.constant 3 : i32
    %c0_i32_230 = arith.constant 0 : i32
    %301 = tpu.memref_slice %arg2[%265, %c0_i32_230] : memref<100x128xf32, #tpu.memory_space<any>> -> memref<1x128xf32, #tpu.memory_space<any>>
    %c4_i32_231 = arith.constant 4 : i32
    %c0_i32_232 = arith.constant 0 : i32
    %302 = tpu.memref_slice %arg8[%c3_i32_228, %c4_i32_231, %c0_i32_232] : memref<8x8x128xf32, #tpu.memory_space<vmem>> -> memref<1x1x128xf32, #tpu.memory_space<vmem>>
    %303 = tpu.memref_squeeze %302 : memref<1x1x128xf32, #tpu.memory_space<vmem>> -> memref<1x128xf32, #tpu.memory_space<vmem>>
    %304 = tpu.memref_slice %arg9[%c3_i32_229] : memref<8x!tpu.dma_semaphore, #tpu.memory_space<semaphore_mem>> -> memref<1x!tpu.dma_semaphore, #tpu.memory_space<semaphore_mem>>
    %305 = tpu.memref_squeeze %304 : memref<1x!tpu.dma_semaphore, #tpu.memory_space<semaphore_mem>> -> memref<!tpu.dma_semaphore, #tpu.memory_space<semaphore_mem>>
    tpu.enqueue_dma source(%301 : memref<1x128xf32, #tpu.memory_space<any>>) target(%303 : memref<1x128xf32, #tpu.memory_space<vmem>>) target_semaphore(%305 : memref<!tpu.dma_semaphore, #tpu.memory_space<semaphore_mem>>)
    %c3_i32_233 = arith.constant 3 : i32
    %c3_i32_234 = arith.constant 3 : i32
    %c0_i32_235 = arith.constant 0 : i32
    %306 = tpu.memref_slice %arg2[%270, %c0_i32_235] : memref<100x128xf32, #tpu.memory_space<any>> -> memref<1x128xf32, #tpu.memory_space<any>>
    %c5_i32_236 = arith.constant 5 : i32
    %c0_i32_237 = arith.constant 0 : i32
    %307 = tpu.memref_slice %arg8[%c3_i32_233, %c5_i32_236, %c0_i32_237] : memref<8x8x128xf32, #tpu.memory_space<vmem>> -> memref<1x1x128xf32, #tpu.memory_space<vmem>>
    %308 = tpu.memref_squeeze %307 : memref<1x1x128xf32, #tpu.memory_space<vmem>> -> memref<1x128xf32, #tpu.memory_space<vmem>>
    %309 = tpu.memref_slice %arg9[%c3_i32_234] : memref<8x!tpu.dma_semaphore, #tpu.memory_space<semaphore_mem>> -> memref<1x!tpu.dma_semaphore, #tpu.memory_space<semaphore_mem>>
    %310 = tpu.memref_squeeze %309 : memref<1x!tpu.dma_semaphore, #tpu.memory_space<semaphore_mem>> -> memref<!tpu.dma_semaphore, #tpu.memory_space<semaphore_mem>>
    tpu.enqueue_dma source(%306 : memref<1x128xf32, #tpu.memory_space<any>>) target(%308 : memref<1x128xf32, #tpu.memory_space<vmem>>) target_semaphore(%310 : memref<!tpu.dma_semaphore, #tpu.memory_space<semaphore_mem>>)
    %c3_i32_238 = arith.constant 3 : i32
    %c3_i32_239 = arith.constant 3 : i32
    %c0_i32_240 = arith.constant 0 : i32
    %311 = tpu.memref_slice %arg2[%275, %c0_i32_240] : memref<100x128xf32, #tpu.memory_space<any>> -> memref<1x128xf32, #tpu.memory_space<any>>
    %c6_i32_241 = arith.constant 6 : i32
    %c0_i32_242 = arith.constant 0 : i32
    %312 = tpu.memref_slice %arg8[%c3_i32_238, %c6_i32_241, %c0_i32_242] : memref<8x8x128xf32, #tpu.memory_space<vmem>> -> memref<1x1x128xf32, #tpu.memory_space<vmem>>
    %313 = tpu.memref_squeeze %312 : memref<1x1x128xf32, #tpu.memory_space<vmem>> -> memref<1x128xf32, #tpu.memory_space<vmem>>
    %314 = tpu.memref_slice %arg9[%c3_i32_239] : memref<8x!tpu.dma_semaphore, #tpu.memory_space<semaphore_mem>> -> memref<1x!tpu.dma_semaphore, #tpu.memory_space<semaphore_mem>>
    %315 = tpu.memref_squeeze %314 : memref<1x!tpu.dma_semaphore, #tpu.memory_space<semaphore_mem>> -> memref<!tpu.dma_semaphore, #tpu.memory_space<semaphore_mem>>
    tpu.enqueue_dma source(%311 : memref<1x128xf32, #tpu.memory_space<any>>) target(%313 : memref<1x128xf32, #tpu.memory_space<vmem>>) target_semaphore(%315 : memref<!tpu.dma_semaphore, #tpu.memory_space<semaphore_mem>>)
    %c3_i32_243 = arith.constant 3 : i32
    %c3_i32_244 = arith.constant 3 : i32
    %c0_i32_245 = arith.constant 0 : i32
    %316 = tpu.memref_slice %arg2[%280, %c0_i32_245] : memref<100x128xf32, #tpu.memory_space<any>> -> memref<1x128xf32, #tpu.memory_space<any>>
    %c7_i32_246 = arith.constant 7 : i32
    %c0_i32_247 = arith.constant 0 : i32
    %317 = tpu.memref_slice %arg8[%c3_i32_243, %c7_i32_246, %c0_i32_247] : memref<8x8x128xf32, #tpu.memory_space<vmem>> -> memref<1x1x128xf32, #tpu.memory_space<vmem>>
    %318 = tpu.memref_squeeze %317 : memref<1x1x128xf32, #tpu.memory_space<vmem>> -> memref<1x128xf32, #tpu.memory_space<vmem>>
    %319 = tpu.memref_slice %arg9[%c3_i32_244] : memref<8x!tpu.dma_semaphore, #tpu.memory_space<semaphore_mem>> -> memref<1x!tpu.dma_semaphore, #tpu.memory_space<semaphore_mem>>
    %320 = tpu.memref_squeeze %319 : memref<1x!tpu.dma_semaphore, #tpu.memory_space<semaphore_mem>> -> memref<!tpu.dma_semaphore, #tpu.memory_space<semaphore_mem>>
    tpu.enqueue_dma source(%316 : memref<1x128xf32, #tpu.memory_space<any>>) target(%318 : memref<1x128xf32, #tpu.memory_space<vmem>>) target_semaphore(%320 : memref<!tpu.dma_semaphore, #tpu.memory_space<semaphore_mem>>)
    %c0_i32_248 = arith.constant 0 : i32
    %321 = arith.addi %0, %c0_i32_248 : i32
    %c8_i32_249 = arith.constant 8 : i32
    %322 = arith.muli %321, %c8_i32_249 : i32
    %c4_i32_250 = arith.constant 4 : i32
    %323 = arith.addi %322, %c4_i32_250 : i32
    %324 = arith.index_cast %323 : i32 to index
    %325 = memref.load %arg1[%324] : memref<64xi32, #tpu.memory_space<smem>>
    %c1_i32_251 = arith.constant 1 : i32
    %326 = arith.addi %0, %c1_i32_251 : i32
    %c8_i32_252 = arith.constant 8 : i32
    %327 = arith.muli %326, %c8_i32_252 : i32
    %c4_i32_253 = arith.constant 4 : i32
    %328 = arith.addi %327, %c4_i32_253 : i32
    %329 = arith.index_cast %328 : i32 to index
    %330 = memref.load %arg1[%329] : memref<64xi32, #tpu.memory_space<smem>>
    %c2_i32_254 = arith.constant 2 : i32
    %331 = arith.addi %0, %c2_i32_254 : i32
    %c8_i32_255 = arith.constant 8 : i32
    %332 = arith.muli %331, %c8_i32_255 : i32
    %c4_i32_256 = arith.constant 4 : i32
    %333 = arith.addi %332, %c4_i32_256 : i32
    %334 = arith.index_cast %333 : i32 to index
    %335 = memref.load %arg1[%334] : memref<64xi32, #tpu.memory_space<smem>>
    %c3_i32_257 = arith.constant 3 : i32
    %336 = arith.addi %0, %c3_i32_257 : i32
    %c8_i32_258 = arith.constant 8 : i32
    %337 = arith.muli %336, %c8_i32_258 : i32
    %c4_i32_259 = arith.constant 4 : i32
    %338 = arith.addi %337, %c4_i32_259 : i32
    %339 = arith.index_cast %338 : i32 to index
    %340 = memref.load %arg1[%339] : memref<64xi32, #tpu.memory_space<smem>>
    %c4_i32_260 = arith.constant 4 : i32
    %341 = arith.addi %0, %c4_i32_260 : i32
    %c8_i32_261 = arith.constant 8 : i32
    %342 = arith.muli %341, %c8_i32_261 : i32
    %c4_i32_262 = arith.constant 4 : i32
    %343 = arith.addi %342, %c4_i32_262 : i32
    %344 = arith.index_cast %343 : i32 to index
    %345 = memref.load %arg1[%344] : memref<64xi32, #tpu.memory_space<smem>>
    %c5_i32_263 = arith.constant 5 : i32
    %346 = arith.addi %0, %c5_i32_263 : i32
    %c8_i32_264 = arith.constant 8 : i32
    %347 = arith.muli %346, %c8_i32_264 : i32
    %c4_i32_265 = arith.constant 4 : i32
    %348 = arith.addi %347, %c4_i32_265 : i32
    %349 = arith.index_cast %348 : i32 to index
    %350 = memref.load %arg1[%349] : memref<64xi32, #tpu.memory_space<smem>>
    %c6_i32_266 = arith.constant 6 : i32
    %351 = arith.addi %0, %c6_i32_266 : i32
    %c8_i32_267 = arith.constant 8 : i32
    %352 = arith.muli %351, %c8_i32_267 : i32
    %c4_i32_268 = arith.constant 4 : i32
    %353 = arith.addi %352, %c4_i32_268 : i32
    %354 = arith.index_cast %353 : i32 to index
    %355 = memref.load %arg1[%354] : memref<64xi32, #tpu.memory_space<smem>>
    %c7_i32_269 = arith.constant 7 : i32
    %356 = arith.addi %0, %c7_i32_269 : i32
    %c8_i32_270 = arith.constant 8 : i32
    %357 = arith.muli %356, %c8_i32_270 : i32
    %c4_i32_271 = arith.constant 4 : i32
    %358 = arith.addi %357, %c4_i32_271 : i32
    %359 = arith.index_cast %358 : i32 to index
    %360 = memref.load %arg1[%359] : memref<64xi32, #tpu.memory_space<smem>>
    %c4_i32_272 = arith.constant 4 : i32
    %c4_i32_273 = arith.constant 4 : i32
    %c0_i32_274 = arith.constant 0 : i32
    %361 = tpu.memref_slice %arg2[%325, %c0_i32_274] : memref<100x128xf32, #tpu.memory_space<any>> -> memref<1x128xf32, #tpu.memory_space<any>>
    %c0_i32_275 = arith.constant 0 : i32
    %c0_i32_276 = arith.constant 0 : i32
    %362 = tpu.memref_slice %arg8[%c4_i32_272, %c0_i32_275, %c0_i32_276] : memref<8x8x128xf32, #tpu.memory_space<vmem>> -> memref<1x1x128xf32, #tpu.memory_space<vmem>>
    %363 = tpu.memref_squeeze %362 : memref<1x1x128xf32, #tpu.memory_space<vmem>> -> memref<1x128xf32, #tpu.memory_space<vmem>>
    %364 = tpu.memref_slice %arg9[%c4_i32_273] : memref<8x!tpu.dma_semaphore, #tpu.memory_space<semaphore_mem>> -> memref<1x!tpu.dma_semaphore, #tpu.memory_space<semaphore_mem>>
    %365 = tpu.memref_squeeze %364 : memref<1x!tpu.dma_semaphore, #tpu.memory_space<semaphore_mem>> -> memref<!tpu.dma_semaphore, #tpu.memory_space<semaphore_mem>>
    tpu.enqueue_dma source(%361 : memref<1x128xf32, #tpu.memory_space<any>>) target(%363 : memref<1x128xf32, #tpu.memory_space<vmem>>) target_semaphore(%365 : memref<!tpu.dma_semaphore, #tpu.memory_space<semaphore_mem>>)
    %c4_i32_277 = arith.constant 4 : i32
    %c4_i32_278 = arith.constant 4 : i32
    %c0_i32_279 = arith.constant 0 : i32
    %366 = tpu.memref_slice %arg2[%330, %c0_i32_279] : memref<100x128xf32, #tpu.memory_space<any>> -> memref<1x128xf32, #tpu.memory_space<any>>
    %c1_i32_280 = arith.constant 1 : i32
    %c0_i32_281 = arith.constant 0 : i32
    %367 = tpu.memref_slice %arg8[%c4_i32_277, %c1_i32_280, %c0_i32_281] : memref<8x8x128xf32, #tpu.memory_space<vmem>> -> memref<1x1x128xf32, #tpu.memory_space<vmem>>
    %368 = tpu.memref_squeeze %367 : memref<1x1x128xf32, #tpu.memory_space<vmem>> -> memref<1x128xf32, #tpu.memory_space<vmem>>
    %369 = tpu.memref_slice %arg9[%c4_i32_278] : memref<8x!tpu.dma_semaphore, #tpu.memory_space<semaphore_mem>> -> memref<1x!tpu.dma_semaphore, #tpu.memory_space<semaphore_mem>>
    %370 = tpu.memref_squeeze %369 : memref<1x!tpu.dma_semaphore, #tpu.memory_space<semaphore_mem>> -> memref<!tpu.dma_semaphore, #tpu.memory_space<semaphore_mem>>
    tpu.enqueue_dma source(%366 : memref<1x128xf32, #tpu.memory_space<any>>) target(%368 : memref<1x128xf32, #tpu.memory_space<vmem>>) target_semaphore(%370 : memref<!tpu.dma_semaphore, #tpu.memory_space<semaphore_mem>>)
    %c4_i32_282 = arith.constant 4 : i32
    %c4_i32_283 = arith.constant 4 : i32
    %c0_i32_284 = arith.constant 0 : i32
    %371 = tpu.memref_slice %arg2[%335, %c0_i32_284] : memref<100x128xf32, #tpu.memory_space<any>> -> memref<1x128xf32, #tpu.memory_space<any>>
    %c2_i32_285 = arith.constant 2 : i32
    %c0_i32_286 = arith.constant 0 : i32
    %372 = tpu.memref_slice %arg8[%c4_i32_282, %c2_i32_285, %c0_i32_286] : memref<8x8x128xf32, #tpu.memory_space<vmem>> -> memref<1x1x128xf32, #tpu.memory_space<vmem>>
    %373 = tpu.memref_squeeze %372 : memref<1x1x128xf32, #tpu.memory_space<vmem>> -> memref<1x128xf32, #tpu.memory_space<vmem>>
    %374 = tpu.memref_slice %arg9[%c4_i32_283] : memref<8x!tpu.dma_semaphore, #tpu.memory_space<semaphore_mem>> -> memref<1x!tpu.dma_semaphore, #tpu.memory_space<semaphore_mem>>
    %375 = tpu.memref_squeeze %374 : memref<1x!tpu.dma_semaphore, #tpu.memory_space<semaphore_mem>> -> memref<!tpu.dma_semaphore, #tpu.memory_space<semaphore_mem>>
    tpu.enqueue_dma source(%371 : memref<1x128xf32, #tpu.memory_space<any>>) target(%373 : memref<1x128xf32, #tpu.memory_space<vmem>>) target_semaphore(%375 : memref<!tpu.dma_semaphore, #tpu.memory_space<semaphore_mem>>)
    %c4_i32_287 = arith.constant 4 : i32
    %c4_i32_288 = arith.constant 4 : i32
    %c0_i32_289 = arith.constant 0 : i32
    %376 = tpu.memref_slice %arg2[%340, %c0_i32_289] : memref<100x128xf32, #tpu.memory_space<any>> -> memref<1x128xf32, #tpu.memory_space<any>>
    %c3_i32_290 = arith.constant 3 : i32
    %c0_i32_291 = arith.constant 0 : i32
    %377 = tpu.memref_slice %arg8[%c4_i32_287, %c3_i32_290, %c0_i32_291] : memref<8x8x128xf32, #tpu.memory_space<vmem>> -> memref<1x1x128xf32, #tpu.memory_space<vmem>>
    %378 = tpu.memref_squeeze %377 : memref<1x1x128xf32, #tpu.memory_space<vmem>> -> memref<1x128xf32, #tpu.memory_space<vmem>>
    %379 = tpu.memref_slice %arg9[%c4_i32_288] : memref<8x!tpu.dma_semaphore, #tpu.memory_space<semaphore_mem>> -> memref<1x!tpu.dma_semaphore, #tpu.memory_space<semaphore_mem>>
    %380 = tpu.memref_squeeze %379 : memref<1x!tpu.dma_semaphore, #tpu.memory_space<semaphore_mem>> -> memref<!tpu.dma_semaphore, #tpu.memory_space<semaphore_mem>>
    tpu.enqueue_dma source(%376 : memref<1x128xf32, #tpu.memory_space<any>>) target(%378 : memref<1x128xf32, #tpu.memory_space<vmem>>) target_semaphore(%380 : memref<!tpu.dma_semaphore, #tpu.memory_space<semaphore_mem>>)
    %c4_i32_292 = arith.constant 4 : i32
    %c4_i32_293 = arith.constant 4 : i32
    %c0_i32_294 = arith.constant 0 : i32
    %381 = tpu.memref_slice %arg2[%345, %c0_i32_294] : memref<100x128xf32, #tpu.memory_space<any>> -> memref<1x128xf32, #tpu.memory_space<any>>
    %c4_i32_295 = arith.constant 4 : i32
    %c0_i32_296 = arith.constant 0 : i32
    %382 = tpu.memref_slice %arg8[%c4_i32_292, %c4_i32_295, %c0_i32_296] : memref<8x8x128xf32, #tpu.memory_space<vmem>> -> memref<1x1x128xf32, #tpu.memory_space<vmem>>
    %383 = tpu.memref_squeeze %382 : memref<1x1x128xf32, #tpu.memory_space<vmem>> -> memref<1x128xf32, #tpu.memory_space<vmem>>
    %384 = tpu.memref_slice %arg9[%c4_i32_293] : memref<8x!tpu.dma_semaphore, #tpu.memory_space<semaphore_mem>> -> memref<1x!tpu.dma_semaphore, #tpu.memory_space<semaphore_mem>>
    %385 = tpu.memref_squeeze %384 : memref<1x!tpu.dma_semaphore, #tpu.memory_space<semaphore_mem>> -> memref<!tpu.dma_semaphore, #tpu.memory_space<semaphore_mem>>
    tpu.enqueue_dma source(%381 : memref<1x128xf32, #tpu.memory_space<any>>) target(%383 : memref<1x128xf32, #tpu.memory_space<vmem>>) target_semaphore(%385 : memref<!tpu.dma_semaphore, #tpu.memory_space<semaphore_mem>>)
    %c4_i32_297 = arith.constant 4 : i32
    %c4_i32_298 = arith.constant 4 : i32
    %c0_i32_299 = arith.constant 0 : i32
    %386 = tpu.memref_slice %arg2[%350, %c0_i32_299] : memref<100x128xf32, #tpu.memory_space<any>> -> memref<1x128xf32, #tpu.memory_space<any>>
    %c5_i32_300 = arith.constant 5 : i32
    %c0_i32_301 = arith.constant 0 : i32
    %387 = tpu.memref_slice %arg8[%c4_i32_297, %c5_i32_300, %c0_i32_301] : memref<8x8x128xf32, #tpu.memory_space<vmem>> -> memref<1x1x128xf32, #tpu.memory_space<vmem>>
    %388 = tpu.memref_squeeze %387 : memref<1x1x128xf32, #tpu.memory_space<vmem>> -> memref<1x128xf32, #tpu.memory_space<vmem>>
    %389 = tpu.memref_slice %arg9[%c4_i32_298] : memref<8x!tpu.dma_semaphore, #tpu.memory_space<semaphore_mem>> -> memref<1x!tpu.dma_semaphore, #tpu.memory_space<semaphore_mem>>
    %390 = tpu.memref_squeeze %389 : memref<1x!tpu.dma_semaphore, #tpu.memory_space<semaphore_mem>> -> memref<!tpu.dma_semaphore, #tpu.memory_space<semaphore_mem>>
    tpu.enqueue_dma source(%386 : memref<1x128xf32, #tpu.memory_space<any>>) target(%388 : memref<1x128xf32, #tpu.memory_space<vmem>>) target_semaphore(%390 : memref<!tpu.dma_semaphore, #tpu.memory_space<semaphore_mem>>)
    %c4_i32_302 = arith.constant 4 : i32
    %c4_i32_303 = arith.constant 4 : i32
    %c0_i32_304 = arith.constant 0 : i32
    %391 = tpu.memref_slice %arg2[%355, %c0_i32_304] : memref<100x128xf32, #tpu.memory_space<any>> -> memref<1x128xf32, #tpu.memory_space<any>>
    %c6_i32_305 = arith.constant 6 : i32
    %c0_i32_306 = arith.constant 0 : i32
    %392 = tpu.memref_slice %arg8[%c4_i32_302, %c6_i32_305, %c0_i32_306] : memref<8x8x128xf32, #tpu.memory_space<vmem>> -> memref<1x1x128xf32, #tpu.memory_space<vmem>>
    %393 = tpu.memref_squeeze %392 : memref<1x1x128xf32, #tpu.memory_space<vmem>> -> memref<1x128xf32, #tpu.memory_space<vmem>>
    %394 = tpu.memref_slice %arg9[%c4_i32_303] : memref<8x!tpu.dma_semaphore, #tpu.memory_space<semaphore_mem>> -> memref<1x!tpu.dma_semaphore, #tpu.memory_space<semaphore_mem>>
    %395 = tpu.memref_squeeze %394 : memref<1x!tpu.dma_semaphore, #tpu.memory_space<semaphore_mem>> -> memref<!tpu.dma_semaphore, #tpu.memory_space<semaphore_mem>>
    tpu.enqueue_dma source(%391 : memref<1x128xf32, #tpu.memory_space<any>>) target(%393 : memref<1x128xf32, #tpu.memory_space<vmem>>) target_semaphore(%395 : memref<!tpu.dma_semaphore, #tpu.memory_space<semaphore_mem>>)
    %c4_i32_307 = arith.constant 4 : i32
    %c4_i32_308 = arith.constant 4 : i32
    %c0_i32_309 = arith.constant 0 : i32
    %396 = tpu.memref_slice %arg2[%360, %c0_i32_309] : memref<100x128xf32, #tpu.memory_space<any>> -> memref<1x128xf32, #tpu.memory_space<any>>
    %c7_i32_310 = arith.constant 7 : i32
    %c0_i32_311 = arith.constant 0 : i32
    %397 = tpu.memref_slice %arg8[%c4_i32_307, %c7_i32_310, %c0_i32_311] : memref<8x8x128xf32, #tpu.memory_space<vmem>> -> memref<1x1x128xf32, #tpu.memory_space<vmem>>
    %398 = tpu.memref_squeeze %397 : memref<1x1x128xf32, #tpu.memory_space<vmem>> -> memref<1x128xf32, #tpu.memory_space<vmem>>
    %399 = tpu.memref_slice %arg9[%c4_i32_308] : memref<8x!tpu.dma_semaphore, #tpu.memory_space<semaphore_mem>> -> memref<1x!tpu.dma_semaphore, #tpu.memory_space<semaphore_mem>>
    %400 = tpu.memref_squeeze %399 : memref<1x!tpu.dma_semaphore, #tpu.memory_space<semaphore_mem>> -> memref<!tpu.dma_semaphore, #tpu.memory_space<semaphore_mem>>
    tpu.enqueue_dma source(%396 : memref<1x128xf32, #tpu.memory_space<any>>) target(%398 : memref<1x128xf32, #tpu.memory_space<vmem>>) target_semaphore(%400 : memref<!tpu.dma_semaphore, #tpu.memory_space<semaphore_mem>>)
    %c0_i32_312 = arith.constant 0 : i32
    %401 = arith.addi %0, %c0_i32_312 : i32
    %c8_i32_313 = arith.constant 8 : i32
    %402 = arith.muli %401, %c8_i32_313 : i32
    %c5_i32_314 = arith.constant 5 : i32
    %403 = arith.addi %402, %c5_i32_314 : i32
    %404 = arith.index_cast %403 : i32 to index
    %405 = memref.load %arg1[%404] : memref<64xi32, #tpu.memory_space<smem>>
    %c1_i32_315 = arith.constant 1 : i32
    %406 = arith.addi %0, %c1_i32_315 : i32
    %c8_i32_316 = arith.constant 8 : i32
    %407 = arith.muli %406, %c8_i32_316 : i32
    %c5_i32_317 = arith.constant 5 : i32
    %408 = arith.addi %407, %c5_i32_317 : i32
    %409 = arith.index_cast %408 : i32 to index
    %410 = memref.load %arg1[%409] : memref<64xi32, #tpu.memory_space<smem>>
    %c2_i32_318 = arith.constant 2 : i32
    %411 = arith.addi %0, %c2_i32_318 : i32
    %c8_i32_319 = arith.constant 8 : i32
    %412 = arith.muli %411, %c8_i32_319 : i32
    %c5_i32_320 = arith.constant 5 : i32
    %413 = arith.addi %412, %c5_i32_320 : i32
    %414 = arith.index_cast %413 : i32 to index
    %415 = memref.load %arg1[%414] : memref<64xi32, #tpu.memory_space<smem>>
    %c3_i32_321 = arith.constant 3 : i32
    %416 = arith.addi %0, %c3_i32_321 : i32
    %c8_i32_322 = arith.constant 8 : i32
    %417 = arith.muli %416, %c8_i32_322 : i32
    %c5_i32_323 = arith.constant 5 : i32
    %418 = arith.addi %417, %c5_i32_323 : i32
    %419 = arith.index_cast %418 : i32 to index
    %420 = memref.load %arg1[%419] : memref<64xi32, #tpu.memory_space<smem>>
    %c4_i32_324 = arith.constant 4 : i32
    %421 = arith.addi %0, %c4_i32_324 : i32
    %c8_i32_325 = arith.constant 8 : i32
    %422 = arith.muli %421, %c8_i32_325 : i32
    %c5_i32_326 = arith.constant 5 : i32
    %423 = arith.addi %422, %c5_i32_326 : i32
    %424 = arith.index_cast %423 : i32 to index
    %425 = memref.load %arg1[%424] : memref<64xi32, #tpu.memory_space<smem>>
    %c5_i32_327 = arith.constant 5 : i32
    %426 = arith.addi %0, %c5_i32_327 : i32
    %c8_i32_328 = arith.constant 8 : i32
    %427 = arith.muli %426, %c8_i32_328 : i32
    %c5_i32_329 = arith.constant 5 : i32
    %428 = arith.addi %427, %c5_i32_329 : i32
    %429 = arith.index_cast %428 : i32 to index
    %430 = memref.load %arg1[%429] : memref<64xi32, #tpu.memory_space<smem>>
    %c6_i32_330 = arith.constant 6 : i32
    %431 = arith.addi %0, %c6_i32_330 : i32
    %c8_i32_331 = arith.constant 8 : i32
    %432 = arith.muli %431, %c8_i32_331 : i32
    %c5_i32_332 = arith.constant 5 : i32
    %433 = arith.addi %432, %c5_i32_332 : i32
    %434 = arith.index_cast %433 : i32 to index
    %435 = memref.load %arg1[%434] : memref<64xi32, #tpu.memory_space<smem>>
    %c7_i32_333 = arith.constant 7 : i32
    %436 = arith.addi %0, %c7_i32_333 : i32
    %c8_i32_334 = arith.constant 8 : i32
    %437 = arith.muli %436, %c8_i32_334 : i32
    %c5_i32_335 = arith.constant 5 : i32
    %438 = arith.addi %437, %c5_i32_335 : i32
    %439 = arith.index_cast %438 : i32 to index
    %440 = memref.load %arg1[%439] : memref<64xi32, #tpu.memory_space<smem>>
    %c5_i32_336 = arith.constant 5 : i32
    %c5_i32_337 = arith.constant 5 : i32
    %c0_i32_338 = arith.constant 0 : i32
    %441 = tpu.memref_slice %arg2[%405, %c0_i32_338] : memref<100x128xf32, #tpu.memory_space<any>> -> memref<1x128xf32, #tpu.memory_space<any>>
    %c0_i32_339 = arith.constant 0 : i32
    %c0_i32_340 = arith.constant 0 : i32
    %442 = tpu.memref_slice %arg8[%c5_i32_336, %c0_i32_339, %c0_i32_340] : memref<8x8x128xf32, #tpu.memory_space<vmem>> -> memref<1x1x128xf32, #tpu.memory_space<vmem>>
    %443 = tpu.memref_squeeze %442 : memref<1x1x128xf32, #tpu.memory_space<vmem>> -> memref<1x128xf32, #tpu.memory_space<vmem>>
    %444 = tpu.memref_slice %arg9[%c5_i32_337] : memref<8x!tpu.dma_semaphore, #tpu.memory_space<semaphore_mem>> -> memref<1x!tpu.dma_semaphore, #tpu.memory_space<semaphore_mem>>
    %445 = tpu.memref_squeeze %444 : memref<1x!tpu.dma_semaphore, #tpu.memory_space<semaphore_mem>> -> memref<!tpu.dma_semaphore, #tpu.memory_space<semaphore_mem>>
    tpu.enqueue_dma source(%441 : memref<1x128xf32, #tpu.memory_space<any>>) target(%443 : memref<1x128xf32, #tpu.memory_space<vmem>>) target_semaphore(%445 : memref<!tpu.dma_semaphore, #tpu.memory_space<semaphore_mem>>)
    %c5_i32_341 = arith.constant 5 : i32
    %c5_i32_342 = arith.constant 5 : i32
    %c0_i32_343 = arith.constant 0 : i32
    %446 = tpu.memref_slice %arg2[%410, %c0_i32_343] : memref<100x128xf32, #tpu.memory_space<any>> -> memref<1x128xf32, #tpu.memory_space<any>>
    %c1_i32_344 = arith.constant 1 : i32
    %c0_i32_345 = arith.constant 0 : i32
    %447 = tpu.memref_slice %arg8[%c5_i32_341, %c1_i32_344, %c0_i32_345] : memref<8x8x128xf32, #tpu.memory_space<vmem>> -> memref<1x1x128xf32, #tpu.memory_space<vmem>>
    %448 = tpu.memref_squeeze %447 : memref<1x1x128xf32, #tpu.memory_space<vmem>> -> memref<1x128xf32, #tpu.memory_space<vmem>>
    %449 = tpu.memref_slice %arg9[%c5_i32_342] : memref<8x!tpu.dma_semaphore, #tpu.memory_space<semaphore_mem>> -> memref<1x!tpu.dma_semaphore, #tpu.memory_space<semaphore_mem>>
    %450 = tpu.memref_squeeze %449 : memref<1x!tpu.dma_semaphore, #tpu.memory_space<semaphore_mem>> -> memref<!tpu.dma_semaphore, #tpu.memory_space<semaphore_mem>>
    tpu.enqueue_dma source(%446 : memref<1x128xf32, #tpu.memory_space<any>>) target(%448 : memref<1x128xf32, #tpu.memory_space<vmem>>) target_semaphore(%450 : memref<!tpu.dma_semaphore, #tpu.memory_space<semaphore_mem>>)
    %c5_i32_346 = arith.constant 5 : i32
    %c5_i32_347 = arith.constant 5 : i32
    %c0_i32_348 = arith.constant 0 : i32
    %451 = tpu.memref_slice %arg2[%415, %c0_i32_348] : memref<100x128xf32, #tpu.memory_space<any>> -> memref<1x128xf32, #tpu.memory_space<any>>
    %c2_i32_349 = arith.constant 2 : i32
    %c0_i32_350 = arith.constant 0 : i32
    %452 = tpu.memref_slice %arg8[%c5_i32_346, %c2_i32_349, %c0_i32_350] : memref<8x8x128xf32, #tpu.memory_space<vmem>> -> memref<1x1x128xf32, #tpu.memory_space<vmem>>
    %453 = tpu.memref_squeeze %452 : memref<1x1x128xf32, #tpu.memory_space<vmem>> -> memref<1x128xf32, #tpu.memory_space<vmem>>
    %454 = tpu.memref_slice %arg9[%c5_i32_347] : memref<8x!tpu.dma_semaphore, #tpu.memory_space<semaphore_mem>> -> memref<1x!tpu.dma_semaphore, #tpu.memory_space<semaphore_mem>>
    %455 = tpu.memref_squeeze %454 : memref<1x!tpu.dma_semaphore, #tpu.memory_space<semaphore_mem>> -> memref<!tpu.dma_semaphore, #tpu.memory_space<semaphore_mem>>
    tpu.enqueue_dma source(%451 : memref<1x128xf32, #tpu.memory_space<any>>) target(%453 : memref<1x128xf32, #tpu.memory_space<vmem>>) target_semaphore(%455 : memref<!tpu.dma_semaphore, #tpu.memory_space<semaphore_mem>>)
    %c5_i32_351 = arith.constant 5 : i32
    %c5_i32_352 = arith.constant 5 : i32
    %c0_i32_353 = arith.constant 0 : i32
    %456 = tpu.memref_slice %arg2[%420, %c0_i32_353] : memref<100x128xf32, #tpu.memory_space<any>> -> memref<1x128xf32, #tpu.memory_space<any>>
    %c3_i32_354 = arith.constant 3 : i32
    %c0_i32_355 = arith.constant 0 : i32
    %457 = tpu.memref_slice %arg8[%c5_i32_351, %c3_i32_354, %c0_i32_355] : memref<8x8x128xf32, #tpu.memory_space<vmem>> -> memref<1x1x128xf32, #tpu.memory_space<vmem>>
    %458 = tpu.memref_squeeze %457 : memref<1x1x128xf32, #tpu.memory_space<vmem>> -> memref<1x128xf32, #tpu.memory_space<vmem>>
    %459 = tpu.memref_slice %arg9[%c5_i32_352] : memref<8x!tpu.dma_semaphore, #tpu.memory_space<semaphore_mem>> -> memref<1x!tpu.dma_semaphore, #tpu.memory_space<semaphore_mem>>
    %460 = tpu.memref_squeeze %459 : memref<1x!tpu.dma_semaphore, #tpu.memory_space<semaphore_mem>> -> memref<!tpu.dma_semaphore, #tpu.memory_space<semaphore_mem>>
    tpu.enqueue_dma source(%456 : memref<1x128xf32, #tpu.memory_space<any>>) target(%458 : memref<1x128xf32, #tpu.memory_space<vmem>>) target_semaphore(%460 : memref<!tpu.dma_semaphore, #tpu.memory_space<semaphore_mem>>)
    %c5_i32_356 = arith.constant 5 : i32
    %c5_i32_357 = arith.constant 5 : i32
    %c0_i32_358 = arith.constant 0 : i32
    %461 = tpu.memref_slice %arg2[%425, %c0_i32_358] : memref<100x128xf32, #tpu.memory_space<any>> -> memref<1x128xf32, #tpu.memory_space<any>>
    %c4_i32_359 = arith.constant 4 : i32
    %c0_i32_360 = arith.constant 0 : i32
    %462 = tpu.memref_slice %arg8[%c5_i32_356, %c4_i32_359, %c0_i32_360] : memref<8x8x128xf32, #tpu.memory_space<vmem>> -> memref<1x1x128xf32, #tpu.memory_space<vmem>>
    %463 = tpu.memref_squeeze %462 : memref<1x1x128xf32, #tpu.memory_space<vmem>> -> memref<1x128xf32, #tpu.memory_space<vmem>>
    %464 = tpu.memref_slice %arg9[%c5_i32_357] : memref<8x!tpu.dma_semaphore, #tpu.memory_space<semaphore_mem>> -> memref<1x!tpu.dma_semaphore, #tpu.memory_space<semaphore_mem>>
    %465 = tpu.memref_squeeze %464 : memref<1x!tpu.dma_semaphore, #tpu.memory_space<semaphore_mem>> -> memref<!tpu.dma_semaphore, #tpu.memory_space<semaphore_mem>>
    tpu.enqueue_dma source(%461 : memref<1x128xf32, #tpu.memory_space<any>>) target(%463 : memref<1x128xf32, #tpu.memory_space<vmem>>) target_semaphore(%465 : memref<!tpu.dma_semaphore, #tpu.memory_space<semaphore_mem>>)
    %c5_i32_361 = arith.constant 5 : i32
    %c5_i32_362 = arith.constant 5 : i32
    %c0_i32_363 = arith.constant 0 : i32
    %466 = tpu.memref_slice %arg2[%430, %c0_i32_363] : memref<100x128xf32, #tpu.memory_space<any>> -> memref<1x128xf32, #tpu.memory_space<any>>
    %c5_i32_364 = arith.constant 5 : i32
    %c0_i32_365 = arith.constant 0 : i32
    %467 = tpu.memref_slice %arg8[%c5_i32_361, %c5_i32_364, %c0_i32_365] : memref<8x8x128xf32, #tpu.memory_space<vmem>> -> memref<1x1x128xf32, #tpu.memory_space<vmem>>
    %468 = tpu.memref_squeeze %467 : memref<1x1x128xf32, #tpu.memory_space<vmem>> -> memref<1x128xf32, #tpu.memory_space<vmem>>
    %469 = tpu.memref_slice %arg9[%c5_i32_362] : memref<8x!tpu.dma_semaphore, #tpu.memory_space<semaphore_mem>> -> memref<1x!tpu.dma_semaphore, #tpu.memory_space<semaphore_mem>>
    %470 = tpu.memref_squeeze %469 : memref<1x!tpu.dma_semaphore, #tpu.memory_space<semaphore_mem>> -> memref<!tpu.dma_semaphore, #tpu.memory_space<semaphore_mem>>
    tpu.enqueue_dma source(%466 : memref<1x128xf32, #tpu.memory_space<any>>) target(%468 : memref<1x128xf32, #tpu.memory_space<vmem>>) target_semaphore(%470 : memref<!tpu.dma_semaphore, #tpu.memory_space<semaphore_mem>>)
    %c5_i32_366 = arith.constant 5 : i32
    %c5_i32_367 = arith.constant 5 : i32
    %c0_i32_368 = arith.constant 0 : i32
    %471 = tpu.memref_slice %arg2[%435, %c0_i32_368] : memref<100x128xf32, #tpu.memory_space<any>> -> memref<1x128xf32, #tpu.memory_space<any>>
    %c6_i32_369 = arith.constant 6 : i32
    %c0_i32_370 = arith.constant 0 : i32
    %472 = tpu.memref_slice %arg8[%c5_i32_366, %c6_i32_369, %c0_i32_370] : memref<8x8x128xf32, #tpu.memory_space<vmem>> -> memref<1x1x128xf32, #tpu.memory_space<vmem>>
    %473 = tpu.memref_squeeze %472 : memref<1x1x128xf32, #tpu.memory_space<vmem>> -> memref<1x128xf32, #tpu.memory_space<vmem>>
    %474 = tpu.memref_slice %arg9[%c5_i32_367] : memref<8x!tpu.dma_semaphore, #tpu.memory_space<semaphore_mem>> -> memref<1x!tpu.dma_semaphore, #tpu.memory_space<semaphore_mem>>
    %475 = tpu.memref_squeeze %474 : memref<1x!tpu.dma_semaphore, #tpu.memory_space<semaphore_mem>> -> memref<!tpu.dma_semaphore, #tpu.memory_space<semaphore_mem>>
    tpu.enqueue_dma source(%471 : memref<1x128xf32, #tpu.memory_space<any>>) target(%473 : memref<1x128xf32, #tpu.memory_space<vmem>>) target_semaphore(%475 : memref<!tpu.dma_semaphore, #tpu.memory_space<semaphore_mem>>)
    %c5_i32_371 = arith.constant 5 : i32
    %c5_i32_372 = arith.constant 5 : i32
    %c0_i32_373 = arith.constant 0 : i32
    %476 = tpu.memref_slice %arg2[%440, %c0_i32_373] : memref<100x128xf32, #tpu.memory_space<any>> -> memref<1x128xf32, #tpu.memory_space<any>>
    %c7_i32_374 = arith.constant 7 : i32
    %c0_i32_375 = arith.constant 0 : i32
    %477 = tpu.memref_slice %arg8[%c5_i32_371, %c7_i32_374, %c0_i32_375] : memref<8x8x128xf32, #tpu.memory_space<vmem>> -> memref<1x1x128xf32, #tpu.memory_space<vmem>>
    %478 = tpu.memref_squeeze %477 : memref<1x1x128xf32, #tpu.memory_space<vmem>> -> memref<1x128xf32, #tpu.memory_space<vmem>>
    %479 = tpu.memref_slice %arg9[%c5_i32_372] : memref<8x!tpu.dma_semaphore, #tpu.memory_space<semaphore_mem>> -> memref<1x!tpu.dma_semaphore, #tpu.memory_space<semaphore_mem>>
    %480 = tpu.memref_squeeze %479 : memref<1x!tpu.dma_semaphore, #tpu.memory_space<semaphore_mem>> -> memref<!tpu.dma_semaphore, #tpu.memory_space<semaphore_mem>>
    tpu.enqueue_dma source(%476 : memref<1x128xf32, #tpu.memory_space<any>>) target(%478 : memref<1x128xf32, #tpu.memory_space<vmem>>) target_semaphore(%480 : memref<!tpu.dma_semaphore, #tpu.memory_space<semaphore_mem>>)
    %c0_i32_376 = arith.constant 0 : i32
    %481 = arith.addi %0, %c0_i32_376 : i32
    %c8_i32_377 = arith.constant 8 : i32
    %482 = arith.muli %481, %c8_i32_377 : i32
    %c6_i32_378 = arith.constant 6 : i32
    %483 = arith.addi %482, %c6_i32_378 : i32
    %484 = arith.index_cast %483 : i32 to index
    %485 = memref.load %arg1[%484] : memref<64xi32, #tpu.memory_space<smem>>
    %c1_i32_379 = arith.constant 1 : i32
    %486 = arith.addi %0, %c1_i32_379 : i32
    %c8_i32_380 = arith.constant 8 : i32
    %487 = arith.muli %486, %c8_i32_380 : i32
    %c6_i32_381 = arith.constant 6 : i32
    %488 = arith.addi %487, %c6_i32_381 : i32
    %489 = arith.index_cast %488 : i32 to index
    %490 = memref.load %arg1[%489] : memref<64xi32, #tpu.memory_space<smem>>
    %c2_i32_382 = arith.constant 2 : i32
    %491 = arith.addi %0, %c2_i32_382 : i32
    %c8_i32_383 = arith.constant 8 : i32
    %492 = arith.muli %491, %c8_i32_383 : i32
    %c6_i32_384 = arith.constant 6 : i32
    %493 = arith.addi %492, %c6_i32_384 : i32
    %494 = arith.index_cast %493 : i32 to index
    %495 = memref.load %arg1[%494] : memref<64xi32, #tpu.memory_space<smem>>
    %c3_i32_385 = arith.constant 3 : i32
    %496 = arith.addi %0, %c3_i32_385 : i32
    %c8_i32_386 = arith.constant 8 : i32
    %497 = arith.muli %496, %c8_i32_386 : i32
    %c6_i32_387 = arith.constant 6 : i32
    %498 = arith.addi %497, %c6_i32_387 : i32
    %499 = arith.index_cast %498 : i32 to index
    %500 = memref.load %arg1[%499] : memref<64xi32, #tpu.memory_space<smem>>
    %c4_i32_388 = arith.constant 4 : i32
    %501 = arith.addi %0, %c4_i32_388 : i32
    %c8_i32_389 = arith.constant 8 : i32
    %502 = arith.muli %501, %c8_i32_389 : i32
    %c6_i32_390 = arith.constant 6 : i32
    %503 = arith.addi %502, %c6_i32_390 : i32
    %504 = arith.index_cast %503 : i32 to index
    %505 = memref.load %arg1[%504] : memref<64xi32, #tpu.memory_space<smem>>
    %c5_i32_391 = arith.constant 5 : i32
    %506 = arith.addi %0, %c5_i32_391 : i32
    %c8_i32_392 = arith.constant 8 : i32
    %507 = arith.muli %506, %c8_i32_392 : i32
    %c6_i32_393 = arith.constant 6 : i32
    %508 = arith.addi %507, %c6_i32_393 : i32
    %509 = arith.index_cast %508 : i32 to index
    %510 = memref.load %arg1[%509] : memref<64xi32, #tpu.memory_space<smem>>
    %c6_i32_394 = arith.constant 6 : i32
    %511 = arith.addi %0, %c6_i32_394 : i32
    %c8_i32_395 = arith.constant 8 : i32
    %512 = arith.muli %511, %c8_i32_395 : i32
    %c6_i32_396 = arith.constant 6 : i32
    %513 = arith.addi %512, %c6_i32_396 : i32
    %514 = arith.index_cast %513 : i32 to index
    %515 = memref.load %arg1[%514] : memref<64xi32, #tpu.memory_space<smem>>
    %c7_i32_397 = arith.constant 7 : i32
    %516 = arith.addi %0, %c7_i32_397 : i32
    %c8_i32_398 = arith.constant 8 : i32
    %517 = arith.muli %516, %c8_i32_398 : i32
    %c6_i32_399 = arith.constant 6 : i32
    %518 = arith.addi %517, %c6_i32_399 : i32
    %519 = arith.index_cast %518 : i32 to index
    %520 = memref.load %arg1[%519] : memref<64xi32, #tpu.memory_space<smem>>
    %c6_i32_400 = arith.constant 6 : i32
    %c6_i32_401 = arith.constant 6 : i32
    %c0_i32_402 = arith.constant 0 : i32
    %521 = tpu.memref_slice %arg2[%485, %c0_i32_402] : memref<100x128xf32, #tpu.memory_space<any>> -> memref<1x128xf32, #tpu.memory_space<any>>
    %c0_i32_403 = arith.constant 0 : i32
    %c0_i32_404 = arith.constant 0 : i32
    %522 = tpu.memref_slice %arg8[%c6_i32_400, %c0_i32_403, %c0_i32_404] : memref<8x8x128xf32, #tpu.memory_space<vmem>> -> memref<1x1x128xf32, #tpu.memory_space<vmem>>
    %523 = tpu.memref_squeeze %522 : memref<1x1x128xf32, #tpu.memory_space<vmem>> -> memref<1x128xf32, #tpu.memory_space<vmem>>
    %524 = tpu.memref_slice %arg9[%c6_i32_401] : memref<8x!tpu.dma_semaphore, #tpu.memory_space<semaphore_mem>> -> memref<1x!tpu.dma_semaphore, #tpu.memory_space<semaphore_mem>>
    %525 = tpu.memref_squeeze %524 : memref<1x!tpu.dma_semaphore, #tpu.memory_space<semaphore_mem>> -> memref<!tpu.dma_semaphore, #tpu.memory_space<semaphore_mem>>
    tpu.enqueue_dma source(%521 : memref<1x128xf32, #tpu.memory_space<any>>) target(%523 : memref<1x128xf32, #tpu.memory_space<vmem>>) target_semaphore(%525 : memref<!tpu.dma_semaphore, #tpu.memory_space<semaphore_mem>>)
    %c6_i32_405 = arith.constant 6 : i32
    %c6_i32_406 = arith.constant 6 : i32
    %c0_i32_407 = arith.constant 0 : i32
    %526 = tpu.memref_slice %arg2[%490, %c0_i32_407] : memref<100x128xf32, #tpu.memory_space<any>> -> memref<1x128xf32, #tpu.memory_space<any>>
    %c1_i32_408 = arith.constant 1 : i32
    %c0_i32_409 = arith.constant 0 : i32
    %527 = tpu.memref_slice %arg8[%c6_i32_405, %c1_i32_408, %c0_i32_409] : memref<8x8x128xf32, #tpu.memory_space<vmem>> -> memref<1x1x128xf32, #tpu.memory_space<vmem>>
    %528 = tpu.memref_squeeze %527 : memref<1x1x128xf32, #tpu.memory_space<vmem>> -> memref<1x128xf32, #tpu.memory_space<vmem>>
    %529 = tpu.memref_slice %arg9[%c6_i32_406] : memref<8x!tpu.dma_semaphore, #tpu.memory_space<semaphore_mem>> -> memref<1x!tpu.dma_semaphore, #tpu.memory_space<semaphore_mem>>
    %530 = tpu.memref_squeeze %529 : memref<1x!tpu.dma_semaphore, #tpu.memory_space<semaphore_mem>> -> memref<!tpu.dma_semaphore, #tpu.memory_space<semaphore_mem>>
    tpu.enqueue_dma source(%526 : memref<1x128xf32, #tpu.memory_space<any>>) target(%528 : memref<1x128xf32, #tpu.memory_space<vmem>>) target_semaphore(%530 : memref<!tpu.dma_semaphore, #tpu.memory_space<semaphore_mem>>)
    %c6_i32_410 = arith.constant 6 : i32
    %c6_i32_411 = arith.constant 6 : i32
    %c0_i32_412 = arith.constant 0 : i32
    %531 = tpu.memref_slice %arg2[%495, %c0_i32_412] : memref<100x128xf32, #tpu.memory_space<any>> -> memref<1x128xf32, #tpu.memory_space<any>>
    %c2_i32_413 = arith.constant 2 : i32
    %c0_i32_414 = arith.constant 0 : i32
    %532 = tpu.memref_slice %arg8[%c6_i32_410, %c2_i32_413, %c0_i32_414] : memref<8x8x128xf32, #tpu.memory_space<vmem>> -> memref<1x1x128xf32, #tpu.memory_space<vmem>>
    %533 = tpu.memref_squeeze %532 : memref<1x1x128xf32, #tpu.memory_space<vmem>> -> memref<1x128xf32, #tpu.memory_space<vmem>>
    %534 = tpu.memref_slice %arg9[%c6_i32_411] : memref<8x!tpu.dma_semaphore, #tpu.memory_space<semaphore_mem>> -> memref<1x!tpu.dma_semaphore, #tpu.memory_space<semaphore_mem>>
    %535 = tpu.memref_squeeze %534 : memref<1x!tpu.dma_semaphore, #tpu.memory_space<semaphore_mem>> -> memref<!tpu.dma_semaphore, #tpu.memory_space<semaphore_mem>>
    tpu.enqueue_dma source(%531 : memref<1x128xf32, #tpu.memory_space<any>>) target(%533 : memref<1x128xf32, #tpu.memory_space<vmem>>) target_semaphore(%535 : memref<!tpu.dma_semaphore, #tpu.memory_space<semaphore_mem>>)
    %c6_i32_415 = arith.constant 6 : i32
    %c6_i32_416 = arith.constant 6 : i32
    %c0_i32_417 = arith.constant 0 : i32
    %536 = tpu.memref_slice %arg2[%500, %c0_i32_417] : memref<100x128xf32, #tpu.memory_space<any>> -> memref<1x128xf32, #tpu.memory_space<any>>
    %c3_i32_418 = arith.constant 3 : i32
    %c0_i32_419 = arith.constant 0 : i32
    %537 = tpu.memref_slice %arg8[%c6_i32_415, %c3_i32_418, %c0_i32_419] : memref<8x8x128xf32, #tpu.memory_space<vmem>> -> memref<1x1x128xf32, #tpu.memory_space<vmem>>
    %538 = tpu.memref_squeeze %537 : memref<1x1x128xf32, #tpu.memory_space<vmem>> -> memref<1x128xf32, #tpu.memory_space<vmem>>
    %539 = tpu.memref_slice %arg9[%c6_i32_416] : memref<8x!tpu.dma_semaphore, #tpu.memory_space<semaphore_mem>> -> memref<1x!tpu.dma_semaphore, #tpu.memory_space<semaphore_mem>>
    %540 = tpu.memref_squeeze %539 : memref<1x!tpu.dma_semaphore, #tpu.memory_space<semaphore_mem>> -> memref<!tpu.dma_semaphore, #tpu.memory_space<semaphore_mem>>
    tpu.enqueue_dma source(%536 : memref<1x128xf32, #tpu.memory_space<any>>) target(%538 : memref<1x128xf32, #tpu.memory_space<vmem>>) target_semaphore(%540 : memref<!tpu.dma_semaphore, #tpu.memory_space<semaphore_mem>>)
    %c6_i32_420 = arith.constant 6 : i32
    %c6_i32_421 = arith.constant 6 : i32
    %c0_i32_422 = arith.constant 0 : i32
    %541 = tpu.memref_slice %arg2[%505, %c0_i32_422] : memref<100x128xf32, #tpu.memory_space<any>> -> memref<1x128xf32, #tpu.memory_space<any>>
    %c4_i32_423 = arith.constant 4 : i32
    %c0_i32_424 = arith.constant 0 : i32
    %542 = tpu.memref_slice %arg8[%c6_i32_420, %c4_i32_423, %c0_i32_424] : memref<8x8x128xf32, #tpu.memory_space<vmem>> -> memref<1x1x128xf32, #tpu.memory_space<vmem>>
    %543 = tpu.memref_squeeze %542 : memref<1x1x128xf32, #tpu.memory_space<vmem>> -> memref<1x128xf32, #tpu.memory_space<vmem>>
    %544 = tpu.memref_slice %arg9[%c6_i32_421] : memref<8x!tpu.dma_semaphore, #tpu.memory_space<semaphore_mem>> -> memref<1x!tpu.dma_semaphore, #tpu.memory_space<semaphore_mem>>
    %545 = tpu.memref_squeeze %544 : memref<1x!tpu.dma_semaphore, #tpu.memory_space<semaphore_mem>> -> memref<!tpu.dma_semaphore, #tpu.memory_space<semaphore_mem>>
    tpu.enqueue_dma source(%541 : memref<1x128xf32, #tpu.memory_space<any>>) target(%543 : memref<1x128xf32, #tpu.memory_space<vmem>>) target_semaphore(%545 : memref<!tpu.dma_semaphore, #tpu.memory_space<semaphore_mem>>)
    %c6_i32_425 = arith.constant 6 : i32
    %c6_i32_426 = arith.constant 6 : i32
    %c0_i32_427 = arith.constant 0 : i32
    %546 = tpu.memref_slice %arg2[%510, %c0_i32_427] : memref<100x128xf32, #tpu.memory_space<any>> -> memref<1x128xf32, #tpu.memory_space<any>>
    %c5_i32_428 = arith.constant 5 : i32
    %c0_i32_429 = arith.constant 0 : i32
    %547 = tpu.memref_slice %arg8[%c6_i32_425, %c5_i32_428, %c0_i32_429] : memref<8x8x128xf32, #tpu.memory_space<vmem>> -> memref<1x1x128xf32, #tpu.memory_space<vmem>>
    %548 = tpu.memref_squeeze %547 : memref<1x1x128xf32, #tpu.memory_space<vmem>> -> memref<1x128xf32, #tpu.memory_space<vmem>>
    %549 = tpu.memref_slice %arg9[%c6_i32_426] : memref<8x!tpu.dma_semaphore, #tpu.memory_space<semaphore_mem>> -> memref<1x!tpu.dma_semaphore, #tpu.memory_space<semaphore_mem>>
    %550 = tpu.memref_squeeze %549 : memref<1x!tpu.dma_semaphore, #tpu.memory_space<semaphore_mem>> -> memref<!tpu.dma_semaphore, #tpu.memory_space<semaphore_mem>>
    tpu.enqueue_dma source(%546 : memref<1x128xf32, #tpu.memory_space<any>>) target(%548 : memref<1x128xf32, #tpu.memory_space<vmem>>) target_semaphore(%550 : memref<!tpu.dma_semaphore, #tpu.memory_space<semaphore_mem>>)
    %c6_i32_430 = arith.constant 6 : i32
    %c6_i32_431 = arith.constant 6 : i32
    %c0_i32_432 = arith.constant 0 : i32
    %551 = tpu.memref_slice %arg2[%515, %c0_i32_432] : memref<100x128xf32, #tpu.memory_space<any>> -> memref<1x128xf32, #tpu.memory_space<any>>
    %c6_i32_433 = arith.constant 6 : i32
    %c0_i32_434 = arith.constant 0 : i32
    %552 = tpu.memref_slice %arg8[%c6_i32_430, %c6_i32_433, %c0_i32_434] : memref<8x8x128xf32, #tpu.memory_space<vmem>> -> memref<1x1x128xf32, #tpu.memory_space<vmem>>
    %553 = tpu.memref_squeeze %552 : memref<1x1x128xf32, #tpu.memory_space<vmem>> -> memref<1x128xf32, #tpu.memory_space<vmem>>
    %554 = tpu.memref_slice %arg9[%c6_i32_431] : memref<8x!tpu.dma_semaphore, #tpu.memory_space<semaphore_mem>> -> memref<1x!tpu.dma_semaphore, #tpu.memory_space<semaphore_mem>>
    %555 = tpu.memref_squeeze %554 : memref<1x!tpu.dma_semaphore, #tpu.memory_space<semaphore_mem>> -> memref<!tpu.dma_semaphore, #tpu.memory_space<semaphore_mem>>
    tpu.enqueue_dma source(%551 : memref<1x128xf32, #tpu.memory_space<any>>) target(%553 : memref<1x128xf32, #tpu.memory_space<vmem>>) target_semaphore(%555 : memref<!tpu.dma_semaphore, #tpu.memory_space<semaphore_mem>>)
    %c6_i32_435 = arith.constant 6 : i32
    %c6_i32_436 = arith.constant 6 : i32
    %c0_i32_437 = arith.constant 0 : i32
    %556 = tpu.memref_slice %arg2[%520, %c0_i32_437] : memref<100x128xf32, #tpu.memory_space<any>> -> memref<1x128xf32, #tpu.memory_space<any>>
    %c7_i32_438 = arith.constant 7 : i32
    %c0_i32_439 = arith.constant 0 : i32
    %557 = tpu.memref_slice %arg8[%c6_i32_435, %c7_i32_438, %c0_i32_439] : memref<8x8x128xf32, #tpu.memory_space<vmem>> -> memref<1x1x128xf32, #tpu.memory_space<vmem>>
    %558 = tpu.memref_squeeze %557 : memref<1x1x128xf32, #tpu.memory_space<vmem>> -> memref<1x128xf32, #tpu.memory_space<vmem>>
    %559 = tpu.memref_slice %arg9[%c6_i32_436] : memref<8x!tpu.dma_semaphore, #tpu.memory_space<semaphore_mem>> -> memref<1x!tpu.dma_semaphore, #tpu.memory_space<semaphore_mem>>
    %560 = tpu.memref_squeeze %559 : memref<1x!tpu.dma_semaphore, #tpu.memory_space<semaphore_mem>> -> memref<!tpu.dma_semaphore, #tpu.memory_space<semaphore_mem>>
    tpu.enqueue_dma source(%556 : memref<1x128xf32, #tpu.memory_space<any>>) target(%558 : memref<1x128xf32, #tpu.memory_space<vmem>>) target_semaphore(%560 : memref<!tpu.dma_semaphore, #tpu.memory_space<semaphore_mem>>)
    %c0_i32_440 = arith.constant 0 : i32
    %561 = arith.addi %0, %c0_i32_440 : i32
    %c8_i32_441 = arith.constant 8 : i32
    %562 = arith.muli %561, %c8_i32_441 : i32
    %c7_i32_442 = arith.constant 7 : i32
    %563 = arith.addi %562, %c7_i32_442 : i32
    %564 = arith.index_cast %563 : i32 to index
    %565 = memref.load %arg1[%564] : memref<64xi32, #tpu.memory_space<smem>>
    %c1_i32_443 = arith.constant 1 : i32
    %566 = arith.addi %0, %c1_i32_443 : i32
    %c8_i32_444 = arith.constant 8 : i32
    %567 = arith.muli %566, %c8_i32_444 : i32
    %c7_i32_445 = arith.constant 7 : i32
    %568 = arith.addi %567, %c7_i32_445 : i32
    %569 = arith.index_cast %568 : i32 to index
    %570 = memref.load %arg1[%569] : memref<64xi32, #tpu.memory_space<smem>>
    %c2_i32_446 = arith.constant 2 : i32
    %571 = arith.addi %0, %c2_i32_446 : i32
    %c8_i32_447 = arith.constant 8 : i32
    %572 = arith.muli %571, %c8_i32_447 : i32
    %c7_i32_448 = arith.constant 7 : i32
    %573 = arith.addi %572, %c7_i32_448 : i32
    %574 = arith.index_cast %573 : i32 to index
    %575 = memref.load %arg1[%574] : memref<64xi32, #tpu.memory_space<smem>>
    %c3_i32_449 = arith.constant 3 : i32
    %576 = arith.addi %0, %c3_i32_449 : i32
    %c8_i32_450 = arith.constant 8 : i32
    %577 = arith.muli %576, %c8_i32_450 : i32
    %c7_i32_451 = arith.constant 7 : i32
    %578 = arith.addi %577, %c7_i32_451 : i32
    %579 = arith.index_cast %578 : i32 to index
    %580 = memref.load %arg1[%579] : memref<64xi32, #tpu.memory_space<smem>>
    %c4_i32_452 = arith.constant 4 : i32
    %581 = arith.addi %0, %c4_i32_452 : i32
    %c8_i32_453 = arith.constant 8 : i32
    %582 = arith.muli %581, %c8_i32_453 : i32
    %c7_i32_454 = arith.constant 7 : i32
    %583 = arith.addi %582, %c7_i32_454 : i32
    %584 = arith.index_cast %583 : i32 to index
    %585 = memref.load %arg1[%584] : memref<64xi32, #tpu.memory_space<smem>>
    %c5_i32_455 = arith.constant 5 : i32
    %586 = arith.addi %0, %c5_i32_455 : i32
    %c8_i32_456 = arith.constant 8 : i32
    %587 = arith.muli %586, %c8_i32_456 : i32
    %c7_i32_457 = arith.constant 7 : i32
    %588 = arith.addi %587, %c7_i32_457 : i32
    %589 = arith.index_cast %588 : i32 to index
    %590 = memref.load %arg1[%589] : memref<64xi32, #tpu.memory_space<smem>>
    %c6_i32_458 = arith.constant 6 : i32
    %591 = arith.addi %0, %c6_i32_458 : i32
    %c8_i32_459 = arith.constant 8 : i32
    %592 = arith.muli %591, %c8_i32_459 : i32
    %c7_i32_460 = arith.constant 7 : i32
    %593 = arith.addi %592, %c7_i32_460 : i32
    %594 = arith.index_cast %593 : i32 to index
    %595 = memref.load %arg1[%594] : memref<64xi32, #tpu.memory_space<smem>>
    %c7_i32_461 = arith.constant 7 : i32
    %596 = arith.addi %0, %c7_i32_461 : i32
    %c8_i32_462 = arith.constant 8 : i32
    %597 = arith.muli %596, %c8_i32_462 : i32
    %c7_i32_463 = arith.constant 7 : i32
    %598 = arith.addi %597, %c7_i32_463 : i32
    %599 = arith.index_cast %598 : i32 to index
    %600 = memref.load %arg1[%599] : memref<64xi32, #tpu.memory_space<smem>>
    %c7_i32_464 = arith.constant 7 : i32
    %c7_i32_465 = arith.constant 7 : i32
    %c0_i32_466 = arith.constant 0 : i32
    %601 = tpu.memref_slice %arg2[%565, %c0_i32_466] : memref<100x128xf32, #tpu.memory_space<any>> -> memref<1x128xf32, #tpu.memory_space<any>>
    %c0_i32_467 = arith.constant 0 : i32
    %c0_i32_468 = arith.constant 0 : i32
    %602 = tpu.memref_slice %arg8[%c7_i32_464, %c0_i32_467, %c0_i32_468] : memref<8x8x128xf32, #tpu.memory_space<vmem>> -> memref<1x1x128xf32, #tpu.memory_space<vmem>>
    %603 = tpu.memref_squeeze %602 : memref<1x1x128xf32, #tpu.memory_space<vmem>> -> memref<1x128xf32, #tpu.memory_space<vmem>>
    %604 = tpu.memref_slice %arg9[%c7_i32_465] : memref<8x!tpu.dma_semaphore, #tpu.memory_space<semaphore_mem>> -> memref<1x!tpu.dma_semaphore, #tpu.memory_space<semaphore_mem>>
    %605 = tpu.memref_squeeze %604 : memref<1x!tpu.dma_semaphore, #tpu.memory_space<semaphore_mem>> -> memref<!tpu.dma_semaphore, #tpu.memory_space<semaphore_mem>>
    tpu.enqueue_dma source(%601 : memref<1x128xf32, #tpu.memory_space<any>>) target(%603 : memref<1x128xf32, #tpu.memory_space<vmem>>) target_semaphore(%605 : memref<!tpu.dma_semaphore, #tpu.memory_space<semaphore_mem>>)
    %c7_i32_469 = arith.constant 7 : i32
    %c7_i32_470 = arith.constant 7 : i32
    %c0_i32_471 = arith.constant 0 : i32
    %606 = tpu.memref_slice %arg2[%570, %c0_i32_471] : memref<100x128xf32, #tpu.memory_space<any>> -> memref<1x128xf32, #tpu.memory_space<any>>
    %c1_i32_472 = arith.constant 1 : i32
    %c0_i32_473 = arith.constant 0 : i32
    %607 = tpu.memref_slice %arg8[%c7_i32_469, %c1_i32_472, %c0_i32_473] : memref<8x8x128xf32, #tpu.memory_space<vmem>> -> memref<1x1x128xf32, #tpu.memory_space<vmem>>
    %608 = tpu.memref_squeeze %607 : memref<1x1x128xf32, #tpu.memory_space<vmem>> -> memref<1x128xf32, #tpu.memory_space<vmem>>
    %609 = tpu.memref_slice %arg9[%c7_i32_470] : memref<8x!tpu.dma_semaphore, #tpu.memory_space<semaphore_mem>> -> memref<1x!tpu.dma_semaphore, #tpu.memory_space<semaphore_mem>>
    %610 = tpu.memref_squeeze %609 : memref<1x!tpu.dma_semaphore, #tpu.memory_space<semaphore_mem>> -> memref<!tpu.dma_semaphore, #tpu.memory_space<semaphore_mem>>
    tpu.enqueue_dma source(%606 : memref<1x128xf32, #tpu.memory_space<any>>) target(%608 : memref<1x128xf32, #tpu.memory_space<vmem>>) target_semaphore(%610 : memref<!tpu.dma_semaphore, #tpu.memory_space<semaphore_mem>>)
    %c7_i32_474 = arith.constant 7 : i32
    %c7_i32_475 = arith.constant 7 : i32
    %c0_i32_476 = arith.constant 0 : i32
    %611 = tpu.memref_slice %arg2[%575, %c0_i32_476] : memref<100x128xf32, #tpu.memory_space<any>> -> memref<1x128xf32, #tpu.memory_space<any>>
    %c2_i32_477 = arith.constant 2 : i32
    %c0_i32_478 = arith.constant 0 : i32
    %612 = tpu.memref_slice %arg8[%c7_i32_474, %c2_i32_477, %c0_i32_478] : memref<8x8x128xf32, #tpu.memory_space<vmem>> -> memref<1x1x128xf32, #tpu.memory_space<vmem>>
    %613 = tpu.memref_squeeze %612 : memref<1x1x128xf32, #tpu.memory_space<vmem>> -> memref<1x128xf32, #tpu.memory_space<vmem>>
    %614 = tpu.memref_slice %arg9[%c7_i32_475] : memref<8x!tpu.dma_semaphore, #tpu.memory_space<semaphore_mem>> -> memref<1x!tpu.dma_semaphore, #tpu.memory_space<semaphore_mem>>
    %615 = tpu.memref_squeeze %614 : memref<1x!tpu.dma_semaphore, #tpu.memory_space<semaphore_mem>> -> memref<!tpu.dma_semaphore, #tpu.memory_space<semaphore_mem>>
    tpu.enqueue_dma source(%611 : memref<1x128xf32, #tpu.memory_space<any>>) target(%613 : memref<1x128xf32, #tpu.memory_space<vmem>>) target_semaphore(%615 : memref<!tpu.dma_semaphore, #tpu.memory_space<semaphore_mem>>)
    %c7_i32_479 = arith.constant 7 : i32
    %c7_i32_480 = arith.constant 7 : i32
    %c0_i32_481 = arith.constant 0 : i32
    %616 = tpu.memref_slice %arg2[%580, %c0_i32_481] : memref<100x128xf32, #tpu.memory_space<any>> -> memref<1x128xf32, #tpu.memory_space<any>>
    %c3_i32_482 = arith.constant 3 : i32
    %c0_i32_483 = arith.constant 0 : i32
    %617 = tpu.memref_slice %arg8[%c7_i32_479, %c3_i32_482, %c0_i32_483] : memref<8x8x128xf32, #tpu.memory_space<vmem>> -> memref<1x1x128xf32, #tpu.memory_space<vmem>>
    %618 = tpu.memref_squeeze %617 : memref<1x1x128xf32, #tpu.memory_space<vmem>> -> memref<1x128xf32, #tpu.memory_space<vmem>>
    %619 = tpu.memref_slice %arg9[%c7_i32_480] : memref<8x!tpu.dma_semaphore, #tpu.memory_space<semaphore_mem>> -> memref<1x!tpu.dma_semaphore, #tpu.memory_space<semaphore_mem>>
    %620 = tpu.memref_squeeze %619 : memref<1x!tpu.dma_semaphore, #tpu.memory_space<semaphore_mem>> -> memref<!tpu.dma_semaphore, #tpu.memory_space<semaphore_mem>>
    tpu.enqueue_dma source(%616 : memref<1x128xf32, #tpu.memory_space<any>>) target(%618 : memref<1x128xf32, #tpu.memory_space<vmem>>) target_semaphore(%620 : memref<!tpu.dma_semaphore, #tpu.memory_space<semaphore_mem>>)
    %c7_i32_484 = arith.constant 7 : i32
    %c7_i32_485 = arith.constant 7 : i32
    %c0_i32_486 = arith.constant 0 : i32
    %621 = tpu.memref_slice %arg2[%585, %c0_i32_486] : memref<100x128xf32, #tpu.memory_space<any>> -> memref<1x128xf32, #tpu.memory_space<any>>
    %c4_i32_487 = arith.constant 4 : i32
    %c0_i32_488 = arith.constant 0 : i32
    %622 = tpu.memref_slice %arg8[%c7_i32_484, %c4_i32_487, %c0_i32_488] : memref<8x8x128xf32, #tpu.memory_space<vmem>> -> memref<1x1x128xf32, #tpu.memory_space<vmem>>
    %623 = tpu.memref_squeeze %622 : memref<1x1x128xf32, #tpu.memory_space<vmem>> -> memref<1x128xf32, #tpu.memory_space<vmem>>
    %624 = tpu.memref_slice %arg9[%c7_i32_485] : memref<8x!tpu.dma_semaphore, #tpu.memory_space<semaphore_mem>> -> memref<1x!tpu.dma_semaphore, #tpu.memory_space<semaphore_mem>>
    %625 = tpu.memref_squeeze %624 : memref<1x!tpu.dma_semaphore, #tpu.memory_space<semaphore_mem>> -> memref<!tpu.dma_semaphore, #tpu.memory_space<semaphore_mem>>
    tpu.enqueue_dma source(%621 : memref<1x128xf32, #tpu.memory_space<any>>) target(%623 : memref<1x128xf32, #tpu.memory_space<vmem>>) target_semaphore(%625 : memref<!tpu.dma_semaphore, #tpu.memory_space<semaphore_mem>>)
    %c7_i32_489 = arith.constant 7 : i32
    %c7_i32_490 = arith.constant 7 : i32
    %c0_i32_491 = arith.constant 0 : i32
    %626 = tpu.memref_slice %arg2[%590, %c0_i32_491] : memref<100x128xf32, #tpu.memory_space<any>> -> memref<1x128xf32, #tpu.memory_space<any>>
    %c5_i32_492 = arith.constant 5 : i32
    %c0_i32_493 = arith.constant 0 : i32
    %627 = tpu.memref_slice %arg8[%c7_i32_489, %c5_i32_492, %c0_i32_493] : memref<8x8x128xf32, #tpu.memory_space<vmem>> -> memref<1x1x128xf32, #tpu.memory_space<vmem>>
    %628 = tpu.memref_squeeze %627 : memref<1x1x128xf32, #tpu.memory_space<vmem>> -> memref<1x128xf32, #tpu.memory_space<vmem>>
    %629 = tpu.memref_slice %arg9[%c7_i32_490] : memref<8x!tpu.dma_semaphore, #tpu.memory_space<semaphore_mem>> -> memref<1x!tpu.dma_semaphore, #tpu.memory_space<semaphore_mem>>
    %630 = tpu.memref_squeeze %629 : memref<1x!tpu.dma_semaphore, #tpu.memory_space<semaphore_mem>> -> memref<!tpu.dma_semaphore, #tpu.memory_space<semaphore_mem>>
    tpu.enqueue_dma source(%626 : memref<1x128xf32, #tpu.memory_space<any>>) target(%628 : memref<1x128xf32, #tpu.memory_space<vmem>>) target_semaphore(%630 : memref<!tpu.dma_semaphore, #tpu.memory_space<semaphore_mem>>)
    %c7_i32_494 = arith.constant 7 : i32
    %c7_i32_495 = arith.constant 7 : i32
    %c0_i32_496 = arith.constant 0 : i32
    %631 = tpu.memref_slice %arg2[%595, %c0_i32_496] : memref<100x128xf32, #tpu.memory_space<any>> -> memref<1x128xf32, #tpu.memory_space<any>>
    %c6_i32_497 = arith.constant 6 : i32
    %c0_i32_498 = arith.constant 0 : i32
    %632 = tpu.memref_slice %arg8[%c7_i32_494, %c6_i32_497, %c0_i32_498] : memref<8x8x128xf32, #tpu.memory_space<vmem>> -> memref<1x1x128xf32, #tpu.memory_space<vmem>>
    %633 = tpu.memref_squeeze %632 : memref<1x1x128xf32, #tpu.memory_space<vmem>> -> memref<1x128xf32, #tpu.memory_space<vmem>>
    %634 = tpu.memref_slice %arg9[%c7_i32_495] : memref<8x!tpu.dma_semaphore, #tpu.memory_space<semaphore_mem>> -> memref<1x!tpu.dma_semaphore, #tpu.memory_space<semaphore_mem>>
    %635 = tpu.memref_squeeze %634 : memref<1x!tpu.dma_semaphore, #tpu.memory_space<semaphore_mem>> -> memref<!tpu.dma_semaphore, #tpu.memory_space<semaphore_mem>>
    tpu.enqueue_dma source(%631 : memref<1x128xf32, #tpu.memory_space<any>>) target(%633 : memref<1x128xf32, #tpu.memory_space<vmem>>) target_semaphore(%635 : memref<!tpu.dma_semaphore, #tpu.memory_space<semaphore_mem>>)
    %c7_i32_499 = arith.constant 7 : i32
    %c7_i32_500 = arith.constant 7 : i32
    %c0_i32_501 = arith.constant 0 : i32
    %636 = tpu.memref_slice %arg2[%600, %c0_i32_501] : memref<100x128xf32, #tpu.memory_space<any>> -> memref<1x128xf32, #tpu.memory_space<any>>
    %c7_i32_502 = arith.constant 7 : i32
    %c0_i32_503 = arith.constant 0 : i32
    %637 = tpu.memref_slice %arg8[%c7_i32_499, %c7_i32_502, %c0_i32_503] : memref<8x8x128xf32, #tpu.memory_space<vmem>> -> memref<1x1x128xf32, #tpu.memory_space<vmem>>
    %638 = tpu.memref_squeeze %637 : memref<1x1x128xf32, #tpu.memory_space<vmem>> -> memref<1x128xf32, #tpu.memory_space<vmem>>
    %639 = tpu.memref_slice %arg9[%c7_i32_500] : memref<8x!tpu.dma_semaphore, #tpu.memory_space<semaphore_mem>> -> memref<1x!tpu.dma_semaphore, #tpu.memory_space<semaphore_mem>>
    %640 = tpu.memref_squeeze %639 : memref<1x!tpu.dma_semaphore, #tpu.memory_space<semaphore_mem>> -> memref<!tpu.dma_semaphore, #tpu.memory_space<semaphore_mem>>
    tpu.enqueue_dma source(%636 : memref<1x128xf32, #tpu.memory_space<any>>) target(%638 : memref<1x128xf32, #tpu.memory_space<vmem>>) target_semaphore(%640 : memref<!tpu.dma_semaphore, #tpu.memory_space<semaphore_mem>>)
    %cst = arith.constant 0.000000e+00 : f32
    %641 = vector.broadcast %cst : f32 to vector<8x128xf32>
    %c0_i32_504 = arith.constant 0 : i32
    %c0_i32_505 = arith.constant 0 : i32
    %c0_i32_506 = arith.constant 0 : i32
    %c0_i32_507 = arith.constant 0 : i32
    %642 = tpu.memref_slice %arg2[%c0_i32_506, %c0_i32_507] : memref<100x128xf32, #tpu.memory_space<any>> -> memref<1x128xf32, #tpu.memory_space<any>>
    %c0_i32_508 = arith.constant 0 : i32
    %c0_i32_509 = arith.constant 0 : i32
    %643 = tpu.memref_slice %arg8[%c0_i32_504, %c0_i32_508, %c0_i32_509] : memref<8x8x128xf32, #tpu.memory_space<vmem>> -> memref<1x1x128xf32, #tpu.memory_space<vmem>>
    %644 = tpu.memref_squeeze %643 : memref<1x1x128xf32, #tpu.memory_space<vmem>> -> memref<1x128xf32, #tpu.memory_space<vmem>>
    %645 = tpu.memref_slice %arg9[%c0_i32_505] : memref<8x!tpu.dma_semaphore, #tpu.memory_space<semaphore_mem>> -> memref<1x!tpu.dma_semaphore, #tpu.memory_space<semaphore_mem>>
    %646 = tpu.memref_squeeze %645 : memref<1x!tpu.dma_semaphore, #tpu.memory_space<semaphore_mem>> -> memref<!tpu.dma_semaphore, #tpu.memory_space<semaphore_mem>>
    tpu.wait_dma2 semaphore(%646 : memref<!tpu.dma_semaphore, #tpu.memory_space<semaphore_mem>>) src(%642 : memref<1x128xf32, #tpu.memory_space<any>>) dst(%644 : memref<1x128xf32, #tpu.memory_space<vmem>>)
    %c0_i32_510 = arith.constant 0 : i32
    %c0_i32_511 = arith.constant 0 : i32
    %c0_i32_512 = arith.constant 0 : i32
    %c0_i32_513 = arith.constant 0 : i32
    %647 = tpu.memref_slice %arg2[%c0_i32_512, %c0_i32_513] : memref<100x128xf32, #tpu.memory_space<any>> -> memref<1x128xf32, #tpu.memory_space<any>>
    %c1_i32_514 = arith.constant 1 : i32
    %c0_i32_515 = arith.constant 0 : i32
    %648 = tpu.memref_slice %arg8[%c0_i32_510, %c1_i32_514, %c0_i32_515] : memref<8x8x128xf32, #tpu.memory_space<vmem>> -> memref<1x1x128xf32, #tpu.memory_space<vmem>>
    %649 = tpu.memref_squeeze %648 : memref<1x1x128xf32, #tpu.memory_space<vmem>> -> memref<1x128xf32, #tpu.memory_space<vmem>>
    %650 = tpu.memref_slice %arg9[%c0_i32_511] : memref<8x!tpu.dma_semaphore, #tpu.memory_space<semaphore_mem>> -> memref<1x!tpu.dma_semaphore, #tpu.memory_space<semaphore_mem>>
    %651 = tpu.memref_squeeze %650 : memref<1x!tpu.dma_semaphore, #tpu.memory_space<semaphore_mem>> -> memref<!tpu.dma_semaphore, #tpu.memory_space<semaphore_mem>>
    tpu.wait_dma2 semaphore(%651 : memref<!tpu.dma_semaphore, #tpu.memory_space<semaphore_mem>>) src(%647 : memref<1x128xf32, #tpu.memory_space<any>>) dst(%649 : memref<1x128xf32, #tpu.memory_space<vmem>>)
    %c0_i32_516 = arith.constant 0 : i32
    %c0_i32_517 = arith.constant 0 : i32
    %c0_i32_518 = arith.constant 0 : i32
    %c0_i32_519 = arith.constant 0 : i32
    %652 = tpu.memref_slice %arg2[%c0_i32_518, %c0_i32_519] : memref<100x128xf32, #tpu.memory_space<any>> -> memref<1x128xf32, #tpu.memory_space<any>>
    %c2_i32_520 = arith.constant 2 : i32
    %c0_i32_521 = arith.constant 0 : i32
    %653 = tpu.memref_slice %arg8[%c0_i32_516, %c2_i32_520, %c0_i32_521] : memref<8x8x128xf32, #tpu.memory_space<vmem>> -> memref<1x1x128xf32, #tpu.memory_space<vmem>>
    %654 = tpu.memref_squeeze %653 : memref<1x1x128xf32, #tpu.memory_space<vmem>> -> memref<1x128xf32, #tpu.memory_space<vmem>>
    %655 = tpu.memref_slice %arg9[%c0_i32_517] : memref<8x!tpu.dma_semaphore, #tpu.memory_space<semaphore_mem>> -> memref<1x!tpu.dma_semaphore, #tpu.memory_space<semaphore_mem>>
    %656 = tpu.memref_squeeze %655 : memref<1x!tpu.dma_semaphore, #tpu.memory_space<semaphore_mem>> -> memref<!tpu.dma_semaphore, #tpu.memory_space<semaphore_mem>>
    tpu.wait_dma2 semaphore(%656 : memref<!tpu.dma_semaphore, #tpu.memory_space<semaphore_mem>>) src(%652 : memref<1x128xf32, #tpu.memory_space<any>>) dst(%654 : memref<1x128xf32, #tpu.memory_space<vmem>>)
    %c0_i32_522 = arith.constant 0 : i32
    %c0_i32_523 = arith.constant 0 : i32
    %c0_i32_524 = arith.constant 0 : i32
    %c0_i32_525 = arith.constant 0 : i32
    %657 = tpu.memref_slice %arg2[%c0_i32_524, %c0_i32_525] : memref<100x128xf32, #tpu.memory_space<any>> -> memref<1x128xf32, #tpu.memory_space<any>>
    %c3_i32_526 = arith.constant 3 : i32
    %c0_i32_527 = arith.constant 0 : i32
    %658 = tpu.memref_slice %arg8[%c0_i32_522, %c3_i32_526, %c0_i32_527] : memref<8x8x128xf32, #tpu.memory_space<vmem>> -> memref<1x1x128xf32, #tpu.memory_space<vmem>>
    %659 = tpu.memref_squeeze %658 : memref<1x1x128xf32, #tpu.memory_space<vmem>> -> memref<1x128xf32, #tpu.memory_space<vmem>>
    %660 = tpu.memref_slice %arg9[%c0_i32_523] : memref<8x!tpu.dma_semaphore, #tpu.memory_space<semaphore_mem>> -> memref<1x!tpu.dma_semaphore, #tpu.memory_space<semaphore_mem>>
    %661 = tpu.memref_squeeze %660 : memref<1x!tpu.dma_semaphore, #tpu.memory_space<semaphore_mem>> -> memref<!tpu.dma_semaphore, #tpu.memory_space<semaphore_mem>>
    tpu.wait_dma2 semaphore(%661 : memref<!tpu.dma_semaphore, #tpu.memory_space<semaphore_mem>>) src(%657 : memref<1x128xf32, #tpu.memory_space<any>>) dst(%659 : memref<1x128xf32, #tpu.memory_space<vmem>>)
    %c0_i32_528 = arith.constant 0 : i32
    %c0_i32_529 = arith.constant 0 : i32
    %c0_i32_530 = arith.constant 0 : i32
    %c0_i32_531 = arith.constant 0 : i32
    %662 = tpu.memref_slice %arg2[%c0_i32_530, %c0_i32_531] : memref<100x128xf32, #tpu.memory_space<any>> -> memref<1x128xf32, #tpu.memory_space<any>>
    %c4_i32_532 = arith.constant 4 : i32
    %c0_i32_533 = arith.constant 0 : i32
    %663 = tpu.memref_slice %arg8[%c0_i32_528, %c4_i32_532, %c0_i32_533] : memref<8x8x128xf32, #tpu.memory_space<vmem>> -> memref<1x1x128xf32, #tpu.memory_space<vmem>>
    %664 = tpu.memref_squeeze %663 : memref<1x1x128xf32, #tpu.memory_space<vmem>> -> memref<1x128xf32, #tpu.memory_space<vmem>>
    %665 = tpu.memref_slice %arg9[%c0_i32_529] : memref<8x!tpu.dma_semaphore, #tpu.memory_space<semaphore_mem>> -> memref<1x!tpu.dma_semaphore, #tpu.memory_space<semaphore_mem>>
    %666 = tpu.memref_squeeze %665 : memref<1x!tpu.dma_semaphore, #tpu.memory_space<semaphore_mem>> -> memref<!tpu.dma_semaphore, #tpu.memory_space<semaphore_mem>>
    tpu.wait_dma2 semaphore(%666 : memref<!tpu.dma_semaphore, #tpu.memory_space<semaphore_mem>>) src(%662 : memref<1x128xf32, #tpu.memory_space<any>>) dst(%664 : memref<1x128xf32, #tpu.memory_space<vmem>>)
    %c0_i32_534 = arith.constant 0 : i32
    %c0_i32_535 = arith.constant 0 : i32
    %c0_i32_536 = arith.constant 0 : i32
    %c0_i32_537 = arith.constant 0 : i32
    %667 = tpu.memref_slice %arg2[%c0_i32_536, %c0_i32_537] : memref<100x128xf32, #tpu.memory_space<any>> -> memref<1x128xf32, #tpu.memory_space<any>>
    %c5_i32_538 = arith.constant 5 : i32
    %c0_i32_539 = arith.constant 0 : i32
    %668 = tpu.memref_slice %arg8[%c0_i32_534, %c5_i32_538, %c0_i32_539] : memref<8x8x128xf32, #tpu.memory_space<vmem>> -> memref<1x1x128xf32, #tpu.memory_space<vmem>>
    %669 = tpu.memref_squeeze %668 : memref<1x1x128xf32, #tpu.memory_space<vmem>> -> memref<1x128xf32, #tpu.memory_space<vmem>>
    %670 = tpu.memref_slice %arg9[%c0_i32_535] : memref<8x!tpu.dma_semaphore, #tpu.memory_space<semaphore_mem>> -> memref<1x!tpu.dma_semaphore, #tpu.memory_space<semaphore_mem>>
    %671 = tpu.memref_squeeze %670 : memref<1x!tpu.dma_semaphore, #tpu.memory_space<semaphore_mem>> -> memref<!tpu.dma_semaphore, #tpu.memory_space<semaphore_mem>>
    tpu.wait_dma2 semaphore(%671 : memref<!tpu.dma_semaphore, #tpu.memory_space<semaphore_mem>>) src(%667 : memref<1x128xf32, #tpu.memory_space<any>>) dst(%669 : memref<1x128xf32, #tpu.memory_space<vmem>>)
    %c0_i32_540 = arith.constant 0 : i32
    %c0_i32_541 = arith.constant 0 : i32
    %c0_i32_542 = arith.constant 0 : i32
    %c0_i32_543 = arith.constant 0 : i32
    %672 = tpu.memref_slice %arg2[%c0_i32_542, %c0_i32_543] : memref<100x128xf32, #tpu.memory_space<any>> -> memref<1x128xf32, #tpu.memory_space<any>>
    %c6_i32_544 = arith.constant 6 : i32
    %c0_i32_545 = arith.constant 0 : i32
    %673 = tpu.memref_slice %arg8[%c0_i32_540, %c6_i32_544, %c0_i32_545] : memref<8x8x128xf32, #tpu.memory_space<vmem>> -> memref<1x1x128xf32, #tpu.memory_space<vmem>>
    %674 = tpu.memref_squeeze %673 : memref<1x1x128xf32, #tpu.memory_space<vmem>> -> memref<1x128xf32, #tpu.memory_space<vmem>>
    %675 = tpu.memref_slice %arg9[%c0_i32_541] : memref<8x!tpu.dma_semaphore, #tpu.memory_space<semaphore_mem>> -> memref<1x!tpu.dma_semaphore, #tpu.memory_space<semaphore_mem>>
    %676 = tpu.memref_squeeze %675 : memref<1x!tpu.dma_semaphore, #tpu.memory_space<semaphore_mem>> -> memref<!tpu.dma_semaphore, #tpu.memory_space<semaphore_mem>>
    tpu.wait_dma2 semaphore(%676 : memref<!tpu.dma_semaphore, #tpu.memory_space<semaphore_mem>>) src(%672 : memref<1x128xf32, #tpu.memory_space<any>>) dst(%674 : memref<1x128xf32, #tpu.memory_space<vmem>>)
    %c0_i32_546 = arith.constant 0 : i32
    %c0_i32_547 = arith.constant 0 : i32
    %c0_i32_548 = arith.constant 0 : i32
    %c0_i32_549 = arith.constant 0 : i32
    %677 = tpu.memref_slice %arg2[%c0_i32_548, %c0_i32_549] : memref<100x128xf32, #tpu.memory_space<any>> -> memref<1x128xf32, #tpu.memory_space<any>>
    %c7_i32_550 = arith.constant 7 : i32
    %c0_i32_551 = arith.constant 0 : i32
    %678 = tpu.memref_slice %arg8[%c0_i32_546, %c7_i32_550, %c0_i32_551] : memref<8x8x128xf32, #tpu.memory_space<vmem>> -> memref<1x1x128xf32, #tpu.memory_space<vmem>>
    %679 = tpu.memref_squeeze %678 : memref<1x1x128xf32, #tpu.memory_space<vmem>> -> memref<1x128xf32, #tpu.memory_space<vmem>>
    %680 = tpu.memref_slice %arg9[%c0_i32_547] : memref<8x!tpu.dma_semaphore, #tpu.memory_space<semaphore_mem>> -> memref<1x!tpu.dma_semaphore, #tpu.memory_space<semaphore_mem>>
    %681 = tpu.memref_squeeze %680 : memref<1x!tpu.dma_semaphore, #tpu.memory_space<semaphore_mem>> -> memref<!tpu.dma_semaphore, #tpu.memory_space<semaphore_mem>>
    tpu.wait_dma2 semaphore(%681 : memref<!tpu.dma_semaphore, #tpu.memory_space<semaphore_mem>>) src(%677 : memref<1x128xf32, #tpu.memory_space<any>>) dst(%679 : memref<1x128xf32, #tpu.memory_space<vmem>>)
    %c0 = arith.constant 0 : index
    %c0_552 = arith.constant 0 : index
    %c0_553 = arith.constant 0 : index
    %682 = vector.load %arg8[%c0, %c0_552, %c0_553] : memref<8x8x128xf32, #tpu.memory_space<vmem>>, vector<1x8x128xf32>
    %683 = vector.shape_cast %682 : vector<1x8x128xf32> to vector<8x128xf32>
    %684 = arith.addf %641, %683 : vector<8x128xf32>
    %c1_i32_554 = arith.constant 1 : i32
    %c1_i32_555 = arith.constant 1 : i32
    %c0_i32_556 = arith.constant 0 : i32
    %c0_i32_557 = arith.constant 0 : i32
    %685 = tpu.memref_slice %arg2[%c0_i32_556, %c0_i32_557] : memref<100x128xf32, #tpu.memory_space<any>> -> memref<1x128xf32, #tpu.memory_space<any>>
    %c0_i32_558 = arith.constant 0 : i32
    %c0_i32_559 = arith.constant 0 : i32
    %686 = tpu.memref_slice %arg8[%c1_i32_554, %c0_i32_558, %c0_i32_559] : memref<8x8x128xf32, #tpu.memory_space<vmem>> -> memref<1x1x128xf32, #tpu.memory_space<vmem>>
    %687 = tpu.memref_squeeze %686 : memref<1x1x128xf32, #tpu.memory_space<vmem>> -> memref<1x128xf32, #tpu.memory_space<vmem>>
    %688 = tpu.memref_slice %arg9[%c1_i32_555] : memref<8x!tpu.dma_semaphore, #tpu.memory_space<semaphore_mem>> -> memref<1x!tpu.dma_semaphore, #tpu.memory_space<semaphore_mem>>
    %689 = tpu.memref_squeeze %688 : memref<1x!tpu.dma_semaphore, #tpu.memory_space<semaphore_mem>> -> memref<!tpu.dma_semaphore, #tpu.memory_space<semaphore_mem>>
    tpu.wait_dma2 semaphore(%689 : memref<!tpu.dma_semaphore, #tpu.memory_space<semaphore_mem>>) src(%685 : memref<1x128xf32, #tpu.memory_space<any>>) dst(%687 : memref<1x128xf32, #tpu.memory_space<vmem>>)
    %c1_i32_560 = arith.constant 1 : i32
    %c1_i32_561 = arith.constant 1 : i32
    %c0_i32_562 = arith.constant 0 : i32
    %c0_i32_563 = arith.constant 0 : i32
    %690 = tpu.memref_slice %arg2[%c0_i32_562, %c0_i32_563] : memref<100x128xf32, #tpu.memory_space<any>> -> memref<1x128xf32, #tpu.memory_space<any>>
    %c1_i32_564 = arith.constant 1 : i32
    %c0_i32_565 = arith.constant 0 : i32
    %691 = tpu.memref_slice %arg8[%c1_i32_560, %c1_i32_564, %c0_i32_565] : memref<8x8x128xf32, #tpu.memory_space<vmem>> -> memref<1x1x128xf32, #tpu.memory_space<vmem>>
    %692 = tpu.memref_squeeze %691 : memref<1x1x128xf32, #tpu.memory_space<vmem>> -> memref<1x128xf32, #tpu.memory_space<vmem>>
    %693 = tpu.memref_slice %arg9[%c1_i32_561] : memref<8x!tpu.dma_semaphore, #tpu.memory_space<semaphore_mem>> -> memref<1x!tpu.dma_semaphore, #tpu.memory_space<semaphore_mem>>
    %694 = tpu.memref_squeeze %693 : memref<1x!tpu.dma_semaphore, #tpu.memory_space<semaphore_mem>> -> memref<!tpu.dma_semaphore, #tpu.memory_space<semaphore_mem>>
    tpu.wait_dma2 semaphore(%694 : memref<!tpu.dma_semaphore, #tpu.memory_space<semaphore_mem>>) src(%690 : memref<1x128xf32, #tpu.memory_space<any>>) dst(%692 : memref<1x128xf32, #tpu.memory_space<vmem>>)
    %c1_i32_566 = arith.constant 1 : i32
    %c1_i32_567 = arith.constant 1 : i32
    %c0_i32_568 = arith.constant 0 : i32
    %c0_i32_569 = arith.constant 0 : i32
    %695 = tpu.memref_slice %arg2[%c0_i32_568, %c0_i32_569] : memref<100x128xf32, #tpu.memory_space<any>> -> memref<1x128xf32, #tpu.memory_space<any>>
    %c2_i32_570 = arith.constant 2 : i32
    %c0_i32_571 = arith.constant 0 : i32
    %696 = tpu.memref_slice %arg8[%c1_i32_566, %c2_i32_570, %c0_i32_571] : memref<8x8x128xf32, #tpu.memory_space<vmem>> -> memref<1x1x128xf32, #tpu.memory_space<vmem>>
    %697 = tpu.memref_squeeze %696 : memref<1x1x128xf32, #tpu.memory_space<vmem>> -> memref<1x128xf32, #tpu.memory_space<vmem>>
    %698 = tpu.memref_slice %arg9[%c1_i32_567] : memref<8x!tpu.dma_semaphore, #tpu.memory_space<semaphore_mem>> -> memref<1x!tpu.dma_semaphore, #tpu.memory_space<semaphore_mem>>
    %699 = tpu.memref_squeeze %698 : memref<1x!tpu.dma_semaphore, #tpu.memory_space<semaphore_mem>> -> memref<!tpu.dma_semaphore, #tpu.memory_space<semaphore_mem>>
    tpu.wait_dma2 semaphore(%699 : memref<!tpu.dma_semaphore, #tpu.memory_space<semaphore_mem>>) src(%695 : memref<1x128xf32, #tpu.memory_space<any>>) dst(%697 : memref<1x128xf32, #tpu.memory_space<vmem>>)
    %c1_i32_572 = arith.constant 1 : i32
    %c1_i32_573 = arith.constant 1 : i32
    %c0_i32_574 = arith.constant 0 : i32
    %c0_i32_575 = arith.constant 0 : i32
    %700 = tpu.memref_slice %arg2[%c0_i32_574, %c0_i32_575] : memref<100x128xf32, #tpu.memory_space<any>> -> memref<1x128xf32, #tpu.memory_space<any>>
    %c3_i32_576 = arith.constant 3 : i32
    %c0_i32_577 = arith.constant 0 : i32
    %701 = tpu.memref_slice %arg8[%c1_i32_572, %c3_i32_576, %c0_i32_577] : memref<8x8x128xf32, #tpu.memory_space<vmem>> -> memref<1x1x128xf32, #tpu.memory_space<vmem>>
    %702 = tpu.memref_squeeze %701 : memref<1x1x128xf32, #tpu.memory_space<vmem>> -> memref<1x128xf32, #tpu.memory_space<vmem>>
    %703 = tpu.memref_slice %arg9[%c1_i32_573] : memref<8x!tpu.dma_semaphore, #tpu.memory_space<semaphore_mem>> -> memref<1x!tpu.dma_semaphore, #tpu.memory_space<semaphore_mem>>
    %704 = tpu.memref_squeeze %703 : memref<1x!tpu.dma_semaphore, #tpu.memory_space<semaphore_mem>> -> memref<!tpu.dma_semaphore, #tpu.memory_space<semaphore_mem>>
    tpu.wait_dma2 semaphore(%704 : memref<!tpu.dma_semaphore, #tpu.memory_space<semaphore_mem>>) src(%700 : memref<1x128xf32, #tpu.memory_space<any>>) dst(%702 : memref<1x128xf32, #tpu.memory_space<vmem>>)
    %c1_i32_578 = arith.constant 1 : i32
    %c1_i32_579 = arith.constant 1 : i32
    %c0_i32_580 = arith.constant 0 : i32
    %c0_i32_581 = arith.constant 0 : i32
    %705 = tpu.memref_slice %arg2[%c0_i32_580, %c0_i32_581] : memref<100x128xf32, #tpu.memory_space<any>> -> memref<1x128xf32, #tpu.memory_space<any>>
    %c4_i32_582 = arith.constant 4 : i32
    %c0_i32_583 = arith.constant 0 : i32
    %706 = tpu.memref_slice %arg8[%c1_i32_578, %c4_i32_582, %c0_i32_583] : memref<8x8x128xf32, #tpu.memory_space<vmem>> -> memref<1x1x128xf32, #tpu.memory_space<vmem>>
    %707 = tpu.memref_squeeze %706 : memref<1x1x128xf32, #tpu.memory_space<vmem>> -> memref<1x128xf32, #tpu.memory_space<vmem>>
    %708 = tpu.memref_slice %arg9[%c1_i32_579] : memref<8x!tpu.dma_semaphore, #tpu.memory_space<semaphore_mem>> -> memref<1x!tpu.dma_semaphore, #tpu.memory_space<semaphore_mem>>
    %709 = tpu.memref_squeeze %708 : memref<1x!tpu.dma_semaphore, #tpu.memory_space<semaphore_mem>> -> memref<!tpu.dma_semaphore, #tpu.memory_space<semaphore_mem>>
    tpu.wait_dma2 semaphore(%709 : memref<!tpu.dma_semaphore, #tpu.memory_space<semaphore_mem>>) src(%705 : memref<1x128xf32, #tpu.memory_space<any>>) dst(%707 : memref<1x128xf32, #tpu.memory_space<vmem>>)
    %c1_i32_584 = arith.constant 1 : i32
    %c1_i32_585 = arith.constant 1 : i32
    %c0_i32_586 = arith.constant 0 : i32
    %c0_i32_587 = arith.constant 0 : i32
    %710 = tpu.memref_slice %arg2[%c0_i32_586, %c0_i32_587] : memref<100x128xf32, #tpu.memory_space<any>> -> memref<1x128xf32, #tpu.memory_space<any>>
    %c5_i32_588 = arith.constant 5 : i32
    %c0_i32_589 = arith.constant 0 : i32
    %711 = tpu.memref_slice %arg8[%c1_i32_584, %c5_i32_588, %c0_i32_589] : memref<8x8x128xf32, #tpu.memory_space<vmem>> -> memref<1x1x128xf32, #tpu.memory_space<vmem>>
    %712 = tpu.memref_squeeze %711 : memref<1x1x128xf32, #tpu.memory_space<vmem>> -> memref<1x128xf32, #tpu.memory_space<vmem>>
    %713 = tpu.memref_slice %arg9[%c1_i32_585] : memref<8x!tpu.dma_semaphore, #tpu.memory_space<semaphore_mem>> -> memref<1x!tpu.dma_semaphore, #tpu.memory_space<semaphore_mem>>
    %714 = tpu.memref_squeeze %713 : memref<1x!tpu.dma_semaphore, #tpu.memory_space<semaphore_mem>> -> memref<!tpu.dma_semaphore, #tpu.memory_space<semaphore_mem>>
    tpu.wait_dma2 semaphore(%714 : memref<!tpu.dma_semaphore, #tpu.memory_space<semaphore_mem>>) src(%710 : memref<1x128xf32, #tpu.memory_space<any>>) dst(%712 : memref<1x128xf32, #tpu.memory_space<vmem>>)
    %c1_i32_590 = arith.constant 1 : i32
    %c1_i32_591 = arith.constant 1 : i32
    %c0_i32_592 = arith.constant 0 : i32
    %c0_i32_593 = arith.constant 0 : i32
    %715 = tpu.memref_slice %arg2[%c0_i32_592, %c0_i32_593] : memref<100x128xf32, #tpu.memory_space<any>> -> memref<1x128xf32, #tpu.memory_space<any>>
    %c6_i32_594 = arith.constant 6 : i32
    %c0_i32_595 = arith.constant 0 : i32
    %716 = tpu.memref_slice %arg8[%c1_i32_590, %c6_i32_594, %c0_i32_595] : memref<8x8x128xf32, #tpu.memory_space<vmem>> -> memref<1x1x128xf32, #tpu.memory_space<vmem>>
    %717 = tpu.memref_squeeze %716 : memref<1x1x128xf32, #tpu.memory_space<vmem>> -> memref<1x128xf32, #tpu.memory_space<vmem>>
    %718 = tpu.memref_slice %arg9[%c1_i32_591] : memref<8x!tpu.dma_semaphore, #tpu.memory_space<semaphore_mem>> -> memref<1x!tpu.dma_semaphore, #tpu.memory_space<semaphore_mem>>
    %719 = tpu.memref_squeeze %718 : memref<1x!tpu.dma_semaphore, #tpu.memory_space<semaphore_mem>> -> memref<!tpu.dma_semaphore, #tpu.memory_space<semaphore_mem>>
    tpu.wait_dma2 semaphore(%719 : memref<!tpu.dma_semaphore, #tpu.memory_space<semaphore_mem>>) src(%715 : memref<1x128xf32, #tpu.memory_space<any>>) dst(%717 : memref<1x128xf32, #tpu.memory_space<vmem>>)
    %c1_i32_596 = arith.constant 1 : i32
    %c1_i32_597 = arith.constant 1 : i32
    %c0_i32_598 = arith.constant 0 : i32
    %c0_i32_599 = arith.constant 0 : i32
    %720 = tpu.memref_slice %arg2[%c0_i32_598, %c0_i32_599] : memref<100x128xf32, #tpu.memory_space<any>> -> memref<1x128xf32, #tpu.memory_space<any>>
    %c7_i32_600 = arith.constant 7 : i32
    %c0_i32_601 = arith.constant 0 : i32
    %721 = tpu.memref_slice %arg8[%c1_i32_596, %c7_i32_600, %c0_i32_601] : memref<8x8x128xf32, #tpu.memory_space<vmem>> -> memref<1x1x128xf32, #tpu.memory_space<vmem>>
    %722 = tpu.memref_squeeze %721 : memref<1x1x128xf32, #tpu.memory_space<vmem>> -> memref<1x128xf32, #tpu.memory_space<vmem>>
    %723 = tpu.memref_slice %arg9[%c1_i32_597] : memref<8x!tpu.dma_semaphore, #tpu.memory_space<semaphore_mem>> -> memref<1x!tpu.dma_semaphore, #tpu.memory_space<semaphore_mem>>
    %724 = tpu.memref_squeeze %723 : memref<1x!tpu.dma_semaphore, #tpu.memory_space<semaphore_mem>> -> memref<!tpu.dma_semaphore, #tpu.memory_space<semaphore_mem>>
    tpu.wait_dma2 semaphore(%724 : memref<!tpu.dma_semaphore, #tpu.memory_space<semaphore_mem>>) src(%720 : memref<1x128xf32, #tpu.memory_space<any>>) dst(%722 : memref<1x128xf32, #tpu.memory_space<vmem>>)
    %c1 = arith.constant 1 : index
    %c0_602 = arith.constant 0 : index
    %c0_603 = arith.constant 0 : index
    %725 = vector.load %arg8[%c1, %c0_602, %c0_603] : memref<8x8x128xf32, #tpu.memory_space<vmem>>, vector<1x8x128xf32>
    %726 = vector.shape_cast %725 : vector<1x8x128xf32> to vector<8x128xf32>
    %727 = arith.addf %684, %726 : vector<8x128xf32>
    %c2_i32_604 = arith.constant 2 : i32
    %c2_i32_605 = arith.constant 2 : i32
    %c0_i32_606 = arith.constant 0 : i32
    %c0_i32_607 = arith.constant 0 : i32
    %728 = tpu.memref_slice %arg2[%c0_i32_606, %c0_i32_607] : memref<100x128xf32, #tpu.memory_space<any>> -> memref<1x128xf32, #tpu.memory_space<any>>
    %c0_i32_608 = arith.constant 0 : i32
    %c0_i32_609 = arith.constant 0 : i32
    %729 = tpu.memref_slice %arg8[%c2_i32_604, %c0_i32_608, %c0_i32_609] : memref<8x8x128xf32, #tpu.memory_space<vmem>> -> memref<1x1x128xf32, #tpu.memory_space<vmem>>
    %730 = tpu.memref_squeeze %729 : memref<1x1x128xf32, #tpu.memory_space<vmem>> -> memref<1x128xf32, #tpu.memory_space<vmem>>
    %731 = tpu.memref_slice %arg9[%c2_i32_605] : memref<8x!tpu.dma_semaphore, #tpu.memory_space<semaphore_mem>> -> memref<1x!tpu.dma_semaphore, #tpu.memory_space<semaphore_mem>>
    %732 = tpu.memref_squeeze %731 : memref<1x!tpu.dma_semaphore, #tpu.memory_space<semaphore_mem>> -> memref<!tpu.dma_semaphore, #tpu.memory_space<semaphore_mem>>
    tpu.wait_dma2 semaphore(%732 : memref<!tpu.dma_semaphore, #tpu.memory_space<semaphore_mem>>) src(%728 : memref<1x128xf32, #tpu.memory_space<any>>) dst(%730 : memref<1x128xf32, #tpu.memory_space<vmem>>)
    %c2_i32_610 = arith.constant 2 : i32
    %c2_i32_611 = arith.constant 2 : i32
    %c0_i32_612 = arith.constant 0 : i32
    %c0_i32_613 = arith.constant 0 : i32
    %733 = tpu.memref_slice %arg2[%c0_i32_612, %c0_i32_613] : memref<100x128xf32, #tpu.memory_space<any>> -> memref<1x128xf32, #tpu.memory_space<any>>
    %c1_i32_614 = arith.constant 1 : i32
    %c0_i32_615 = arith.constant 0 : i32
    %734 = tpu.memref_slice %arg8[%c2_i32_610, %c1_i32_614, %c0_i32_615] : memref<8x8x128xf32, #tpu.memory_space<vmem>> -> memref<1x1x128xf32, #tpu.memory_space<vmem>>
    %735 = tpu.memref_squeeze %734 : memref<1x1x128xf32, #tpu.memory_space<vmem>> -> memref<1x128xf32, #tpu.memory_space<vmem>>
    %736 = tpu.memref_slice %arg9[%c2_i32_611] : memref<8x!tpu.dma_semaphore, #tpu.memory_space<semaphore_mem>> -> memref<1x!tpu.dma_semaphore, #tpu.memory_space<semaphore_mem>>
    %737 = tpu.memref_squeeze %736 : memref<1x!tpu.dma_semaphore, #tpu.memory_space<semaphore_mem>> -> memref<!tpu.dma_semaphore, #tpu.memory_space<semaphore_mem>>
    tpu.wait_dma2 semaphore(%737 : memref<!tpu.dma_semaphore, #tpu.memory_space<semaphore_mem>>) src(%733 : memref<1x128xf32, #tpu.memory_space<any>>) dst(%735 : memref<1x128xf32, #tpu.memory_space<vmem>>)
    %c2_i32_616 = arith.constant 2 : i32
    %c2_i32_617 = arith.constant 2 : i32
    %c0_i32_618 = arith.constant 0 : i32
    %c0_i32_619 = arith.constant 0 : i32
    %738 = tpu.memref_slice %arg2[%c0_i32_618, %c0_i32_619] : memref<100x128xf32, #tpu.memory_space<any>> -> memref<1x128xf32, #tpu.memory_space<any>>
    %c2_i32_620 = arith.constant 2 : i32
    %c0_i32_621 = arith.constant 0 : i32
    %739 = tpu.memref_slice %arg8[%c2_i32_616, %c2_i32_620, %c0_i32_621] : memref<8x8x128xf32, #tpu.memory_space<vmem>> -> memref<1x1x128xf32, #tpu.memory_space<vmem>>
    %740 = tpu.memref_squeeze %739 : memref<1x1x128xf32, #tpu.memory_space<vmem>> -> memref<1x128xf32, #tpu.memory_space<vmem>>
    %741 = tpu.memref_slice %arg9[%c2_i32_617] : memref<8x!tpu.dma_semaphore, #tpu.memory_space<semaphore_mem>> -> memref<1x!tpu.dma_semaphore, #tpu.memory_space<semaphore_mem>>
    %742 = tpu.memref_squeeze %741 : memref<1x!tpu.dma_semaphore, #tpu.memory_space<semaphore_mem>> -> memref<!tpu.dma_semaphore, #tpu.memory_space<semaphore_mem>>
    tpu.wait_dma2 semaphore(%742 : memref<!tpu.dma_semaphore, #tpu.memory_space<semaphore_mem>>) src(%738 : memref<1x128xf32, #tpu.memory_space<any>>) dst(%740 : memref<1x128xf32, #tpu.memory_space<vmem>>)
    %c2_i32_622 = arith.constant 2 : i32
    %c2_i32_623 = arith.constant 2 : i32
    %c0_i32_624 = arith.constant 0 : i32
    %c0_i32_625 = arith.constant 0 : i32
    %743 = tpu.memref_slice %arg2[%c0_i32_624, %c0_i32_625] : memref<100x128xf32, #tpu.memory_space<any>> -> memref<1x128xf32, #tpu.memory_space<any>>
    %c3_i32_626 = arith.constant 3 : i32
    %c0_i32_627 = arith.constant 0 : i32
    %744 = tpu.memref_slice %arg8[%c2_i32_622, %c3_i32_626, %c0_i32_627] : memref<8x8x128xf32, #tpu.memory_space<vmem>> -> memref<1x1x128xf32, #tpu.memory_space<vmem>>
    %745 = tpu.memref_squeeze %744 : memref<1x1x128xf32, #tpu.memory_space<vmem>> -> memref<1x128xf32, #tpu.memory_space<vmem>>
    %746 = tpu.memref_slice %arg9[%c2_i32_623] : memref<8x!tpu.dma_semaphore, #tpu.memory_space<semaphore_mem>> -> memref<1x!tpu.dma_semaphore, #tpu.memory_space<semaphore_mem>>
    %747 = tpu.memref_squeeze %746 : memref<1x!tpu.dma_semaphore, #tpu.memory_space<semaphore_mem>> -> memref<!tpu.dma_semaphore, #tpu.memory_space<semaphore_mem>>
    tpu.wait_dma2 semaphore(%747 : memref<!tpu.dma_semaphore, #tpu.memory_space<semaphore_mem>>) src(%743 : memref<1x128xf32, #tpu.memory_space<any>>) dst(%745 : memref<1x128xf32, #tpu.memory_space<vmem>>)
    %c2_i32_628 = arith.constant 2 : i32
    %c2_i32_629 = arith.constant 2 : i32
    %c0_i32_630 = arith.constant 0 : i32
    %c0_i32_631 = arith.constant 0 : i32
    %748 = tpu.memref_slice %arg2[%c0_i32_630, %c0_i32_631] : memref<100x128xf32, #tpu.memory_space<any>> -> memref<1x128xf32, #tpu.memory_space<any>>
    %c4_i32_632 = arith.constant 4 : i32
    %c0_i32_633 = arith.constant 0 : i32
    %749 = tpu.memref_slice %arg8[%c2_i32_628, %c4_i32_632, %c0_i32_633] : memref<8x8x128xf32, #tpu.memory_space<vmem>> -> memref<1x1x128xf32, #tpu.memory_space<vmem>>
    %750 = tpu.memref_squeeze %749 : memref<1x1x128xf32, #tpu.memory_space<vmem>> -> memref<1x128xf32, #tpu.memory_space<vmem>>
    %751 = tpu.memref_slice %arg9[%c2_i32_629] : memref<8x!tpu.dma_semaphore, #tpu.memory_space<semaphore_mem>> -> memref<1x!tpu.dma_semaphore, #tpu.memory_space<semaphore_mem>>
    %752 = tpu.memref_squeeze %751 : memref<1x!tpu.dma_semaphore, #tpu.memory_space<semaphore_mem>> -> memref<!tpu.dma_semaphore, #tpu.memory_space<semaphore_mem>>
    tpu.wait_dma2 semaphore(%752 : memref<!tpu.dma_semaphore, #tpu.memory_space<semaphore_mem>>) src(%748 : memref<1x128xf32, #tpu.memory_space<any>>) dst(%750 : memref<1x128xf32, #tpu.memory_space<vmem>>)
    %c2_i32_634 = arith.constant 2 : i32
    %c2_i32_635 = arith.constant 2 : i32
    %c0_i32_636 = arith.constant 0 : i32
    %c0_i32_637 = arith.constant 0 : i32
    %753 = tpu.memref_slice %arg2[%c0_i32_636, %c0_i32_637] : memref<100x128xf32, #tpu.memory_space<any>> -> memref<1x128xf32, #tpu.memory_space<any>>
    %c5_i32_638 = arith.constant 5 : i32
    %c0_i32_639 = arith.constant 0 : i32
    %754 = tpu.memref_slice %arg8[%c2_i32_634, %c5_i32_638, %c0_i32_639] : memref<8x8x128xf32, #tpu.memory_space<vmem>> -> memref<1x1x128xf32, #tpu.memory_space<vmem>>
    %755 = tpu.memref_squeeze %754 : memref<1x1x128xf32, #tpu.memory_space<vmem>> -> memref<1x128xf32, #tpu.memory_space<vmem>>
    %756 = tpu.memref_slice %arg9[%c2_i32_635] : memref<8x!tpu.dma_semaphore, #tpu.memory_space<semaphore_mem>> -> memref<1x!tpu.dma_semaphore, #tpu.memory_space<semaphore_mem>>
    %757 = tpu.memref_squeeze %756 : memref<1x!tpu.dma_semaphore, #tpu.memory_space<semaphore_mem>> -> memref<!tpu.dma_semaphore, #tpu.memory_space<semaphore_mem>>
    tpu.wait_dma2 semaphore(%757 : memref<!tpu.dma_semaphore, #tpu.memory_space<semaphore_mem>>) src(%753 : memref<1x128xf32, #tpu.memory_space<any>>) dst(%755 : memref<1x128xf32, #tpu.memory_space<vmem>>)
    %c2_i32_640 = arith.constant 2 : i32
    %c2_i32_641 = arith.constant 2 : i32
    %c0_i32_642 = arith.constant 0 : i32
    %c0_i32_643 = arith.constant 0 : i32
    %758 = tpu.memref_slice %arg2[%c0_i32_642, %c0_i32_643] : memref<100x128xf32, #tpu.memory_space<any>> -> memref<1x128xf32, #tpu.memory_space<any>>
    %c6_i32_644 = arith.constant 6 : i32
    %c0_i32_645 = arith.constant 0 : i32
    %759 = tpu.memref_slice %arg8[%c2_i32_640, %c6_i32_644, %c0_i32_645] : memref<8x8x128xf32, #tpu.memory_space<vmem>> -> memref<1x1x128xf32, #tpu.memory_space<vmem>>
    %760 = tpu.memref_squeeze %759 : memref<1x1x128xf32, #tpu.memory_space<vmem>> -> memref<1x128xf32, #tpu.memory_space<vmem>>
    %761 = tpu.memref_slice %arg9[%c2_i32_641] : memref<8x!tpu.dma_semaphore, #tpu.memory_space<semaphore_mem>> -> memref<1x!tpu.dma_semaphore, #tpu.memory_space<semaphore_mem>>
    %762 = tpu.memref_squeeze %761 : memref<1x!tpu.dma_semaphore, #tpu.memory_space<semaphore_mem>> -> memref<!tpu.dma_semaphore, #tpu.memory_space<semaphore_mem>>
    tpu.wait_dma2 semaphore(%762 : memref<!tpu.dma_semaphore, #tpu.memory_space<semaphore_mem>>) src(%758 : memref<1x128xf32, #tpu.memory_space<any>>) dst(%760 : memref<1x128xf32, #tpu.memory_space<vmem>>)
    %c2_i32_646 = arith.constant 2 : i32
    %c2_i32_647 = arith.constant 2 : i32
    %c0_i32_648 = arith.constant 0 : i32
    %c0_i32_649 = arith.constant 0 : i32
    %763 = tpu.memref_slice %arg2[%c0_i32_648, %c0_i32_649] : memref<100x128xf32, #tpu.memory_space<any>> -> memref<1x128xf32, #tpu.memory_space<any>>
    %c7_i32_650 = arith.constant 7 : i32
    %c0_i32_651 = arith.constant 0 : i32
    %764 = tpu.memref_slice %arg8[%c2_i32_646, %c7_i32_650, %c0_i32_651] : memref<8x8x128xf32, #tpu.memory_space<vmem>> -> memref<1x1x128xf32, #tpu.memory_space<vmem>>
    %765 = tpu.memref_squeeze %764 : memref<1x1x128xf32, #tpu.memory_space<vmem>> -> memref<1x128xf32, #tpu.memory_space<vmem>>
    %766 = tpu.memref_slice %arg9[%c2_i32_647] : memref<8x!tpu.dma_semaphore, #tpu.memory_space<semaphore_mem>> -> memref<1x!tpu.dma_semaphore, #tpu.memory_space<semaphore_mem>>
    %767 = tpu.memref_squeeze %766 : memref<1x!tpu.dma_semaphore, #tpu.memory_space<semaphore_mem>> -> memref<!tpu.dma_semaphore, #tpu.memory_space<semaphore_mem>>
    tpu.wait_dma2 semaphore(%767 : memref<!tpu.dma_semaphore, #tpu.memory_space<semaphore_mem>>) src(%763 : memref<1x128xf32, #tpu.memory_space<any>>) dst(%765 : memref<1x128xf32, #tpu.memory_space<vmem>>)
    %c2 = arith.constant 2 : index
    %c0_652 = arith.constant 0 : index
    %c0_653 = arith.constant 0 : index
    %768 = vector.load %arg8[%c2, %c0_652, %c0_653] : memref<8x8x128xf32, #tpu.memory_space<vmem>>, vector<1x8x128xf32>
    %769 = vector.shape_cast %768 : vector<1x8x128xf32> to vector<8x128xf32>
    %770 = arith.addf %727, %769 : vector<8x128xf32>
    %c3_i32_654 = arith.constant 3 : i32
    %c3_i32_655 = arith.constant 3 : i32
    %c0_i32_656 = arith.constant 0 : i32
    %c0_i32_657 = arith.constant 0 : i32
    %771 = tpu.memref_slice %arg2[%c0_i32_656, %c0_i32_657] : memref<100x128xf32, #tpu.memory_space<any>> -> memref<1x128xf32, #tpu.memory_space<any>>
    %c0_i32_658 = arith.constant 0 : i32
    %c0_i32_659 = arith.constant 0 : i32
    %772 = tpu.memref_slice %arg8[%c3_i32_654, %c0_i32_658, %c0_i32_659] : memref<8x8x128xf32, #tpu.memory_space<vmem>> -> memref<1x1x128xf32, #tpu.memory_space<vmem>>
    %773 = tpu.memref_squeeze %772 : memref<1x1x128xf32, #tpu.memory_space<vmem>> -> memref<1x128xf32, #tpu.memory_space<vmem>>
    %774 = tpu.memref_slice %arg9[%c3_i32_655] : memref<8x!tpu.dma_semaphore, #tpu.memory_space<semaphore_mem>> -> memref<1x!tpu.dma_semaphore, #tpu.memory_space<semaphore_mem>>
    %775 = tpu.memref_squeeze %774 : memref<1x!tpu.dma_semaphore, #tpu.memory_space<semaphore_mem>> -> memref<!tpu.dma_semaphore, #tpu.memory_space<semaphore_mem>>
    tpu.wait_dma2 semaphore(%775 : memref<!tpu.dma_semaphore, #tpu.memory_space<semaphore_mem>>) src(%771 : memref<1x128xf32, #tpu.memory_space<any>>) dst(%773 : memref<1x128xf32, #tpu.memory_space<vmem>>)
    %c3_i32_660 = arith.constant 3 : i32
    %c3_i32_661 = arith.constant 3 : i32
    %c0_i32_662 = arith.constant 0 : i32
    %c0_i32_663 = arith.constant 0 : i32
    %776 = tpu.memref_slice %arg2[%c0_i32_662, %c0_i32_663] : memref<100x128xf32, #tpu.memory_space<any>> -> memref<1x128xf32, #tpu.memory_space<any>>
    %c1_i32_664 = arith.constant 1 : i32
    %c0_i32_665 = arith.constant 0 : i32
    %777 = tpu.memref_slice %arg8[%c3_i32_660, %c1_i32_664, %c0_i32_665] : memref<8x8x128xf32, #tpu.memory_space<vmem>> -> memref<1x1x128xf32, #tpu.memory_space<vmem>>
    %778 = tpu.memref_squeeze %777 : memref<1x1x128xf32, #tpu.memory_space<vmem>> -> memref<1x128xf32, #tpu.memory_space<vmem>>
    %779 = tpu.memref_slice %arg9[%c3_i32_661] : memref<8x!tpu.dma_semaphore, #tpu.memory_space<semaphore_mem>> -> memref<1x!tpu.dma_semaphore, #tpu.memory_space<semaphore_mem>>
    %780 = tpu.memref_squeeze %779 : memref<1x!tpu.dma_semaphore, #tpu.memory_space<semaphore_mem>> -> memref<!tpu.dma_semaphore, #tpu.memory_space<semaphore_mem>>
    tpu.wait_dma2 semaphore(%780 : memref<!tpu.dma_semaphore, #tpu.memory_space<semaphore_mem>>) src(%776 : memref<1x128xf32, #tpu.memory_space<any>>) dst(%778 : memref<1x128xf32, #tpu.memory_space<vmem>>)
    %c3_i32_666 = arith.constant 3 : i32
    %c3_i32_667 = arith.constant 3 : i32
    %c0_i32_668 = arith.constant 0 : i32
    %c0_i32_669 = arith.constant 0 : i32
    %781 = tpu.memref_slice %arg2[%c0_i32_668, %c0_i32_669] : memref<100x128xf32, #tpu.memory_space<any>> -> memref<1x128xf32, #tpu.memory_space<any>>
    %c2_i32_670 = arith.constant 2 : i32
    %c0_i32_671 = arith.constant 0 : i32
    %782 = tpu.memref_slice %arg8[%c3_i32_666, %c2_i32_670, %c0_i32_671] : memref<8x8x128xf32, #tpu.memory_space<vmem>> -> memref<1x1x128xf32, #tpu.memory_space<vmem>>
    %783 = tpu.memref_squeeze %782 : memref<1x1x128xf32, #tpu.memory_space<vmem>> -> memref<1x128xf32, #tpu.memory_space<vmem>>
    %784 = tpu.memref_slice %arg9[%c3_i32_667] : memref<8x!tpu.dma_semaphore, #tpu.memory_space<semaphore_mem>> -> memref<1x!tpu.dma_semaphore, #tpu.memory_space<semaphore_mem>>
    %785 = tpu.memref_squeeze %784 : memref<1x!tpu.dma_semaphore, #tpu.memory_space<semaphore_mem>> -> memref<!tpu.dma_semaphore, #tpu.memory_space<semaphore_mem>>
    tpu.wait_dma2 semaphore(%785 : memref<!tpu.dma_semaphore, #tpu.memory_space<semaphore_mem>>) src(%781 : memref<1x128xf32, #tpu.memory_space<any>>) dst(%783 : memref<1x128xf32, #tpu.memory_space<vmem>>)
    %c3_i32_672 = arith.constant 3 : i32
    %c3_i32_673 = arith.constant 3 : i32
    %c0_i32_674 = arith.constant 0 : i32
    %c0_i32_675 = arith.constant 0 : i32
    %786 = tpu.memref_slice %arg2[%c0_i32_674, %c0_i32_675] : memref<100x128xf32, #tpu.memory_space<any>> -> memref<1x128xf32, #tpu.memory_space<any>>
    %c3_i32_676 = arith.constant 3 : i32
    %c0_i32_677 = arith.constant 0 : i32
    %787 = tpu.memref_slice %arg8[%c3_i32_672, %c3_i32_676, %c0_i32_677] : memref<8x8x128xf32, #tpu.memory_space<vmem>> -> memref<1x1x128xf32, #tpu.memory_space<vmem>>
    %788 = tpu.memref_squeeze %787 : memref<1x1x128xf32, #tpu.memory_space<vmem>> -> memref<1x128xf32, #tpu.memory_space<vmem>>
    %789 = tpu.memref_slice %arg9[%c3_i32_673] : memref<8x!tpu.dma_semaphore, #tpu.memory_space<semaphore_mem>> -> memref<1x!tpu.dma_semaphore, #tpu.memory_space<semaphore_mem>>
    %790 = tpu.memref_squeeze %789 : memref<1x!tpu.dma_semaphore, #tpu.memory_space<semaphore_mem>> -> memref<!tpu.dma_semaphore, #tpu.memory_space<semaphore_mem>>
    tpu.wait_dma2 semaphore(%790 : memref<!tpu.dma_semaphore, #tpu.memory_space<semaphore_mem>>) src(%786 : memref<1x128xf32, #tpu.memory_space<any>>) dst(%788 : memref<1x128xf32, #tpu.memory_space<vmem>>)
    %c3_i32_678 = arith.constant 3 : i32
    %c3_i32_679 = arith.constant 3 : i32
    %c0_i32_680 = arith.constant 0 : i32
    %c0_i32_681 = arith.constant 0 : i32
    %791 = tpu.memref_slice %arg2[%c0_i32_680, %c0_i32_681] : memref<100x128xf32, #tpu.memory_space<any>> -> memref<1x128xf32, #tpu.memory_space<any>>
    %c4_i32_682 = arith.constant 4 : i32
    %c0_i32_683 = arith.constant 0 : i32
    %792 = tpu.memref_slice %arg8[%c3_i32_678, %c4_i32_682, %c0_i32_683] : memref<8x8x128xf32, #tpu.memory_space<vmem>> -> memref<1x1x128xf32, #tpu.memory_space<vmem>>
    %793 = tpu.memref_squeeze %792 : memref<1x1x128xf32, #tpu.memory_space<vmem>> -> memref<1x128xf32, #tpu.memory_space<vmem>>
    %794 = tpu.memref_slice %arg9[%c3_i32_679] : memref<8x!tpu.dma_semaphore, #tpu.memory_space<semaphore_mem>> -> memref<1x!tpu.dma_semaphore, #tpu.memory_space<semaphore_mem>>
    %795 = tpu.memref_squeeze %794 : memref<1x!tpu.dma_semaphore, #tpu.memory_space<semaphore_mem>> -> memref<!tpu.dma_semaphore, #tpu.memory_space<semaphore_mem>>
    tpu.wait_dma2 semaphore(%795 : memref<!tpu.dma_semaphore, #tpu.memory_space<semaphore_mem>>) src(%791 : memref<1x128xf32, #tpu.memory_space<any>>) dst(%793 : memref<1x128xf32, #tpu.memory_space<vmem>>)
    %c3_i32_684 = arith.constant 3 : i32
    %c3_i32_685 = arith.constant 3 : i32
    %c0_i32_686 = arith.constant 0 : i32
    %c0_i32_687 = arith.constant 0 : i32
    %796 = tpu.memref_slice %arg2[%c0_i32_686, %c0_i32_687] : memref<100x128xf32, #tpu.memory_space<any>> -> memref<1x128xf32, #tpu.memory_space<any>>
    %c5_i32_688 = arith.constant 5 : i32
    %c0_i32_689 = arith.constant 0 : i32
    %797 = tpu.memref_slice %arg8[%c3_i32_684, %c5_i32_688, %c0_i32_689] : memref<8x8x128xf32, #tpu.memory_space<vmem>> -> memref<1x1x128xf32, #tpu.memory_space<vmem>>
    %798 = tpu.memref_squeeze %797 : memref<1x1x128xf32, #tpu.memory_space<vmem>> -> memref<1x128xf32, #tpu.memory_space<vmem>>
    %799 = tpu.memref_slice %arg9[%c3_i32_685] : memref<8x!tpu.dma_semaphore, #tpu.memory_space<semaphore_mem>> -> memref<1x!tpu.dma_semaphore, #tpu.memory_space<semaphore_mem>>
    %800 = tpu.memref_squeeze %799 : memref<1x!tpu.dma_semaphore, #tpu.memory_space<semaphore_mem>> -> memref<!tpu.dma_semaphore, #tpu.memory_space<semaphore_mem>>
    tpu.wait_dma2 semaphore(%800 : memref<!tpu.dma_semaphore, #tpu.memory_space<semaphore_mem>>) src(%796 : memref<1x128xf32, #tpu.memory_space<any>>) dst(%798 : memref<1x128xf32, #tpu.memory_space<vmem>>)
    %c3_i32_690 = arith.constant 3 : i32
    %c3_i32_691 = arith.constant 3 : i32
    %c0_i32_692 = arith.constant 0 : i32
    %c0_i32_693 = arith.constant 0 : i32
    %801 = tpu.memref_slice %arg2[%c0_i32_692, %c0_i32_693] : memref<100x128xf32, #tpu.memory_space<any>> -> memref<1x128xf32, #tpu.memory_space<any>>
    %c6_i32_694 = arith.constant 6 : i32
    %c0_i32_695 = arith.constant 0 : i32
    %802 = tpu.memref_slice %arg8[%c3_i32_690, %c6_i32_694, %c0_i32_695] : memref<8x8x128xf32, #tpu.memory_space<vmem>> -> memref<1x1x128xf32, #tpu.memory_space<vmem>>
    %803 = tpu.memref_squeeze %802 : memref<1x1x128xf32, #tpu.memory_space<vmem>> -> memref<1x128xf32, #tpu.memory_space<vmem>>
    %804 = tpu.memref_slice %arg9[%c3_i32_691] : memref<8x!tpu.dma_semaphore, #tpu.memory_space<semaphore_mem>> -> memref<1x!tpu.dma_semaphore, #tpu.memory_space<semaphore_mem>>
    %805 = tpu.memref_squeeze %804 : memref<1x!tpu.dma_semaphore, #tpu.memory_space<semaphore_mem>> -> memref<!tpu.dma_semaphore, #tpu.memory_space<semaphore_mem>>
    tpu.wait_dma2 semaphore(%805 : memref<!tpu.dma_semaphore, #tpu.memory_space<semaphore_mem>>) src(%801 : memref<1x128xf32, #tpu.memory_space<any>>) dst(%803 : memref<1x128xf32, #tpu.memory_space<vmem>>)
    %c3_i32_696 = arith.constant 3 : i32
    %c3_i32_697 = arith.constant 3 : i32
    %c0_i32_698 = arith.constant 0 : i32
    %c0_i32_699 = arith.constant 0 : i32
    %806 = tpu.memref_slice %arg2[%c0_i32_698, %c0_i32_699] : memref<100x128xf32, #tpu.memory_space<any>> -> memref<1x128xf32, #tpu.memory_space<any>>
    %c7_i32_700 = arith.constant 7 : i32
    %c0_i32_701 = arith.constant 0 : i32
    %807 = tpu.memref_slice %arg8[%c3_i32_696, %c7_i32_700, %c0_i32_701] : memref<8x8x128xf32, #tpu.memory_space<vmem>> -> memref<1x1x128xf32, #tpu.memory_space<vmem>>
    %808 = tpu.memref_squeeze %807 : memref<1x1x128xf32, #tpu.memory_space<vmem>> -> memref<1x128xf32, #tpu.memory_space<vmem>>
    %809 = tpu.memref_slice %arg9[%c3_i32_697] : memref<8x!tpu.dma_semaphore, #tpu.memory_space<semaphore_mem>> -> memref<1x!tpu.dma_semaphore, #tpu.memory_space<semaphore_mem>>
    %810 = tpu.memref_squeeze %809 : memref<1x!tpu.dma_semaphore, #tpu.memory_space<semaphore_mem>> -> memref<!tpu.dma_semaphore, #tpu.memory_space<semaphore_mem>>
    tpu.wait_dma2 semaphore(%810 : memref<!tpu.dma_semaphore, #tpu.memory_space<semaphore_mem>>) src(%806 : memref<1x128xf32, #tpu.memory_space<any>>) dst(%808 : memref<1x128xf32, #tpu.memory_space<vmem>>)
    %c3 = arith.constant 3 : index
    %c0_702 = arith.constant 0 : index
    %c0_703 = arith.constant 0 : index
    %811 = vector.load %arg8[%c3, %c0_702, %c0_703] : memref<8x8x128xf32, #tpu.memory_space<vmem>>, vector<1x8x128xf32>
    %812 = vector.shape_cast %811 : vector<1x8x128xf32> to vector<8x128xf32>
    %813 = arith.addf %770, %812 : vector<8x128xf32>
    %c4_i32_704 = arith.constant 4 : i32
    %c4_i32_705 = arith.constant 4 : i32
    %c0_i32_706 = arith.constant 0 : i32
    %c0_i32_707 = arith.constant 0 : i32
    %814 = tpu.memref_slice %arg2[%c0_i32_706, %c0_i32_707] : memref<100x128xf32, #tpu.memory_space<any>> -> memref<1x128xf32, #tpu.memory_space<any>>
    %c0_i32_708 = arith.constant 0 : i32
    %c0_i32_709 = arith.constant 0 : i32
    %815 = tpu.memref_slice %arg8[%c4_i32_704, %c0_i32_708, %c0_i32_709] : memref<8x8x128xf32, #tpu.memory_space<vmem>> -> memref<1x1x128xf32, #tpu.memory_space<vmem>>
    %816 = tpu.memref_squeeze %815 : memref<1x1x128xf32, #tpu.memory_space<vmem>> -> memref<1x128xf32, #tpu.memory_space<vmem>>
    %817 = tpu.memref_slice %arg9[%c4_i32_705] : memref<8x!tpu.dma_semaphore, #tpu.memory_space<semaphore_mem>> -> memref<1x!tpu.dma_semaphore, #tpu.memory_space<semaphore_mem>>
    %818 = tpu.memref_squeeze %817 : memref<1x!tpu.dma_semaphore, #tpu.memory_space<semaphore_mem>> -> memref<!tpu.dma_semaphore, #tpu.memory_space<semaphore_mem>>
    tpu.wait_dma2 semaphore(%818 : memref<!tpu.dma_semaphore, #tpu.memory_space<semaphore_mem>>) src(%814 : memref<1x128xf32, #tpu.memory_space<any>>) dst(%816 : memref<1x128xf32, #tpu.memory_space<vmem>>)
    %c4_i32_710 = arith.constant 4 : i32
    %c4_i32_711 = arith.constant 4 : i32
    %c0_i32_712 = arith.constant 0 : i32
    %c0_i32_713 = arith.constant 0 : i32
    %819 = tpu.memref_slice %arg2[%c0_i32_712, %c0_i32_713] : memref<100x128xf32, #tpu.memory_space<any>> -> memref<1x128xf32, #tpu.memory_space<any>>
    %c1_i32_714 = arith.constant 1 : i32
    %c0_i32_715 = arith.constant 0 : i32
    %820 = tpu.memref_slice %arg8[%c4_i32_710, %c1_i32_714, %c0_i32_715] : memref<8x8x128xf32, #tpu.memory_space<vmem>> -> memref<1x1x128xf32, #tpu.memory_space<vmem>>
    %821 = tpu.memref_squeeze %820 : memref<1x1x128xf32, #tpu.memory_space<vmem>> -> memref<1x128xf32, #tpu.memory_space<vmem>>
    %822 = tpu.memref_slice %arg9[%c4_i32_711] : memref<8x!tpu.dma_semaphore, #tpu.memory_space<semaphore_mem>> -> memref<1x!tpu.dma_semaphore, #tpu.memory_space<semaphore_mem>>
    %823 = tpu.memref_squeeze %822 : memref<1x!tpu.dma_semaphore, #tpu.memory_space<semaphore_mem>> -> memref<!tpu.dma_semaphore, #tpu.memory_space<semaphore_mem>>
    tpu.wait_dma2 semaphore(%823 : memref<!tpu.dma_semaphore, #tpu.memory_space<semaphore_mem>>) src(%819 : memref<1x128xf32, #tpu.memory_space<any>>) dst(%821 : memref<1x128xf32, #tpu.memory_space<vmem>>)
    %c4_i32_716 = arith.constant 4 : i32
    %c4_i32_717 = arith.constant 4 : i32
    %c0_i32_718 = arith.constant 0 : i32
    %c0_i32_719 = arith.constant 0 : i32
    %824 = tpu.memref_slice %arg2[%c0_i32_718, %c0_i32_719] : memref<100x128xf32, #tpu.memory_space<any>> -> memref<1x128xf32, #tpu.memory_space<any>>
    %c2_i32_720 = arith.constant 2 : i32
    %c0_i32_721 = arith.constant 0 : i32
    %825 = tpu.memref_slice %arg8[%c4_i32_716, %c2_i32_720, %c0_i32_721] : memref<8x8x128xf32, #tpu.memory_space<vmem>> -> memref<1x1x128xf32, #tpu.memory_space<vmem>>
    %826 = tpu.memref_squeeze %825 : memref<1x1x128xf32, #tpu.memory_space<vmem>> -> memref<1x128xf32, #tpu.memory_space<vmem>>
    %827 = tpu.memref_slice %arg9[%c4_i32_717] : memref<8x!tpu.dma_semaphore, #tpu.memory_space<semaphore_mem>> -> memref<1x!tpu.dma_semaphore, #tpu.memory_space<semaphore_mem>>
    %828 = tpu.memref_squeeze %827 : memref<1x!tpu.dma_semaphore, #tpu.memory_space<semaphore_mem>> -> memref<!tpu.dma_semaphore, #tpu.memory_space<semaphore_mem>>
    tpu.wait_dma2 semaphore(%828 : memref<!tpu.dma_semaphore, #tpu.memory_space<semaphore_mem>>) src(%824 : memref<1x128xf32, #tpu.memory_space<any>>) dst(%826 : memref<1x128xf32, #tpu.memory_space<vmem>>)
    %c4_i32_722 = arith.constant 4 : i32
    %c4_i32_723 = arith.constant 4 : i32
    %c0_i32_724 = arith.constant 0 : i32
    %c0_i32_725 = arith.constant 0 : i32
    %829 = tpu.memref_slice %arg2[%c0_i32_724, %c0_i32_725] : memref<100x128xf32, #tpu.memory_space<any>> -> memref<1x128xf32, #tpu.memory_space<any>>
    %c3_i32_726 = arith.constant 3 : i32
    %c0_i32_727 = arith.constant 0 : i32
    %830 = tpu.memref_slice %arg8[%c4_i32_722, %c3_i32_726, %c0_i32_727] : memref<8x8x128xf32, #tpu.memory_space<vmem>> -> memref<1x1x128xf32, #tpu.memory_space<vmem>>
    %831 = tpu.memref_squeeze %830 : memref<1x1x128xf32, #tpu.memory_space<vmem>> -> memref<1x128xf32, #tpu.memory_space<vmem>>
    %832 = tpu.memref_slice %arg9[%c4_i32_723] : memref<8x!tpu.dma_semaphore, #tpu.memory_space<semaphore_mem>> -> memref<1x!tpu.dma_semaphore, #tpu.memory_space<semaphore_mem>>
    %833 = tpu.memref_squeeze %832 : memref<1x!tpu.dma_semaphore, #tpu.memory_space<semaphore_mem>> -> memref<!tpu.dma_semaphore, #tpu.memory_space<semaphore_mem>>
    tpu.wait_dma2 semaphore(%833 : memref<!tpu.dma_semaphore, #tpu.memory_space<semaphore_mem>>) src(%829 : memref<1x128xf32, #tpu.memory_space<any>>) dst(%831 : memref<1x128xf32, #tpu.memory_space<vmem>>)
    %c4_i32_728 = arith.constant 4 : i32
    %c4_i32_729 = arith.constant 4 : i32
    %c0_i32_730 = arith.constant 0 : i32
    %c0_i32_731 = arith.constant 0 : i32
    %834 = tpu.memref_slice %arg2[%c0_i32_730, %c0_i32_731] : memref<100x128xf32, #tpu.memory_space<any>> -> memref<1x128xf32, #tpu.memory_space<any>>
    %c4_i32_732 = arith.constant 4 : i32
    %c0_i32_733 = arith.constant 0 : i32
    %835 = tpu.memref_slice %arg8[%c4_i32_728, %c4_i32_732, %c0_i32_733] : memref<8x8x128xf32, #tpu.memory_space<vmem>> -> memref<1x1x128xf32, #tpu.memory_space<vmem>>
    %836 = tpu.memref_squeeze %835 : memref<1x1x128xf32, #tpu.memory_space<vmem>> -> memref<1x128xf32, #tpu.memory_space<vmem>>
    %837 = tpu.memref_slice %arg9[%c4_i32_729] : memref<8x!tpu.dma_semaphore, #tpu.memory_space<semaphore_mem>> -> memref<1x!tpu.dma_semaphore, #tpu.memory_space<semaphore_mem>>
    %838 = tpu.memref_squeeze %837 : memref<1x!tpu.dma_semaphore, #tpu.memory_space<semaphore_mem>> -> memref<!tpu.dma_semaphore, #tpu.memory_space<semaphore_mem>>
    tpu.wait_dma2 semaphore(%838 : memref<!tpu.dma_semaphore, #tpu.memory_space<semaphore_mem>>) src(%834 : memref<1x128xf32, #tpu.memory_space<any>>) dst(%836 : memref<1x128xf32, #tpu.memory_space<vmem>>)
    %c4_i32_734 = arith.constant 4 : i32
    %c4_i32_735 = arith.constant 4 : i32
    %c0_i32_736 = arith.constant 0 : i32
    %c0_i32_737 = arith.constant 0 : i32
    %839 = tpu.memref_slice %arg2[%c0_i32_736, %c0_i32_737] : memref<100x128xf32, #tpu.memory_space<any>> -> memref<1x128xf32, #tpu.memory_space<any>>
    %c5_i32_738 = arith.constant 5 : i32
    %c0_i32_739 = arith.constant 0 : i32
    %840 = tpu.memref_slice %arg8[%c4_i32_734, %c5_i32_738, %c0_i32_739] : memref<8x8x128xf32, #tpu.memory_space<vmem>> -> memref<1x1x128xf32, #tpu.memory_space<vmem>>
    %841 = tpu.memref_squeeze %840 : memref<1x1x128xf32, #tpu.memory_space<vmem>> -> memref<1x128xf32, #tpu.memory_space<vmem>>
    %842 = tpu.memref_slice %arg9[%c4_i32_735] : memref<8x!tpu.dma_semaphore, #tpu.memory_space<semaphore_mem>> -> memref<1x!tpu.dma_semaphore, #tpu.memory_space<semaphore_mem>>
    %843 = tpu.memref_squeeze %842 : memref<1x!tpu.dma_semaphore, #tpu.memory_space<semaphore_mem>> -> memref<!tpu.dma_semaphore, #tpu.memory_space<semaphore_mem>>
    tpu.wait_dma2 semaphore(%843 : memref<!tpu.dma_semaphore, #tpu.memory_space<semaphore_mem>>) src(%839 : memref<1x128xf32, #tpu.memory_space<any>>) dst(%841 : memref<1x128xf32, #tpu.memory_space<vmem>>)
    %c4_i32_740 = arith.constant 4 : i32
    %c4_i32_741 = arith.constant 4 : i32
    %c0_i32_742 = arith.constant 0 : i32
    %c0_i32_743 = arith.constant 0 : i32
    %844 = tpu.memref_slice %arg2[%c0_i32_742, %c0_i32_743] : memref<100x128xf32, #tpu.memory_space<any>> -> memref<1x128xf32, #tpu.memory_space<any>>
    %c6_i32_744 = arith.constant 6 : i32
    %c0_i32_745 = arith.constant 0 : i32
    %845 = tpu.memref_slice %arg8[%c4_i32_740, %c6_i32_744, %c0_i32_745] : memref<8x8x128xf32, #tpu.memory_space<vmem>> -> memref<1x1x128xf32, #tpu.memory_space<vmem>>
    %846 = tpu.memref_squeeze %845 : memref<1x1x128xf32, #tpu.memory_space<vmem>> -> memref<1x128xf32, #tpu.memory_space<vmem>>
    %847 = tpu.memref_slice %arg9[%c4_i32_741] : memref<8x!tpu.dma_semaphore, #tpu.memory_space<semaphore_mem>> -> memref<1x!tpu.dma_semaphore, #tpu.memory_space<semaphore_mem>>
    %848 = tpu.memref_squeeze %847 : memref<1x!tpu.dma_semaphore, #tpu.memory_space<semaphore_mem>> -> memref<!tpu.dma_semaphore, #tpu.memory_space<semaphore_mem>>
    tpu.wait_dma2 semaphore(%848 : memref<!tpu.dma_semaphore, #tpu.memory_space<semaphore_mem>>) src(%844 : memref<1x128xf32, #tpu.memory_space<any>>) dst(%846 : memref<1x128xf32, #tpu.memory_space<vmem>>)
    %c4_i32_746 = arith.constant 4 : i32
    %c4_i32_747 = arith.constant 4 : i32
    %c0_i32_748 = arith.constant 0 : i32
    %c0_i32_749 = arith.constant 0 : i32
    %849 = tpu.memref_slice %arg2[%c0_i32_748, %c0_i32_749] : memref<100x128xf32, #tpu.memory_space<any>> -> memref<1x128xf32, #tpu.memory_space<any>>
    %c7_i32_750 = arith.constant 7 : i32
    %c0_i32_751 = arith.constant 0 : i32
    %850 = tpu.memref_slice %arg8[%c4_i32_746, %c7_i32_750, %c0_i32_751] : memref<8x8x128xf32, #tpu.memory_space<vmem>> -> memref<1x1x128xf32, #tpu.memory_space<vmem>>
    %851 = tpu.memref_squeeze %850 : memref<1x1x128xf32, #tpu.memory_space<vmem>> -> memref<1x128xf32, #tpu.memory_space<vmem>>
    %852 = tpu.memref_slice %arg9[%c4_i32_747] : memref<8x!tpu.dma_semaphore, #tpu.memory_space<semaphore_mem>> -> memref<1x!tpu.dma_semaphore, #tpu.memory_space<semaphore_mem>>
    %853 = tpu.memref_squeeze %852 : memref<1x!tpu.dma_semaphore, #tpu.memory_space<semaphore_mem>> -> memref<!tpu.dma_semaphore, #tpu.memory_space<semaphore_mem>>
    tpu.wait_dma2 semaphore(%853 : memref<!tpu.dma_semaphore, #tpu.memory_space<semaphore_mem>>) src(%849 : memref<1x128xf32, #tpu.memory_space<any>>) dst(%851 : memref<1x128xf32, #tpu.memory_space<vmem>>)
    %c4 = arith.constant 4 : index
    %c0_752 = arith.constant 0 : index
    %c0_753 = arith.constant 0 : index
    %854 = vector.load %arg8[%c4, %c0_752, %c0_753] : memref<8x8x128xf32, #tpu.memory_space<vmem>>, vector<1x8x128xf32>
    %855 = vector.shape_cast %854 : vector<1x8x128xf32> to vector<8x128xf32>
    %856 = arith.addf %813, %855 : vector<8x128xf32>
    %c5_i32_754 = arith.constant 5 : i32
    %c5_i32_755 = arith.constant 5 : i32
    %c0_i32_756 = arith.constant 0 : i32
    %c0_i32_757 = arith.constant 0 : i32
    %857 = tpu.memref_slice %arg2[%c0_i32_756, %c0_i32_757] : memref<100x128xf32, #tpu.memory_space<any>> -> memref<1x128xf32, #tpu.memory_space<any>>
    %c0_i32_758 = arith.constant 0 : i32
    %c0_i32_759 = arith.constant 0 : i32
    %858 = tpu.memref_slice %arg8[%c5_i32_754, %c0_i32_758, %c0_i32_759] : memref<8x8x128xf32, #tpu.memory_space<vmem>> -> memref<1x1x128xf32, #tpu.memory_space<vmem>>
    %859 = tpu.memref_squeeze %858 : memref<1x1x128xf32, #tpu.memory_space<vmem>> -> memref<1x128xf32, #tpu.memory_space<vmem>>
    %860 = tpu.memref_slice %arg9[%c5_i32_755] : memref<8x!tpu.dma_semaphore, #tpu.memory_space<semaphore_mem>> -> memref<1x!tpu.dma_semaphore, #tpu.memory_space<semaphore_mem>>
    %861 = tpu.memref_squeeze %860 : memref<1x!tpu.dma_semaphore, #tpu.memory_space<semaphore_mem>> -> memref<!tpu.dma_semaphore, #tpu.memory_space<semaphore_mem>>
    tpu.wait_dma2 semaphore(%861 : memref<!tpu.dma_semaphore, #tpu.memory_space<semaphore_mem>>) src(%857 : memref<1x128xf32, #tpu.memory_space<any>>) dst(%859 : memref<1x128xf32, #tpu.memory_space<vmem>>)
    %c5_i32_760 = arith.constant 5 : i32
    %c5_i32_761 = arith.constant 5 : i32
    %c0_i32_762 = arith.constant 0 : i32
    %c0_i32_763 = arith.constant 0 : i32
    %862 = tpu.memref_slice %arg2[%c0_i32_762, %c0_i32_763] : memref<100x128xf32, #tpu.memory_space<any>> -> memref<1x128xf32, #tpu.memory_space<any>>
    %c1_i32_764 = arith.constant 1 : i32
    %c0_i32_765 = arith.constant 0 : i32
    %863 = tpu.memref_slice %arg8[%c5_i32_760, %c1_i32_764, %c0_i32_765] : memref<8x8x128xf32, #tpu.memory_space<vmem>> -> memref<1x1x128xf32, #tpu.memory_space<vmem>>
    %864 = tpu.memref_squeeze %863 : memref<1x1x128xf32, #tpu.memory_space<vmem>> -> memref<1x128xf32, #tpu.memory_space<vmem>>
    %865 = tpu.memref_slice %arg9[%c5_i32_761] : memref<8x!tpu.dma_semaphore, #tpu.memory_space<semaphore_mem>> -> memref<1x!tpu.dma_semaphore, #tpu.memory_space<semaphore_mem>>
    %866 = tpu.memref_squeeze %865 : memref<1x!tpu.dma_semaphore, #tpu.memory_space<semaphore_mem>> -> memref<!tpu.dma_semaphore, #tpu.memory_space<semaphore_mem>>
    tpu.wait_dma2 semaphore(%866 : memref<!tpu.dma_semaphore, #tpu.memory_space<semaphore_mem>>) src(%862 : memref<1x128xf32, #tpu.memory_space<any>>) dst(%864 : memref<1x128xf32, #tpu.memory_space<vmem>>)
    %c5_i32_766 = arith.constant 5 : i32
    %c5_i32_767 = arith.constant 5 : i32
    %c0_i32_768 = arith.constant 0 : i32
    %c0_i32_769 = arith.constant 0 : i32
    %867 = tpu.memref_slice %arg2[%c0_i32_768, %c0_i32_769] : memref<100x128xf32, #tpu.memory_space<any>> -> memref<1x128xf32, #tpu.memory_space<any>>
    %c2_i32_770 = arith.constant 2 : i32
    %c0_i32_771 = arith.constant 0 : i32
    %868 = tpu.memref_slice %arg8[%c5_i32_766, %c2_i32_770, %c0_i32_771] : memref<8x8x128xf32, #tpu.memory_space<vmem>> -> memref<1x1x128xf32, #tpu.memory_space<vmem>>
    %869 = tpu.memref_squeeze %868 : memref<1x1x128xf32, #tpu.memory_space<vmem>> -> memref<1x128xf32, #tpu.memory_space<vmem>>
    %870 = tpu.memref_slice %arg9[%c5_i32_767] : memref<8x!tpu.dma_semaphore, #tpu.memory_space<semaphore_mem>> -> memref<1x!tpu.dma_semaphore, #tpu.memory_space<semaphore_mem>>
    %871 = tpu.memref_squeeze %870 : memref<1x!tpu.dma_semaphore, #tpu.memory_space<semaphore_mem>> -> memref<!tpu.dma_semaphore, #tpu.memory_space<semaphore_mem>>
    tpu.wait_dma2 semaphore(%871 : memref<!tpu.dma_semaphore, #tpu.memory_space<semaphore_mem>>) src(%867 : memref<1x128xf32, #tpu.memory_space<any>>) dst(%869 : memref<1x128xf32, #tpu.memory_space<vmem>>)
    %c5_i32_772 = arith.constant 5 : i32
    %c5_i32_773 = arith.constant 5 : i32
    %c0_i32_774 = arith.constant 0 : i32
    %c0_i32_775 = arith.constant 0 : i32
    %872 = tpu.memref_slice %arg2[%c0_i32_774, %c0_i32_775] : memref<100x128xf32, #tpu.memory_space<any>> -> memref<1x128xf32, #tpu.memory_space<any>>
    %c3_i32_776 = arith.constant 3 : i32
    %c0_i32_777 = arith.constant 0 : i32
    %873 = tpu.memref_slice %arg8[%c5_i32_772, %c3_i32_776, %c0_i32_777] : memref<8x8x128xf32, #tpu.memory_space<vmem>> -> memref<1x1x128xf32, #tpu.memory_space<vmem>>
    %874 = tpu.memref_squeeze %873 : memref<1x1x128xf32, #tpu.memory_space<vmem>> -> memref<1x128xf32, #tpu.memory_space<vmem>>
    %875 = tpu.memref_slice %arg9[%c5_i32_773] : memref<8x!tpu.dma_semaphore, #tpu.memory_space<semaphore_mem>> -> memref<1x!tpu.dma_semaphore, #tpu.memory_space<semaphore_mem>>
    %876 = tpu.memref_squeeze %875 : memref<1x!tpu.dma_semaphore, #tpu.memory_space<semaphore_mem>> -> memref<!tpu.dma_semaphore, #tpu.memory_space<semaphore_mem>>
    tpu.wait_dma2 semaphore(%876 : memref<!tpu.dma_semaphore, #tpu.memory_space<semaphore_mem>>) src(%872 : memref<1x128xf32, #tpu.memory_space<any>>) dst(%874 : memref<1x128xf32, #tpu.memory_space<vmem>>)
    %c5_i32_778 = arith.constant 5 : i32
    %c5_i32_779 = arith.constant 5 : i32
    %c0_i32_780 = arith.constant 0 : i32
    %c0_i32_781 = arith.constant 0 : i32
    %877 = tpu.memref_slice %arg2[%c0_i32_780, %c0_i32_781] : memref<100x128xf32, #tpu.memory_space<any>> -> memref<1x128xf32, #tpu.memory_space<any>>
    %c4_i32_782 = arith.constant 4 : i32
    %c0_i32_783 = arith.constant 0 : i32
    %878 = tpu.memref_slice %arg8[%c5_i32_778, %c4_i32_782, %c0_i32_783] : memref<8x8x128xf32, #tpu.memory_space<vmem>> -> memref<1x1x128xf32, #tpu.memory_space<vmem>>
    %879 = tpu.memref_squeeze %878 : memref<1x1x128xf32, #tpu.memory_space<vmem>> -> memref<1x128xf32, #tpu.memory_space<vmem>>
    %880 = tpu.memref_slice %arg9[%c5_i32_779] : memref<8x!tpu.dma_semaphore, #tpu.memory_space<semaphore_mem>> -> memref<1x!tpu.dma_semaphore, #tpu.memory_space<semaphore_mem>>
    %881 = tpu.memref_squeeze %880 : memref<1x!tpu.dma_semaphore, #tpu.memory_space<semaphore_mem>> -> memref<!tpu.dma_semaphore, #tpu.memory_space<semaphore_mem>>
    tpu.wait_dma2 semaphore(%881 : memref<!tpu.dma_semaphore, #tpu.memory_space<semaphore_mem>>) src(%877 : memref<1x128xf32, #tpu.memory_space<any>>) dst(%879 : memref<1x128xf32, #tpu.memory_space<vmem>>)
    %c5_i32_784 = arith.constant 5 : i32
    %c5_i32_785 = arith.constant 5 : i32
    %c0_i32_786 = arith.constant 0 : i32
    %c0_i32_787 = arith.constant 0 : i32
    %882 = tpu.memref_slice %arg2[%c0_i32_786, %c0_i32_787] : memref<100x128xf32, #tpu.memory_space<any>> -> memref<1x128xf32, #tpu.memory_space<any>>
    %c5_i32_788 = arith.constant 5 : i32
    %c0_i32_789 = arith.constant 0 : i32
    %883 = tpu.memref_slice %arg8[%c5_i32_784, %c5_i32_788, %c0_i32_789] : memref<8x8x128xf32, #tpu.memory_space<vmem>> -> memref<1x1x128xf32, #tpu.memory_space<vmem>>
    %884 = tpu.memref_squeeze %883 : memref<1x1x128xf32, #tpu.memory_space<vmem>> -> memref<1x128xf32, #tpu.memory_space<vmem>>
    %885 = tpu.memref_slice %arg9[%c5_i32_785] : memref<8x!tpu.dma_semaphore, #tpu.memory_space<semaphore_mem>> -> memref<1x!tpu.dma_semaphore, #tpu.memory_space<semaphore_mem>>
    %886 = tpu.memref_squeeze %885 : memref<1x!tpu.dma_semaphore, #tpu.memory_space<semaphore_mem>> -> memref<!tpu.dma_semaphore, #tpu.memory_space<semaphore_mem>>
    tpu.wait_dma2 semaphore(%886 : memref<!tpu.dma_semaphore, #tpu.memory_space<semaphore_mem>>) src(%882 : memref<1x128xf32, #tpu.memory_space<any>>) dst(%884 : memref<1x128xf32, #tpu.memory_space<vmem>>)
    %c5_i32_790 = arith.constant 5 : i32
    %c5_i32_791 = arith.constant 5 : i32
    %c0_i32_792 = arith.constant 0 : i32
    %c0_i32_793 = arith.constant 0 : i32
    %887 = tpu.memref_slice %arg2[%c0_i32_792, %c0_i32_793] : memref<100x128xf32, #tpu.memory_space<any>> -> memref<1x128xf32, #tpu.memory_space<any>>
    %c6_i32_794 = arith.constant 6 : i32
    %c0_i32_795 = arith.constant 0 : i32
    %888 = tpu.memref_slice %arg8[%c5_i32_790, %c6_i32_794, %c0_i32_795] : memref<8x8x128xf32, #tpu.memory_space<vmem>> -> memref<1x1x128xf32, #tpu.memory_space<vmem>>
    %889 = tpu.memref_squeeze %888 : memref<1x1x128xf32, #tpu.memory_space<vmem>> -> memref<1x128xf32, #tpu.memory_space<vmem>>
    %890 = tpu.memref_slice %arg9[%c5_i32_791] : memref<8x!tpu.dma_semaphore, #tpu.memory_space<semaphore_mem>> -> memref<1x!tpu.dma_semaphore, #tpu.memory_space<semaphore_mem>>
    %891 = tpu.memref_squeeze %890 : memref<1x!tpu.dma_semaphore, #tpu.memory_space<semaphore_mem>> -> memref<!tpu.dma_semaphore, #tpu.memory_space<semaphore_mem>>
    tpu.wait_dma2 semaphore(%891 : memref<!tpu.dma_semaphore, #tpu.memory_space<semaphore_mem>>) src(%887 : memref<1x128xf32, #tpu.memory_space<any>>) dst(%889 : memref<1x128xf32, #tpu.memory_space<vmem>>)
    %c5_i32_796 = arith.constant 5 : i32
    %c5_i32_797 = arith.constant 5 : i32
    %c0_i32_798 = arith.constant 0 : i32
    %c0_i32_799 = arith.constant 0 : i32
    %892 = tpu.memref_slice %arg2[%c0_i32_798, %c0_i32_799] : memref<100x128xf32, #tpu.memory_space<any>> -> memref<1x128xf32, #tpu.memory_space<any>>
    %c7_i32_800 = arith.constant 7 : i32
    %c0_i32_801 = arith.constant 0 : i32
    %893 = tpu.memref_slice %arg8[%c5_i32_796, %c7_i32_800, %c0_i32_801] : memref<8x8x128xf32, #tpu.memory_space<vmem>> -> memref<1x1x128xf32, #tpu.memory_space<vmem>>
    %894 = tpu.memref_squeeze %893 : memref<1x1x128xf32, #tpu.memory_space<vmem>> -> memref<1x128xf32, #tpu.memory_space<vmem>>
    %895 = tpu.memref_slice %arg9[%c5_i32_797] : memref<8x!tpu.dma_semaphore, #tpu.memory_space<semaphore_mem>> -> memref<1x!tpu.dma_semaphore, #tpu.memory_space<semaphore_mem>>
    %896 = tpu.memref_squeeze %895 : memref<1x!tpu.dma_semaphore, #tpu.memory_space<semaphore_mem>> -> memref<!tpu.dma_semaphore, #tpu.memory_space<semaphore_mem>>
    tpu.wait_dma2 semaphore(%896 : memref<!tpu.dma_semaphore, #tpu.memory_space<semaphore_mem>>) src(%892 : memref<1x128xf32, #tpu.memory_space<any>>) dst(%894 : memref<1x128xf32, #tpu.memory_space<vmem>>)
    %c5 = arith.constant 5 : index
    %c0_802 = arith.constant 0 : index
    %c0_803 = arith.constant 0 : index
    %897 = vector.load %arg8[%c5, %c0_802, %c0_803] : memref<8x8x128xf32, #tpu.memory_space<vmem>>, vector<1x8x128xf32>
    %898 = vector.shape_cast %897 : vector<1x8x128xf32> to vector<8x128xf32>
    %899 = arith.addf %856, %898 : vector<8x128xf32>
    %c6_i32_804 = arith.constant 6 : i32
    %c6_i32_805 = arith.constant 6 : i32
    %c0_i32_806 = arith.constant 0 : i32
    %c0_i32_807 = arith.constant 0 : i32
    %900 = tpu.memref_slice %arg2[%c0_i32_806, %c0_i32_807] : memref<100x128xf32, #tpu.memory_space<any>> -> memref<1x128xf32, #tpu.memory_space<any>>
    %c0_i32_808 = arith.constant 0 : i32
    %c0_i32_809 = arith.constant 0 : i32
    %901 = tpu.memref_slice %arg8[%c6_i32_804, %c0_i32_808, %c0_i32_809] : memref<8x8x128xf32, #tpu.memory_space<vmem>> -> memref<1x1x128xf32, #tpu.memory_space<vmem>>
    %902 = tpu.memref_squeeze %901 : memref<1x1x128xf32, #tpu.memory_space<vmem>> -> memref<1x128xf32, #tpu.memory_space<vmem>>
    %903 = tpu.memref_slice %arg9[%c6_i32_805] : memref<8x!tpu.dma_semaphore, #tpu.memory_space<semaphore_mem>> -> memref<1x!tpu.dma_semaphore, #tpu.memory_space<semaphore_mem>>
    %904 = tpu.memref_squeeze %903 : memref<1x!tpu.dma_semaphore, #tpu.memory_space<semaphore_mem>> -> memref<!tpu.dma_semaphore, #tpu.memory_space<semaphore_mem>>
    tpu.wait_dma2 semaphore(%904 : memref<!tpu.dma_semaphore, #tpu.memory_space<semaphore_mem>>) src(%900 : memref<1x128xf32, #tpu.memory_space<any>>) dst(%902 : memref<1x128xf32, #tpu.memory_space<vmem>>)
    %c6_i32_810 = arith.constant 6 : i32
    %c6_i32_811 = arith.constant 6 : i32
    %c0_i32_812 = arith.constant 0 : i32
    %c0_i32_813 = arith.constant 0 : i32
    %905 = tpu.memref_slice %arg2[%c0_i32_812, %c0_i32_813] : memref<100x128xf32, #tpu.memory_space<any>> -> memref<1x128xf32, #tpu.memory_space<any>>
    %c1_i32_814 = arith.constant 1 : i32
    %c0_i32_815 = arith.constant 0 : i32
    %906 = tpu.memref_slice %arg8[%c6_i32_810, %c1_i32_814, %c0_i32_815] : memref<8x8x128xf32, #tpu.memory_space<vmem>> -> memref<1x1x128xf32, #tpu.memory_space<vmem>>
    %907 = tpu.memref_squeeze %906 : memref<1x1x128xf32, #tpu.memory_space<vmem>> -> memref<1x128xf32, #tpu.memory_space<vmem>>
    %908 = tpu.memref_slice %arg9[%c6_i32_811] : memref<8x!tpu.dma_semaphore, #tpu.memory_space<semaphore_mem>> -> memref<1x!tpu.dma_semaphore, #tpu.memory_space<semaphore_mem>>
    %909 = tpu.memref_squeeze %908 : memref<1x!tpu.dma_semaphore, #tpu.memory_space<semaphore_mem>> -> memref<!tpu.dma_semaphore, #tpu.memory_space<semaphore_mem>>
    tpu.wait_dma2 semaphore(%909 : memref<!tpu.dma_semaphore, #tpu.memory_space<semaphore_mem>>) src(%905 : memref<1x128xf32, #tpu.memory_space<any>>) dst(%907 : memref<1x128xf32, #tpu.memory_space<vmem>>)
    %c6_i32_816 = arith.constant 6 : i32
    %c6_i32_817 = arith.constant 6 : i32
    %c0_i32_818 = arith.constant 0 : i32
    %c0_i32_819 = arith.constant 0 : i32
    %910 = tpu.memref_slice %arg2[%c0_i32_818, %c0_i32_819] : memref<100x128xf32, #tpu.memory_space<any>> -> memref<1x128xf32, #tpu.memory_space<any>>
    %c2_i32_820 = arith.constant 2 : i32
    %c0_i32_821 = arith.constant 0 : i32
    %911 = tpu.memref_slice %arg8[%c6_i32_816, %c2_i32_820, %c0_i32_821] : memref<8x8x128xf32, #tpu.memory_space<vmem>> -> memref<1x1x128xf32, #tpu.memory_space<vmem>>
    %912 = tpu.memref_squeeze %911 : memref<1x1x128xf32, #tpu.memory_space<vmem>> -> memref<1x128xf32, #tpu.memory_space<vmem>>
    %913 = tpu.memref_slice %arg9[%c6_i32_817] : memref<8x!tpu.dma_semaphore, #tpu.memory_space<semaphore_mem>> -> memref<1x!tpu.dma_semaphore, #tpu.memory_space<semaphore_mem>>
    %914 = tpu.memref_squeeze %913 : memref<1x!tpu.dma_semaphore, #tpu.memory_space<semaphore_mem>> -> memref<!tpu.dma_semaphore, #tpu.memory_space<semaphore_mem>>
    tpu.wait_dma2 semaphore(%914 : memref<!tpu.dma_semaphore, #tpu.memory_space<semaphore_mem>>) src(%910 : memref<1x128xf32, #tpu.memory_space<any>>) dst(%912 : memref<1x128xf32, #tpu.memory_space<vmem>>)
    %c6_i32_822 = arith.constant 6 : i32
    %c6_i32_823 = arith.constant 6 : i32
    %c0_i32_824 = arith.constant 0 : i32
    %c0_i32_825 = arith.constant 0 : i32
    %915 = tpu.memref_slice %arg2[%c0_i32_824, %c0_i32_825] : memref<100x128xf32, #tpu.memory_space<any>> -> memref<1x128xf32, #tpu.memory_space<any>>
    %c3_i32_826 = arith.constant 3 : i32
    %c0_i32_827 = arith.constant 0 : i32
    %916 = tpu.memref_slice %arg8[%c6_i32_822, %c3_i32_826, %c0_i32_827] : memref<8x8x128xf32, #tpu.memory_space<vmem>> -> memref<1x1x128xf32, #tpu.memory_space<vmem>>
    %917 = tpu.memref_squeeze %916 : memref<1x1x128xf32, #tpu.memory_space<vmem>> -> memref<1x128xf32, #tpu.memory_space<vmem>>
    %918 = tpu.memref_slice %arg9[%c6_i32_823] : memref<8x!tpu.dma_semaphore, #tpu.memory_space<semaphore_mem>> -> memref<1x!tpu.dma_semaphore, #tpu.memory_space<semaphore_mem>>
    %919 = tpu.memref_squeeze %918 : memref<1x!tpu.dma_semaphore, #tpu.memory_space<semaphore_mem>> -> memref<!tpu.dma_semaphore, #tpu.memory_space<semaphore_mem>>
    tpu.wait_dma2 semaphore(%919 : memref<!tpu.dma_semaphore, #tpu.memory_space<semaphore_mem>>) src(%915 : memref<1x128xf32, #tpu.memory_space<any>>) dst(%917 : memref<1x128xf32, #tpu.memory_space<vmem>>)
    %c6_i32_828 = arith.constant 6 : i32
    %c6_i32_829 = arith.constant 6 : i32
    %c0_i32_830 = arith.constant 0 : i32
    %c0_i32_831 = arith.constant 0 : i32
    %920 = tpu.memref_slice %arg2[%c0_i32_830, %c0_i32_831] : memref<100x128xf32, #tpu.memory_space<any>> -> memref<1x128xf32, #tpu.memory_space<any>>
    %c4_i32_832 = arith.constant 4 : i32
    %c0_i32_833 = arith.constant 0 : i32
    %921 = tpu.memref_slice %arg8[%c6_i32_828, %c4_i32_832, %c0_i32_833] : memref<8x8x128xf32, #tpu.memory_space<vmem>> -> memref<1x1x128xf32, #tpu.memory_space<vmem>>
    %922 = tpu.memref_squeeze %921 : memref<1x1x128xf32, #tpu.memory_space<vmem>> -> memref<1x128xf32, #tpu.memory_space<vmem>>
    %923 = tpu.memref_slice %arg9[%c6_i32_829] : memref<8x!tpu.dma_semaphore, #tpu.memory_space<semaphore_mem>> -> memref<1x!tpu.dma_semaphore, #tpu.memory_space<semaphore_mem>>
    %924 = tpu.memref_squeeze %923 : memref<1x!tpu.dma_semaphore, #tpu.memory_space<semaphore_mem>> -> memref<!tpu.dma_semaphore, #tpu.memory_space<semaphore_mem>>
    tpu.wait_dma2 semaphore(%924 : memref<!tpu.dma_semaphore, #tpu.memory_space<semaphore_mem>>) src(%920 : memref<1x128xf32, #tpu.memory_space<any>>) dst(%922 : memref<1x128xf32, #tpu.memory_space<vmem>>)
    %c6_i32_834 = arith.constant 6 : i32
    %c6_i32_835 = arith.constant 6 : i32
    %c0_i32_836 = arith.constant 0 : i32
    %c0_i32_837 = arith.constant 0 : i32
    %925 = tpu.memref_slice %arg2[%c0_i32_836, %c0_i32_837] : memref<100x128xf32, #tpu.memory_space<any>> -> memref<1x128xf32, #tpu.memory_space<any>>
    %c5_i32_838 = arith.constant 5 : i32
    %c0_i32_839 = arith.constant 0 : i32
    %926 = tpu.memref_slice %arg8[%c6_i32_834, %c5_i32_838, %c0_i32_839] : memref<8x8x128xf32, #tpu.memory_space<vmem>> -> memref<1x1x128xf32, #tpu.memory_space<vmem>>
    %927 = tpu.memref_squeeze %926 : memref<1x1x128xf32, #tpu.memory_space<vmem>> -> memref<1x128xf32, #tpu.memory_space<vmem>>
    %928 = tpu.memref_slice %arg9[%c6_i32_835] : memref<8x!tpu.dma_semaphore, #tpu.memory_space<semaphore_mem>> -> memref<1x!tpu.dma_semaphore, #tpu.memory_space<semaphore_mem>>
    %929 = tpu.memref_squeeze %928 : memref<1x!tpu.dma_semaphore, #tpu.memory_space<semaphore_mem>> -> memref<!tpu.dma_semaphore, #tpu.memory_space<semaphore_mem>>
    tpu.wait_dma2 semaphore(%929 : memref<!tpu.dma_semaphore, #tpu.memory_space<semaphore_mem>>) src(%925 : memref<1x128xf32, #tpu.memory_space<any>>) dst(%927 : memref<1x128xf32, #tpu.memory_space<vmem>>)
    %c6_i32_840 = arith.constant 6 : i32
    %c6_i32_841 = arith.constant 6 : i32
    %c0_i32_842 = arith.constant 0 : i32
    %c0_i32_843 = arith.constant 0 : i32
    %930 = tpu.memref_slice %arg2[%c0_i32_842, %c0_i32_843] : memref<100x128xf32, #tpu.memory_space<any>> -> memref<1x128xf32, #tpu.memory_space<any>>
    %c6_i32_844 = arith.constant 6 : i32
    %c0_i32_845 = arith.constant 0 : i32
    %931 = tpu.memref_slice %arg8[%c6_i32_840, %c6_i32_844, %c0_i32_845] : memref<8x8x128xf32, #tpu.memory_space<vmem>> -> memref<1x1x128xf32, #tpu.memory_space<vmem>>
    %932 = tpu.memref_squeeze %931 : memref<1x1x128xf32, #tpu.memory_space<vmem>> -> memref<1x128xf32, #tpu.memory_space<vmem>>
    %933 = tpu.memref_slice %arg9[%c6_i32_841] : memref<8x!tpu.dma_semaphore, #tpu.memory_space<semaphore_mem>> -> memref<1x!tpu.dma_semaphore, #tpu.memory_space<semaphore_mem>>
    %934 = tpu.memref_squeeze %933 : memref<1x!tpu.dma_semaphore, #tpu.memory_space<semaphore_mem>> -> memref<!tpu.dma_semaphore, #tpu.memory_space<semaphore_mem>>
    tpu.wait_dma2 semaphore(%934 : memref<!tpu.dma_semaphore, #tpu.memory_space<semaphore_mem>>) src(%930 : memref<1x128xf32, #tpu.memory_space<any>>) dst(%932 : memref<1x128xf32, #tpu.memory_space<vmem>>)
    %c6_i32_846 = arith.constant 6 : i32
    %c6_i32_847 = arith.constant 6 : i32
    %c0_i32_848 = arith.constant 0 : i32
    %c0_i32_849 = arith.constant 0 : i32
    %935 = tpu.memref_slice %arg2[%c0_i32_848, %c0_i32_849] : memref<100x128xf32, #tpu.memory_space<any>> -> memref<1x128xf32, #tpu.memory_space<any>>
    %c7_i32_850 = arith.constant 7 : i32
    %c0_i32_851 = arith.constant 0 : i32
    %936 = tpu.memref_slice %arg8[%c6_i32_846, %c7_i32_850, %c0_i32_851] : memref<8x8x128xf32, #tpu.memory_space<vmem>> -> memref<1x1x128xf32, #tpu.memory_space<vmem>>
    %937 = tpu.memref_squeeze %936 : memref<1x1x128xf32, #tpu.memory_space<vmem>> -> memref<1x128xf32, #tpu.memory_space<vmem>>
    %938 = tpu.memref_slice %arg9[%c6_i32_847] : memref<8x!tpu.dma_semaphore, #tpu.memory_space<semaphore_mem>> -> memref<1x!tpu.dma_semaphore, #tpu.memory_space<semaphore_mem>>
    %939 = tpu.memref_squeeze %938 : memref<1x!tpu.dma_semaphore, #tpu.memory_space<semaphore_mem>> -> memref<!tpu.dma_semaphore, #tpu.memory_space<semaphore_mem>>
    tpu.wait_dma2 semaphore(%939 : memref<!tpu.dma_semaphore, #tpu.memory_space<semaphore_mem>>) src(%935 : memref<1x128xf32, #tpu.memory_space<any>>) dst(%937 : memref<1x128xf32, #tpu.memory_space<vmem>>)
    %c6 = arith.constant 6 : index
    %c0_852 = arith.constant 0 : index
    %c0_853 = arith.constant 0 : index
    %940 = vector.load %arg8[%c6, %c0_852, %c0_853] : memref<8x8x128xf32, #tpu.memory_space<vmem>>, vector<1x8x128xf32>
    %941 = vector.shape_cast %940 : vector<1x8x128xf32> to vector<8x128xf32>
    %942 = arith.addf %899, %941 : vector<8x128xf32>
    %c7_i32_854 = arith.constant 7 : i32
    %c7_i32_855 = arith.constant 7 : i32
    %c0_i32_856 = arith.constant 0 : i32
    %c0_i32_857 = arith.constant 0 : i32
    %943 = tpu.memref_slice %arg2[%c0_i32_856, %c0_i32_857] : memref<100x128xf32, #tpu.memory_space<any>> -> memref<1x128xf32, #tpu.memory_space<any>>
    %c0_i32_858 = arith.constant 0 : i32
    %c0_i32_859 = arith.constant 0 : i32
    %944 = tpu.memref_slice %arg8[%c7_i32_854, %c0_i32_858, %c0_i32_859] : memref<8x8x128xf32, #tpu.memory_space<vmem>> -> memref<1x1x128xf32, #tpu.memory_space<vmem>>
    %945 = tpu.memref_squeeze %944 : memref<1x1x128xf32, #tpu.memory_space<vmem>> -> memref<1x128xf32, #tpu.memory_space<vmem>>
    %946 = tpu.memref_slice %arg9[%c7_i32_855] : memref<8x!tpu.dma_semaphore, #tpu.memory_space<semaphore_mem>> -> memref<1x!tpu.dma_semaphore, #tpu.memory_space<semaphore_mem>>
    %947 = tpu.memref_squeeze %946 : memref<1x!tpu.dma_semaphore, #tpu.memory_space<semaphore_mem>> -> memref<!tpu.dma_semaphore, #tpu.memory_space<semaphore_mem>>
    tpu.wait_dma2 semaphore(%947 : memref<!tpu.dma_semaphore, #tpu.memory_space<semaphore_mem>>) src(%943 : memref<1x128xf32, #tpu.memory_space<any>>) dst(%945 : memref<1x128xf32, #tpu.memory_space<vmem>>)
    %c7_i32_860 = arith.constant 7 : i32
    %c7_i32_861 = arith.constant 7 : i32
    %c0_i32_862 = arith.constant 0 : i32
    %c0_i32_863 = arith.constant 0 : i32
    %948 = tpu.memref_slice %arg2[%c0_i32_862, %c0_i32_863] : memref<100x128xf32, #tpu.memory_space<any>> -> memref<1x128xf32, #tpu.memory_space<any>>
    %c1_i32_864 = arith.constant 1 : i32
    %c0_i32_865 = arith.constant 0 : i32
    %949 = tpu.memref_slice %arg8[%c7_i32_860, %c1_i32_864, %c0_i32_865] : memref<8x8x128xf32, #tpu.memory_space<vmem>> -> memref<1x1x128xf32, #tpu.memory_space<vmem>>
    %950 = tpu.memref_squeeze %949 : memref<1x1x128xf32, #tpu.memory_space<vmem>> -> memref<1x128xf32, #tpu.memory_space<vmem>>
    %951 = tpu.memref_slice %arg9[%c7_i32_861] : memref<8x!tpu.dma_semaphore, #tpu.memory_space<semaphore_mem>> -> memref<1x!tpu.dma_semaphore, #tpu.memory_space<semaphore_mem>>
    %952 = tpu.memref_squeeze %951 : memref<1x!tpu.dma_semaphore, #tpu.memory_space<semaphore_mem>> -> memref<!tpu.dma_semaphore, #tpu.memory_space<semaphore_mem>>
    tpu.wait_dma2 semaphore(%952 : memref<!tpu.dma_semaphore, #tpu.memory_space<semaphore_mem>>) src(%948 : memref<1x128xf32, #tpu.memory_space<any>>) dst(%950 : memref<1x128xf32, #tpu.memory_space<vmem>>)
    %c7_i32_866 = arith.constant 7 : i32
    %c7_i32_867 = arith.constant 7 : i32
    %c0_i32_868 = arith.constant 0 : i32
    %c0_i32_869 = arith.constant 0 : i32
    %953 = tpu.memref_slice %arg2[%c0_i32_868, %c0_i32_869] : memref<100x128xf32, #tpu.memory_space<any>> -> memref<1x128xf32, #tpu.memory_space<any>>
    %c2_i32_870 = arith.constant 2 : i32
    %c0_i32_871 = arith.constant 0 : i32
    %954 = tpu.memref_slice %arg8[%c7_i32_866, %c2_i32_870, %c0_i32_871] : memref<8x8x128xf32, #tpu.memory_space<vmem>> -> memref<1x1x128xf32, #tpu.memory_space<vmem>>
    %955 = tpu.memref_squeeze %954 : memref<1x1x128xf32, #tpu.memory_space<vmem>> -> memref<1x128xf32, #tpu.memory_space<vmem>>
    %956 = tpu.memref_slice %arg9[%c7_i32_867] : memref<8x!tpu.dma_semaphore, #tpu.memory_space<semaphore_mem>> -> memref<1x!tpu.dma_semaphore, #tpu.memory_space<semaphore_mem>>
    %957 = tpu.memref_squeeze %956 : memref<1x!tpu.dma_semaphore, #tpu.memory_space<semaphore_mem>> -> memref<!tpu.dma_semaphore, #tpu.memory_space<semaphore_mem>>
    tpu.wait_dma2 semaphore(%957 : memref<!tpu.dma_semaphore, #tpu.memory_space<semaphore_mem>>) src(%953 : memref<1x128xf32, #tpu.memory_space<any>>) dst(%955 : memref<1x128xf32, #tpu.memory_space<vmem>>)
    %c7_i32_872 = arith.constant 7 : i32
    %c7_i32_873 = arith.constant 7 : i32
    %c0_i32_874 = arith.constant 0 : i32
    %c0_i32_875 = arith.constant 0 : i32
    %958 = tpu.memref_slice %arg2[%c0_i32_874, %c0_i32_875] : memref<100x128xf32, #tpu.memory_space<any>> -> memref<1x128xf32, #tpu.memory_space<any>>
    %c3_i32_876 = arith.constant 3 : i32
    %c0_i32_877 = arith.constant 0 : i32
    %959 = tpu.memref_slice %arg8[%c7_i32_872, %c3_i32_876, %c0_i32_877] : memref<8x8x128xf32, #tpu.memory_space<vmem>> -> memref<1x1x128xf32, #tpu.memory_space<vmem>>
    %960 = tpu.memref_squeeze %959 : memref<1x1x128xf32, #tpu.memory_space<vmem>> -> memref<1x128xf32, #tpu.memory_space<vmem>>
    %961 = tpu.memref_slice %arg9[%c7_i32_873] : memref<8x!tpu.dma_semaphore, #tpu.memory_space<semaphore_mem>> -> memref<1x!tpu.dma_semaphore, #tpu.memory_space<semaphore_mem>>
    %962 = tpu.memref_squeeze %961 : memref<1x!tpu.dma_semaphore, #tpu.memory_space<semaphore_mem>> -> memref<!tpu.dma_semaphore, #tpu.memory_space<semaphore_mem>>
    tpu.wait_dma2 semaphore(%962 : memref<!tpu.dma_semaphore, #tpu.memory_space<semaphore_mem>>) src(%958 : memref<1x128xf32, #tpu.memory_space<any>>) dst(%960 : memref<1x128xf32, #tpu.memory_space<vmem>>)
    %c7_i32_878 = arith.constant 7 : i32
    %c7_i32_879 = arith.constant 7 : i32
    %c0_i32_880 = arith.constant 0 : i32
    %c0_i32_881 = arith.constant 0 : i32
    %963 = tpu.memref_slice %arg2[%c0_i32_880, %c0_i32_881] : memref<100x128xf32, #tpu.memory_space<any>> -> memref<1x128xf32, #tpu.memory_space<any>>
    %c4_i32_882 = arith.constant 4 : i32
    %c0_i32_883 = arith.constant 0 : i32
    %964 = tpu.memref_slice %arg8[%c7_i32_878, %c4_i32_882, %c0_i32_883] : memref<8x8x128xf32, #tpu.memory_space<vmem>> -> memref<1x1x128xf32, #tpu.memory_space<vmem>>
    %965 = tpu.memref_squeeze %964 : memref<1x1x128xf32, #tpu.memory_space<vmem>> -> memref<1x128xf32, #tpu.memory_space<vmem>>
    %966 = tpu.memref_slice %arg9[%c7_i32_879] : memref<8x!tpu.dma_semaphore, #tpu.memory_space<semaphore_mem>> -> memref<1x!tpu.dma_semaphore, #tpu.memory_space<semaphore_mem>>
    %967 = tpu.memref_squeeze %966 : memref<1x!tpu.dma_semaphore, #tpu.memory_space<semaphore_mem>> -> memref<!tpu.dma_semaphore, #tpu.memory_space<semaphore_mem>>
    tpu.wait_dma2 semaphore(%967 : memref<!tpu.dma_semaphore, #tpu.memory_space<semaphore_mem>>) src(%963 : memref<1x128xf32, #tpu.memory_space<any>>) dst(%965 : memref<1x128xf32, #tpu.memory_space<vmem>>)
    %c7_i32_884 = arith.constant 7 : i32
    %c7_i32_885 = arith.constant 7 : i32
    %c0_i32_886 = arith.constant 0 : i32
    %c0_i32_887 = arith.constant 0 : i32
    %968 = tpu.memref_slice %arg2[%c0_i32_886, %c0_i32_887] : memref<100x128xf32, #tpu.memory_space<any>> -> memref<1x128xf32, #tpu.memory_space<any>>
    %c5_i32_888 = arith.constant 5 : i32
    %c0_i32_889 = arith.constant 0 : i32
    %969 = tpu.memref_slice %arg8[%c7_i32_884, %c5_i32_888, %c0_i32_889] : memref<8x8x128xf32, #tpu.memory_space<vmem>> -> memref<1x1x128xf32, #tpu.memory_space<vmem>>
    %970 = tpu.memref_squeeze %969 : memref<1x1x128xf32, #tpu.memory_space<vmem>> -> memref<1x128xf32, #tpu.memory_space<vmem>>
    %971 = tpu.memref_slice %arg9[%c7_i32_885] : memref<8x!tpu.dma_semaphore, #tpu.memory_space<semaphore_mem>> -> memref<1x!tpu.dma_semaphore, #tpu.memory_space<semaphore_mem>>
    %972 = tpu.memref_squeeze %971 : memref<1x!tpu.dma_semaphore, #tpu.memory_space<semaphore_mem>> -> memref<!tpu.dma_semaphore, #tpu.memory_space<semaphore_mem>>
    tpu.wait_dma2 semaphore(%972 : memref<!tpu.dma_semaphore, #tpu.memory_space<semaphore_mem>>) src(%968 : memref<1x128xf32, #tpu.memory_space<any>>) dst(%970 : memref<1x128xf32, #tpu.memory_space<vmem>>)
    %c7_i32_890 = arith.constant 7 : i32
    %c7_i32_891 = arith.constant 7 : i32
    %c0_i32_892 = arith.constant 0 : i32
    %c0_i32_893 = arith.constant 0 : i32
    %973 = tpu.memref_slice %arg2[%c0_i32_892, %c0_i32_893] : memref<100x128xf32, #tpu.memory_space<any>> -> memref<1x128xf32, #tpu.memory_space<any>>
    %c6_i32_894 = arith.constant 6 : i32
    %c0_i32_895 = arith.constant 0 : i32
    %974 = tpu.memref_slice %arg8[%c7_i32_890, %c6_i32_894, %c0_i32_895] : memref<8x8x128xf32, #tpu.memory_space<vmem>> -> memref<1x1x128xf32, #tpu.memory_space<vmem>>
    %975 = tpu.memref_squeeze %974 : memref<1x1x128xf32, #tpu.memory_space<vmem>> -> memref<1x128xf32, #tpu.memory_space<vmem>>
    %976 = tpu.memref_slice %arg9[%c7_i32_891] : memref<8x!tpu.dma_semaphore, #tpu.memory_space<semaphore_mem>> -> memref<1x!tpu.dma_semaphore, #tpu.memory_space<semaphore_mem>>
    %977 = tpu.memref_squeeze %976 : memref<1x!tpu.dma_semaphore, #tpu.memory_space<semaphore_mem>> -> memref<!tpu.dma_semaphore, #tpu.memory_space<semaphore_mem>>
    tpu.wait_dma2 semaphore(%977 : memref<!tpu.dma_semaphore, #tpu.memory_space<semaphore_mem>>) src(%973 : memref<1x128xf32, #tpu.memory_space<any>>) dst(%975 : memref<1x128xf32, #tpu.memory_space<vmem>>)
    %c7_i32_896 = arith.constant 7 : i32
    %c7_i32_897 = arith.constant 7 : i32
    %c0_i32_898 = arith.constant 0 : i32
    %c0_i32_899 = arith.constant 0 : i32
    %978 = tpu.memref_slice %arg2[%c0_i32_898, %c0_i32_899] : memref<100x128xf32, #tpu.memory_space<any>> -> memref<1x128xf32, #tpu.memory_space<any>>
    %c7_i32_900 = arith.constant 7 : i32
    %c0_i32_901 = arith.constant 0 : i32
    %979 = tpu.memref_slice %arg8[%c7_i32_896, %c7_i32_900, %c0_i32_901] : memref<8x8x128xf32, #tpu.memory_space<vmem>> -> memref<1x1x128xf32, #tpu.memory_space<vmem>>
    %980 = tpu.memref_squeeze %979 : memref<1x1x128xf32, #tpu.memory_space<vmem>> -> memref<1x128xf32, #tpu.memory_space<vmem>>
    %981 = tpu.memref_slice %arg9[%c7_i32_897] : memref<8x!tpu.dma_semaphore, #tpu.memory_space<semaphore_mem>> -> memref<1x!tpu.dma_semaphore, #tpu.memory_space<semaphore_mem>>
    %982 = tpu.memref_squeeze %981 : memref<1x!tpu.dma_semaphore, #tpu.memory_space<semaphore_mem>> -> memref<!tpu.dma_semaphore, #tpu.memory_space<semaphore_mem>>
    tpu.wait_dma2 semaphore(%982 : memref<!tpu.dma_semaphore, #tpu.memory_space<semaphore_mem>>) src(%978 : memref<1x128xf32, #tpu.memory_space<any>>) dst(%980 : memref<1x128xf32, #tpu.memory_space<vmem>>)
    %c7 = arith.constant 7 : index
    %c0_902 = arith.constant 0 : index
    %c0_903 = arith.constant 0 : index
    %983 = vector.load %arg8[%c7, %c0_902, %c0_903] : memref<8x8x128xf32, #tpu.memory_space<vmem>>, vector<1x8x128xf32>
    %984 = vector.shape_cast %983 : vector<1x8x128xf32> to vector<8x128xf32>
    %985 = arith.addf %942, %984 : vector<8x128xf32>
    %cst_904 = arith.constant 1.250000e-01 : f32
    %986 = vector.broadcast %cst_904 : f32 to vector<8x128xf32>
    %987 = arith.mulf %985, %986 : vector<8x128xf32>
    %988 = arith.truncf %987 : vector<8x128xf32> to vector<8x128xbf16>
    %c0_905 = arith.constant 0 : index
    %c0_906 = arith.constant 0 : index
    %989 = vector.load %arg3[%c0_905, %c0_906] : memref<128x128xbf16, #tpu.memory_space<vmem>>, vector<128x128xbf16>
    %cst_907 = arith.constant dense<0.000000e+00> : vector<8x128xf32>
    %990 = tpu.matmul %988, %989, %cst_907 {dimension_numbers = #tpu.dot_dimension_numbers<[1], [0], [0], [1], [0, 0, 1, 1], [], []>} : vector<8x128xbf16>, vector<128x128xbf16>, vector<8x128xf32> -> vector<8x128xf32>
    %c0_908 = arith.constant 0 : index
    %c0_909 = arith.constant 0 : index
    %991 = vector.load %arg4[%c0_908, %c0_909] : memref<1x128xf32, #tpu.memory_space<vmem>>, vector<1x128xf32>
    %992 = vector.broadcast %991 : vector<1x128xf32> to vector<8x128xf32>
    %993 = arith.addf %990, %992 : vector<8x128xf32>
    %994 = math.tanh %993 : vector<8x128xf32>
    %995 = arith.truncf %994 : vector<8x128xf32> to vector<8x128xbf16>
    %c0_910 = arith.constant 0 : index
    %c0_911 = arith.constant 0 : index
    %996 = vector.load %arg5[%c0_910, %c0_911] : memref<128x128xbf16, #tpu.memory_space<vmem>>, vector<128x128xbf16>
    %cst_912 = arith.constant dense<0.000000e+00> : vector<8x128xf32>
    %997 = tpu.matmul %995, %996, %cst_912 {dimension_numbers = #tpu.dot_dimension_numbers<[1], [0], [0], [1], [0, 0, 1, 1], [], []>} : vector<8x128xbf16>, vector<128x128xbf16>, vector<8x128xf32> -> vector<8x128xf32>
    %c0_913 = arith.constant 0 : index
    %c0_914 = arith.constant 0 : index
    %998 = vector.load %arg6[%c0_913, %c0_914] : memref<1x128xf32, #tpu.memory_space<vmem>>, vector<1x128xf32>
    %999 = vector.broadcast %998 : vector<1x128xf32> to vector<8x128xf32>
    %1000 = arith.addf %997, %999 : vector<8x128xf32>
    %c0_915 = arith.constant 0 : index
    %c0_916 = arith.constant 0 : index
    %1001 = vector.load %arg7[%c0_915, %c0_916] : memref<8x128xf32, #tpu.memory_space<vmem>>, vector<8x128xf32>
    tpu.vector_store %arg7[%c0_915, %c0_916], %1000 {strides = array<i32>} : memref<8x128xf32, #tpu.memory_space<vmem>>, vector<8x128xf32>,
    return
  }
  func.func @transform_1(%arg0: i32, %arg1: memref<64xi32, #tpu.memory_space<smem>>) -> (i32, i32) {
    %c0_i32 = arith.constant 0 : i32
    %c0_i32_0 = arith.constant 0 : i32
    %c0_i32_1 = arith.constant 0 : i32
    return %c0_i32, %c0_i32_0 : i32, i32
  }
  func.func @transform_2(%arg0: i32, %arg1: memref<64xi32, #tpu.memory_space<smem>>) -> (i32, i32) {
    %c0_i32 = arith.constant 0 : i32
    %c0_i32_0 = arith.constant 0 : i32
    %c0_i32_1 = arith.constant 0 : i32
    return %c0_i32, %c0_i32_0 : i32, i32
  }
  func.func @transform_3(%arg0: i32, %arg1: memref<64xi32, #tpu.memory_space<smem>>) -> (i32, i32) {
    %c0_i32 = arith.constant 0 : i32
    %c0_i32_0 = arith.constant 0 : i32
    %c0_i32_1 = arith.constant 0 : i32
    return %c0_i32, %c0_i32_0 : i32, i32
  }
  func.func @transform_4(%arg0: i32, %arg1: memref<64xi32, #tpu.memory_space<smem>>) -> (i32, i32) {
    %c0_i32 = arith.constant 0 : i32
    %c0_i32_0 = arith.constant 0 : i32
    %c0_i32_1 = arith.constant 0 : i32
    return %c0_i32, %c0_i32_0 : i32, i32
  }
  func.func @transform_5(%arg0: i32, %arg1: memref<64xi32, #tpu.memory_space<smem>>) -> (i32, i32) {
    %c0_i32 = arith.constant 0 : i32
    %c0_i32_0 = arith.constant 0 : i32
    return %arg0, %c0_i32 : i32, i32
  }
}

</mosaic_0001>

<llo_original>
// kernel: tpu_custom_call.1
$region0: #{tpu_custom_call.1}
  #allocation0 [shape = 'u32[]', space=smem, size = 0x4, offset = 0x4, fixed_abs, tag = 'smem constant byte address 0x4 - core index']
  #allocation1 [shape = 'u32[144,128]{1,0:T(1,128)}', space=vmem, size = 0x12000, scoped, tag = 'internal scratch']
  #allocation2 [shape = 'f32[8,8,128]{2,1,0:T(8,128)}', space=vmem, size = 0x8000, scoped, tag = 'scratch operand']
  #allocation3 [shape = 's32[8]{0}', space=sflag, size = 0x20, scoped, tag = 'scratch operand']
  #allocation4 [shape = 's32[1]{0}', space=sflag, size = 0x4, scoped, tag = 'scoped memory for tpu_custom_call.1']
  #allocation5 [shape = 'u8[512]{0}', space=smem, size = 0x200, scoped, tag = 'prefetched SMEM operand 0']
  #allocation12 [shape = 's32[]', space=sflag, size = 0x4, offset = 0, fixed_abs, tag = 'sflag constant byte address 0x0 - dummy sync flag']
  #allocation13 [shape = 's32[]', space=sflag, size = 0x4, offset = 0, fixed_abs, tag = 'sflag constant byte address 0x0 - dummy sync flag']
  #allocation14 [shape = 'u32[]', space=smem, size = 0x4, offset = 0x44, fixed_abs, tag = 'smem constant byte address 0x44 - assertion arg 0']
  #allocation15 [shape = 'u32[]', space=smem, size = 0x4, offset = 0x48, fixed_abs, tag = 'smem constant byte address 0x48 - assertion arg 1']
  #allocation16 [shape = 's32[]', space=sflag, size = 0x4, offset = 0, fixed_abs, tag = 'sflag constant byte address 0x0 - dummy sync flag']
  #allocation17 [shape = 's32[]', space=sflag, size = 0x4, offset = 0, fixed_abs, tag = 'sflag constant byte address 0x0 - dummy sync flag']
  #allocation18 [shape = 's32[]', space=sflag, size = 0x4, offset = 0, fixed_abs, tag = 'sflag constant byte address 0x0 - dummy sync flag']
  #allocation19 [shape = 's32[]', space=sflag, size = 0x4, offset = 0, fixed_abs, tag = 'sflag constant byte address 0x0 - dummy sync flag']
  #allocation20 [shape = 's32[]', space=sflag, size = 0x4, offset = 0, fixed_abs, tag = 'sflag constant byte address 0x0 - dummy sync flag']
  #allocation21 [shape = 's32[]', space=sflag, size = 0x4, offset = 0, fixed_abs, tag = 'sflag constant byte address 0x0 - dummy sync flag']
  #allocation22 [shape = 's32[]', space=sflag, size = 0x4, offset = 0, fixed_abs, tag = 'sflag constant byte address 0x0 - dummy sync flag']
  #allocation23 [shape = 's32[]', space=sflag, size = 0x4, offset = 0, fixed_abs, tag = 'sflag constant byte address 0x0 - dummy sync flag']
  #allocation24 [shape = 's32[]', space=sflag, size = 0x4, offset = 0, fixed_abs, tag = 'sflag constant byte address 0x0 - dummy sync flag']
  #allocation25 [shape = 's32[]', space=sflag, size = 0x4, offset = 0, fixed_abs, tag = 'sflag constant byte address 0x0 - dummy sync flag']
  #allocation26 [shape = 's32[]', space=sflag, size = 0x4, offset = 0, fixed_abs, tag = 'sflag constant byte address 0x0 - dummy sync flag']
  #allocation27 [shape = 's32[]', space=sflag, size = 0x4, offset = 0, fixed_abs, tag = 'sflag constant byte address 0x0 - dummy sync flag']
  #allocation28 [shape = 's32[]', space=sflag, size = 0x4, offset = 0, fixed_abs, tag = 'sflag constant byte address 0x0 - dummy sync flag']
  #allocation29 [shape = 's32[]', space=sflag, size = 0x4, offset = 0, fixed_abs, tag = 'sflag constant byte address 0x0 - dummy sync flag']
  #allocation30 [shape = 's32[]', space=sflag, size = 0x4, offset = 0, fixed_abs, tag = 'sflag constant byte address 0x0 - dummy sync flag']
  #allocation31 [shape = 's32[]', space=sflag, size = 0x4, offset = 0, fixed_abs, tag = 'sflag constant byte address 0x0 - dummy sync flag']
  #allocation32 [shape = 's32[]', space=sflag, size = 0x4, offset = 0, fixed_abs, tag = 'sflag constant byte address 0x0 - dummy sync flag']
  #allocation33 [shape = 's32[]', space=sflag, size = 0x4, offset = 0, fixed_abs, tag = 'sflag constant byte address 0x0 - dummy sync flag']
  #allocation34 [shape = 's32[]', space=sflag, size = 0x4, offset = 0, fixed_abs, tag = 'sflag constant byte address 0x0 - dummy sync flag']
  #allocation35 [shape = 's32[]', space=sflag, size = 0x4, offset = 0, fixed_abs, tag = 'sflag constant byte address 0x0 - dummy sync flag']
  #allocation36 [shape = 's32[]', space=sflag, size = 0x4, offset = 0, fixed_abs, tag = 'sflag constant byte address 0x0 - dummy sync flag']
  #allocation37 [shape = 's32[]', space=sflag, size = 0x4, offset = 0, fixed_abs, tag = 'sflag constant byte address 0x0 - dummy sync flag']
  #allocation38 [shape = 's32[]', space=sflag, size = 0x4, offset = 0, fixed_abs, tag = 'sflag constant byte address 0x0 - dummy sync flag']
  #allocation39 [shape = 's32[]', space=sflag, size = 0x4, offset = 0, fixed_abs, tag = 'sflag constant byte address 0x0 - dummy sync flag']
  #allocation40 [shape = 's32[]', space=sflag, size = 0x4, offset = 0, fixed_abs, tag = 'sflag constant byte address 0x0 - dummy sync flag']
  #allocation41 [shape = 's32[]', space=sflag, size = 0x4, offset = 0, fixed_abs, tag = 'sflag constant byte address 0x0 - dummy sync flag']
  #allocation42 [shape = 's32[]', space=sflag, size = 0x4, offset = 0, fixed_abs, tag = 'sflag constant byte address 0x0 - dummy sync flag']
  #allocation43 [shape = 's32[]', space=sflag, size = 0x4, offset = 0, fixed_abs, tag = 'sflag constant byte address 0x0 - dummy sync flag']
  #allocation44 [shape = 's32[]', space=sflag, size = 0x4, offset = 0, fixed_abs, tag = 'sflag constant byte address 0x0 - dummy sync flag']
  #allocation45 [shape = 's32[]', space=sflag, size = 0x4, offset = 0, fixed_abs, tag = 'sflag constant byte address 0x0 - dummy sync flag']
  #allocation46 [shape = 's32[]', space=sflag, size = 0x4, offset = 0, fixed_abs, tag = 'sflag constant byte address 0x0 - dummy sync flag']
  #allocation47 [shape = 's32[]', space=sflag, size = 0x4, offset = 0, fixed_abs, tag = 'sflag constant byte address 0x0 - dummy sync flag']
  #allocation48 [shape = 's32[]', space=sflag, size = 0x4, offset = 0, fixed_abs, tag = 'sflag constant byte address 0x0 - dummy sync flag']
  #allocation49 [shape = 's32[]', space=sflag, size = 0x4, offset = 0, fixed_abs, tag = 'sflag constant byte address 0x0 - dummy sync flag']
  #allocation50 [shape = 's32[]', space=sflag, size = 0x4, offset = 0, fixed_abs, tag = 'sflag constant byte address 0x0 - dummy sync flag']
  #allocation51 [shape = 's32[]', space=sflag, size = 0x4, offset = 0, fixed_abs, tag = 'sflag constant byte address 0x0 - dummy sync flag']
  #allocation52 [shape = 's32[]', space=sflag, size = 0x4, offset = 0, fixed_abs, tag = 'sflag constant byte address 0x0 - dummy sync flag']
  #allocation53 [shape = 's32[]', space=sflag, size = 0x4, offset = 0, fixed_abs, tag = 'sflag constant byte address 0x0 - dummy sync flag']
  #allocation54 [shape = 's32[]', space=sflag, size = 0x4, offset = 0, fixed_abs, tag = 'sflag constant byte address 0x0 - dummy sync flag']
  #allocation55 [shape = 's32[]', space=sflag, size = 0x4, offset = 0, fixed_abs, tag = 'sflag constant byte address 0x0 - dummy sync flag']
  #allocation56 [shape = 's32[]', space=sflag, size = 0x4, offset = 0, fixed_abs, tag = 'sflag constant byte address 0x0 - dummy sync flag']
  #allocation57 [shape = 's32[]', space=sflag, size = 0x4, offset = 0, fixed_abs, tag = 'sflag constant byte address 0x0 - dummy sync flag']
  #allocation58 [shape = 's32[]', space=sflag, size = 0x4, offset = 0, fixed_abs, tag = 'sflag constant byte address 0x0 - dummy sync flag']
  #allocation59 [shape = 's32[]', space=sflag, size = 0x4, offset = 0, fixed_abs, tag = 'sflag constant byte address 0x0 - dummy sync flag']
  #allocation60 [shape = 's32[]', space=sflag, size = 0x4, offset = 0, fixed_abs, tag = 'sflag constant byte address 0x0 - dummy sync flag']
  #allocation61 [shape = 's32[]', space=sflag, size = 0x4, offset = 0, fixed_abs, tag = 'sflag constant byte address 0x0 - dummy sync flag']
  #allocation62 [shape = 's32[]', space=sflag, size = 0x4, offset = 0, fixed_abs, tag = 'sflag constant byte address 0x0 - dummy sync flag']
  #allocation63 [shape = 's32[]', space=sflag, size = 0x4, offset = 0, fixed_abs, tag = 'sflag constant byte address 0x0 - dummy sync flag']
  #allocation64 [shape = 's32[]', space=sflag, size = 0x4, offset = 0, fixed_abs, tag = 'sflag constant byte address 0x0 - dummy sync flag']
  #allocation65 [shape = 's32[]', space=sflag, size = 0x4, offset = 0, fixed_abs, tag = 'sflag constant byte address 0x0 - dummy sync flag']
  #allocation66 [shape = 's32[]', space=sflag, size = 0x4, offset = 0, fixed_abs, tag = 'sflag constant byte address 0x0 - dummy sync flag']
  #allocation67 [shape = 's32[]', space=sflag, size = 0x4, offset = 0, fixed_abs, tag = 'sflag constant byte address 0x0 - dummy sync flag']
  #allocation68 [shape = 's32[]', space=sflag, size = 0x4, offset = 0, fixed_abs, tag = 'sflag constant byte address 0x0 - dummy sync flag']
  #allocation69 [shape = 's32[]', space=sflag, size = 0x4, offset = 0, fixed_abs, tag = 'sflag constant byte address 0x0 - dummy sync flag']
  #allocation70 [shape = 's32[]', space=sflag, size = 0x4, offset = 0, fixed_abs, tag = 'sflag constant byte address 0x0 - dummy sync flag']
  #allocation71 [shape = 's32[]', space=sflag, size = 0x4, offset = 0, fixed_abs, tag = 'sflag constant byte address 0x0 - dummy sync flag']
  #allocation72 [shape = 's32[]', space=sflag, size = 0x4, offset = 0, fixed_abs, tag = 'sflag constant byte address 0x0 - dummy sync flag']
  #allocation73 [shape = 's32[]', space=sflag, size = 0x4, offset = 0, fixed_abs, tag = 'sflag constant byte address 0x0 - dummy sync flag']
  #allocation74 [shape = 's32[]', space=sflag, size = 0x4, offset = 0, fixed_abs, tag = 'sflag constant byte address 0x0 - dummy sync flag']
  #allocation75 [shape = 's32[]', space=sflag, size = 0x4, offset = 0, fixed_abs, tag = 'sflag constant byte address 0x0 - dummy sync flag']
  #allocation76 [shape = 's32[]', space=sflag, size = 0x4, offset = 0, fixed_abs, tag = 'sflag constant byte address 0x0 - dummy sync flag']
  #allocation77 [shape = 's32[]', space=sflag, size = 0x4, offset = 0, fixed_abs, tag = 'sflag constant byte address 0x0 - dummy sync flag']
  #allocation78 [shape = 's32[]', space=sflag, size = 0x4, offset = 0, fixed_abs, tag = 'sflag constant byte address 0x0 - dummy sync flag']
  #allocation79 [shape = 's32[]', space=sflag, size = 0x4, offset = 0, fixed_abs, tag = 'sflag constant byte address 0x0 - dummy sync flag']
  #allocation80 [shape = 's32[]', space=sflag, size = 0x4, offset = 0, fixed_abs, tag = 'sflag constant byte address 0x0 - dummy sync flag']
  #allocation81 [shape = 's32[]', space=sflag, size = 0x4, offset = 0, fixed_abs, tag = 'sflag constant byte address 0x0 - dummy sync flag']
  #allocation82 [shape = 's32[]', space=sflag, size = 0x4, offset = 0, fixed_abs, tag = 'sflag constant byte address 0x0 - dummy sync flag']
  #allocation83 [shape = 's32[]', space=sflag, size = 0x4, offset = 0, fixed_abs, tag = 'sflag constant byte address 0x0 - dummy sync flag']
  #allocation84 [shape = 's32[]', space=sflag, size = 0x4, offset = 0, fixed_abs, tag = 'sflag constant byte address 0x0 - dummy sync flag']
  #allocation85 [shape = 's32[]', space=sflag, size = 0x4, offset = 0, fixed_abs, tag = 'sflag constant byte address 0x0 - dummy sync flag']
  #allocation86 [shape = 's32[]', space=sflag, size = 0x4, offset = 0, fixed_abs, tag = 'sflag constant byte address 0x0 - dummy sync flag']
  #allocation87 [shape = 's32[]', space=sflag, size = 0x4, offset = 0, fixed_abs, tag = 'sflag constant byte address 0x0 - dummy sync flag']
  #allocation88 [shape = 's32[]', space=sflag, size = 0x4, offset = 0, fixed_abs, tag = 'sflag constant byte address 0x0 - dummy sync flag']
  #allocation89 [shape = 's32[]', space=sflag, size = 0x4, offset = 0, fixed_abs, tag = 'sflag constant byte address 0x0 - dummy sync flag']
  #allocation90 [shape = 's32[]', space=sflag, size = 0x4, offset = 0, fixed_abs, tag = 'sflag constant byte address 0x0 - dummy sync flag']
  #allocation91 [shape = 's32[]', space=sflag, size = 0x4, offset = 0, fixed_abs, tag = 'sflag constant byte address 0x0 - dummy sync flag']
  #allocation92 [shape = 's32[]', space=sflag, size = 0x4, offset = 0, fixed_abs, tag = 'sflag constant byte address 0x0 - dummy sync flag']
  #allocation93 [shape = 's32[]', space=sflag, size = 0x4, offset = 0, fixed_abs, tag = 'sflag constant byte address 0x0 - dummy sync flag']
  #allocation94 [shape = 's32[]', space=sflag, size = 0x4, offset = 0, fixed_abs, tag = 'sflag constant byte address 0x0 - dummy sync flag']
  #allocation95 [shape = 's32[]', space=sflag, size = 0x4, offset = 0, fixed_abs, tag = 'sflag constant byte address 0x0 - dummy sync flag']
  #allocation96 [shape = 's32[]', space=sflag, size = 0x4, offset = 0, fixed_abs, tag = 'sflag constant byte address 0x0 - dummy sync flag']
  #allocation97 [shape = 's32[]', space=sflag, size = 0x4, offset = 0, fixed_abs, tag = 'sflag constant byte address 0x0 - dummy sync flag']
  #allocation98 [shape = 's32[]', space=sflag, size = 0x4, offset = 0, fixed_abs, tag = 'sflag constant byte address 0x0 - dummy sync flag']
  #allocation99 [shape = 's32[]', space=sflag, size = 0x4, offset = 0, fixed_abs, tag = 'sflag constant byte address 0x0 - dummy sync flag']
  #allocation100 [shape = 's32[]', space=sflag, size = 0x4, offset = 0, fixed_abs, tag = 'sflag constant byte address 0x0 - dummy sync flag']
  #allocation101 [shape = 's32[]', space=sflag, size = 0x4, offset = 0, fixed_abs, tag = 'sflag constant byte address 0x0 - dummy sync flag']
  #allocation102 [shape = 's32[]', space=sflag, size = 0x4, offset = 0, fixed_abs, tag = 'sflag constant byte address 0x0 - dummy sync flag']
  #allocation103 [shape = 's32[]', space=sflag, size = 0x4, offset = 0, fixed_abs, tag = 'sflag constant byte address 0x0 - dummy sync flag']
  #allocation104 [shape = 's32[]', space=sflag, size = 0x4, offset = 0, fixed_abs, tag = 'sflag constant byte address 0x0 - dummy sync flag']
  #allocation105 [shape = 's32[]', space=sflag, size = 0x4, offset = 0, fixed_abs, tag = 'sflag constant byte address 0x0 - dummy sync flag']
  #allocation106 [shape = 's32[]', space=sflag, size = 0x4, offset = 0, fixed_abs, tag = 'sflag constant byte address 0x0 - dummy sync flag']
  #allocation107 [shape = 's32[]', space=sflag, size = 0x4, offset = 0, fixed_abs, tag = 'sflag constant byte address 0x0 - dummy sync flag']
  #allocation108 [shape = 's32[]', space=sflag, size = 0x4, offset = 0, fixed_abs, tag = 'sflag constant byte address 0x0 - dummy sync flag']
  #allocation109 [shape = 's32[]', space=sflag, size = 0x4, offset = 0, fixed_abs, tag = 'sflag constant byte address 0x0 - dummy sync flag']
  #allocation110 [shape = 's32[]', space=sflag, size = 0x4, offset = 0, fixed_abs, tag = 'sflag constant byte address 0x0 - dummy sync flag']
  #allocation111 [shape = 's32[]', space=sflag, size = 0x4, offset = 0, fixed_abs, tag = 'sflag constant byte address 0x0 - dummy sync flag']
  #allocation112 [shape = 's32[]', space=sflag, size = 0x4, offset = 0, fixed_abs, tag = 'sflag constant byte address 0x0 - dummy sync flag']
  #allocation113 [shape = 's32[]', space=sflag, size = 0x4, offset = 0, fixed_abs, tag = 'sflag constant byte address 0x0 - dummy sync flag']
  #allocation114 [shape = 's32[]', space=sflag, size = 0x4, offset = 0, fixed_abs, tag = 'sflag constant byte address 0x0 - dummy sync flag']
  #allocation115 [shape = 's32[]', space=sflag, size = 0x4, offset = 0, fixed_abs, tag = 'sflag constant byte address 0x0 - dummy sync flag']
  #allocation116 [shape = 's32[]', space=sflag, size = 0x4, offset = 0, fixed_abs, tag = 'sflag constant byte address 0x0 - dummy sync flag']
  #allocation117 [shape = 's32[]', space=sflag, size = 0x4, offset = 0, fixed_abs, tag = 'sflag constant byte address 0x0 - dummy sync flag']
  #allocation118 [shape = 's32[]', space=sflag, size = 0x4, offset = 0, fixed_abs, tag = 'sflag constant byte address 0x0 - dummy sync flag']
  #allocation119 [shape = 's32[]', space=sflag, size = 0x4, offset = 0, fixed_abs, tag = 'sflag constant byte address 0x0 - dummy sync flag']
  #allocation120 [shape = 's32[]', space=sflag, size = 0x4, offset = 0, fixed_abs, tag = 'sflag constant byte address 0x0 - dummy sync flag']
  #allocation121 [shape = 's32[]', space=sflag, size = 0x4, offset = 0, fixed_abs, tag = 'sflag constant byte address 0x0 - dummy sync flag']
  #allocation122 [shape = 's32[]', space=sflag, size = 0x4, offset = 0, fixed_abs, tag = 'sflag constant byte address 0x0 - dummy sync flag']
  #allocation123 [shape = 's32[]', space=sflag, size = 0x4, offset = 0, fixed_abs, tag = 'sflag constant byte address 0x0 - dummy sync flag']
  #allocation124 [shape = 's32[]', space=sflag, size = 0x4, offset = 0, fixed_abs, tag = 'sflag constant byte address 0x0 - dummy sync flag']
  #allocation125 [shape = 's32[]', space=sflag, size = 0x4, offset = 0, fixed_abs, tag = 'sflag constant byte address 0x0 - dummy sync flag']
  #allocation126 [shape = 's32[]', space=sflag, size = 0x4, offset = 0, fixed_abs, tag = 'sflag constant byte address 0x0 - dummy sync flag']
  #allocation127 [shape = 's32[]', space=sflag, size = 0x4, offset = 0, fixed_abs, tag = 'sflag constant byte address 0x0 - dummy sync flag']
  #allocation128 [shape = 's32[]', space=sflag, size = 0x4, offset = 0, fixed_abs, tag = 'sflag constant byte address 0x0 - dummy sync flag']
  #allocation129 [shape = 's32[]', space=sflag, size = 0x4, offset = 0, fixed_abs, tag = 'sflag constant byte address 0x0 - dummy sync flag']
  #allocation130 [shape = 's32[]', space=sflag, size = 0x4, offset = 0, fixed_abs, tag = 'sflag constant byte address 0x0 - dummy sync flag']
  #allocation131 [shape = 's32[]', space=sflag, size = 0x4, offset = 0, fixed_abs, tag = 'sflag constant byte address 0x0 - dummy sync flag']
  #allocation132 [shape = 's32[]', space=sflag, size = 0x4, offset = 0, fixed_abs, tag = 'sflag constant byte address 0x0 - dummy sync flag']
  #allocation133 [shape = 's32[]', space=sflag, size = 0x4, offset = 0, fixed_abs, tag = 'sflag constant byte address 0x0 - dummy sync flag']
  #allocation134 [shape = 's32[]', space=sflag, size = 0x4, offset = 0, fixed_abs, tag = 'sflag constant byte address 0x0 - dummy sync flag']
  #allocation135 [shape = 's32[]', space=sflag, size = 0x4, offset = 0, fixed_abs, tag = 'sflag constant byte address 0x0 - dummy sync flag']
  #allocation136 [shape = 's32[]', space=sflag, size = 0x4, offset = 0, fixed_abs, tag = 'sflag constant byte address 0x0 - dummy sync flag']
  #allocation137 [shape = 's32[]', space=sflag, size = 0x4, offset = 0, fixed_abs, tag = 'sflag constant byte address 0x0 - dummy sync flag']
  #allocation138 [shape = 's32[]', space=sflag, size = 0x4, offset = 0, fixed_abs, tag = 'sflag constant byte address 0x0 - dummy sync flag']
  #allocation139 [shape = 's32[]', space=sflag, size = 0x4, offset = 0, fixed_abs, tag = 'sflag constant byte address 0x0 - dummy sync flag']
  #allocation140 [shape = 's32[]', space=sflag, size = 0x4, offset = 0, fixed_abs, tag = 'sflag constant byte address 0x0 - dummy sync flag']
  #allocation141 [shape = 's32[]', space=sflag, size = 0x4, offset = 0, fixed_abs, tag = 'sflag constant byte address 0x0 - dummy sync flag']
  %s0 = inlined_call_operand.hbm [shape: s32[64], index: 0, kind: input, shape index: {}]
  %s1 = inlined_call_operand.hbm [shape: f32[100,128], index: 1, kind: input, shape index: {}]
  %s2 = inlined_call_operand.hbm [shape: bf16[128,128], index: 2, kind: input, shape index: {}]
  %s3 = inlined_call_operand.vmem [shape: f32[1,128], index: 3, kind: input, shape index: {}]
  %s4 = inlined_call_operand.hbm [shape: bf16[128,128], index: 4, kind: input, shape index: {}]
  %s5 = inlined_call_operand.vmem [shape: f32[1,128], index: 5, kind: input, shape index: {}]
  %s6 = inlined_call_operand.hbm [shape: f32[8,128], index: 6, kind: output, shape index: {}]
  %s7 = sld [smem:[#allocation0]]
  $region290: #{tpu_custom_call.1} parent=0
    _
  %s9 = ssub.s32 1, %s7
  %s10 = scalar_select 0, %s9, %s7
  %12 = dma.hbm_to_smem %s0, 16, [#allocation5], [#allocation4]
  %13 = dma.done [#allocation4], 16
  %14 = sfence
  $region1: #{tpu_custom_call.1} parent=0
    #allocation6 [shape = 'u8[32768]{0}', space=vmem, size = 0x8000, scoped, tag = 'input window, operand 2, single buffered']
    #allocation7 [shape = 's32[1]{0}', space=sflag, size = 0x4, scoped, tag = 'scoped memory for tpu_custom_call.1']
    #allocation8 [shape = 's32[1]{0}', space=sflag, size = 0x4, scoped, tag = 'scoped memory for tpu_custom_call.1']
    #allocation9 [shape = 'u8[32768]{0}', space=vmem, size = 0x8000, scoped, tag = 'input window, operand 4, single buffered']
    #allocation10 [shape = 's32[1]{0}', space=sflag, size = 0x4, scoped, tag = 'scoped memory for tpu_custom_call.1']
    #allocation11 [shape = 'u8[4096]{0}', space=vmem, size = 0x1000, scoped, tag = 'output window, operand 0, single buffered']
    %15 = vsyncpa [#allocation7], 0
    %16 = vsyncpa [#allocation10], 0
    %17 = vsyncpa [#allocation8], 0
    // Predicated region
    $region2: #{tpu_custom_call.1} parent=1 // pred_check
      _
    $region3: #{tpu_custom_call.1} parent=1 // pred_check_branch
      %19 = sbr.rel (0) target = $region5
    $region4: #{tpu_custom_call.1} parent=1 // pred_region
      %s21 = ssub.s32 1024, 1024
      %22 = vsyncadd [#allocation7], %s21
      %s23 = sshll.u32 [#allocation6], 4
      %s24 = int_to_ptr.vmem [resolvable:$true] %s23
      %29 = dma.hbm_to_vmem [thread:$0]  %s2, 1024, %s24, [#allocation7], 64, 64, 4
    $region5: #{tpu_custom_call.1} parent=1 // pred_fallthru
      _
    // Predicated region
    $region6: #{tpu_custom_call.1} parent=1 // pred_check
      _
    $region7: #{tpu_custom_call.1} parent=1 // pred_check_branch
      %31 = sbr.rel (0) target = $region9
    $region8: #{tpu_custom_call.1} parent=1 // pred_region
      _
    $region9: #{tpu_custom_call.1} parent=1 // pred_fallthru
      _
    // Predicated region
    $region10: #{tpu_custom_call.1} parent=1 // pred_check
      _
    $region11: #{tpu_custom_call.1} parent=1 // pred_check_branch
      %33 = sbr.rel (0) target = $region13
    $region12: #{tpu_custom_call.1} parent=1 // pred_region
      %s35 = ssub.s32 1024, 1024
      %36 = vsyncadd [#allocation10], %s35
      %s37 = sshll.u32 [#allocation9], 4
      %s38 = int_to_ptr.vmem [resolvable:$true] %s37
      %43 = dma.hbm_to_vmem [thread:$0]  %s4, 1024, %s38, [#allocation10], 64, 64, 4
    $region13: #{tpu_custom_call.1} parent=1 // pred_fallthru
      _
    // Predicated region
    $region14: #{tpu_custom_call.1} parent=1 // pred_check
      _
    $region15: #{tpu_custom_call.1} parent=1 // pred_check_branch
      %45 = sbr.rel (0) target = $region17
    $region16: #{tpu_custom_call.1} parent=1 // pred_region
      _
    $region17: #{tpu_custom_call.1} parent=1 // pred_fallthru
      _
    // Predicated region
    $region18: #{tpu_custom_call.1} parent=1 // pred_check
      _
    $region19: #{tpu_custom_call.1} parent=1 // pred_check_branch
      %47 = sbr.rel (0) target = $region21
    $region20: #{tpu_custom_call.1} parent=1 // pred_region
      %48 = dma.done [#allocation7], 1024
    $region21: #{tpu_custom_call.1} parent=1 // pred_fallthru
      _
    // Predicated region
    $region22: #{tpu_custom_call.1} parent=1 // pred_check
      _
    $region23: #{tpu_custom_call.1} parent=1 // pred_check_branch
      %50 = sbr.rel (0) target = $region25
    $region24: #{tpu_custom_call.1} parent=1 // pred_region
      %51 = dma.done [#allocation10], 1024
    $region25: #{tpu_custom_call.1} parent=1 // pred_fallthru
      _
    %s53 = smul.u32 0, 8
    %s54 = smul.u32 0, 64
    %s55 = sld [smem:[#allocation5 + %s54]]
    %s56 = sadd.s32 %s53, 1
    %s57 = smul.u32 %s56, 8
    %s58 = sld [smem:[#allocation5 + %s57]]
    %s59 = sadd.s32 %s53, 2
    %s60 = smul.u32 %s59, 8
    %s61 = sld [smem:[#allocation5 + %s60]]
    %s62 = sadd.s32 %s53, 3
    %s63 = smul.u32 %s62, 8
    %s64 = sld [smem:[#allocation5 + %s63]]
    %s65 = sadd.s32 %s53, 4
    %s66 = smul.u32 %s65, 8
    %s67 = sld [smem:[#allocation5 + %s66]]
    %s68 = sadd.s32 %s53, 5
    %s69 = smul.u32 %s68, 8
    %s70 = sld [smem:[#allocation5 + %s69]]
    %s71 = sadd.s32 %s53, 6
    %s72 = smul.u32 %s71, 8
    %s73 = sld [smem:[#allocation5 + %s72]]
    %s74 = sadd.s32 %s53, 7
    %s75 = smul.u32 %s74, 8
    %s76 = sld [smem:[#allocation5 + %s75]]
    %s77 = smul.addr %s55, 16
    %s78 = scalar_lea.hbm %s1, %s77
    // Predicated region
    $region26: #{tpu_custom_call.1} parent=1 // pred_check
      _
    $region27: #{tpu_custom_call.1} parent=1 // pred_check_branch
      %80 = sbr.rel target = $region29
    $region28: #{tpu_custom_call.1} parent=1 // pred_region
      %81 = sst [smem:[#allocation14]] [#allocation13]
      %82 = sst [smem:[#allocation15]] [#allocation12]
    $region29: #{tpu_custom_call.1} parent=1 // pred_fallthru
      _
    %84 = shalt.err (0)
    %s86 = sshll.u32 [#allocation2], 4
    %s87 = int_to_ptr.vmem [resolvable:$true] %s86
    %89 = dma.hbm_to_vmem [thread:$0]  %s78, 16, %s87, [#allocation3]
    %s90 = smul.addr %s58, 16
    %s91 = scalar_lea.hbm %s1, %s90
    %s92 = scalar_lea.vmem [#allocation2], 1
    // Predicated region
    $region30: #{tpu_custom_call.1} parent=1 // pred_check
      _
    $region31: #{tpu_custom_call.1} parent=1 // pred_check_branch
      %94 = sbr.rel target = $region33
    $region32: #{tpu_custom_call.1} parent=1 // pred_region
      %95 = sst [smem:[#allocation14]] [#allocation17]
      %96 = sst [smem:[#allocation15]] [#allocation16]
    $region33: #{tpu_custom_call.1} parent=1 // pred_fallthru
      _
    %98 = shalt.err (0)
    %s100 = sshll.u32 %s92, 4
    %s101 = int_to_ptr.vmem [resolvable:$true] %s100
    %103 = dma.hbm_to_vmem [thread:$0]  %s91, 16, %s101, [#allocation3]
    %s104 = smul.addr %s61, 16
    %s105 = scalar_lea.hbm %s1, %s104
    %s106 = scalar_lea.vmem [#allocation2], 2
    // Predicated region
    $region34: #{tpu_custom_call.1} parent=1 // pred_check
      _
    $region35: #{tpu_custom_call.1} parent=1 // pred_check_branch
      %108 = sbr.rel target = $region37
    $region36: #{tpu_custom_call.1} parent=1 // pred_region
      %109 = sst [smem:[#allocation14]] [#allocation19]
      %110 = sst [smem:[#allocation15]] [#allocation18]
    $region37: #{tpu_custom_call.1} parent=1 // pred_fallthru
      _
    %112 = shalt.err (0)
    %s114 = sshll.u32 %s106, 4
    %s115 = int_to_ptr.vmem [resolvable:$true] %s114
    %117 = dma.hbm_to_vmem [thread:$0]  %s105, 16, %s115, [#allocation3]
    %s118 = smul.addr %s64, 16
    %s119 = scalar_lea.hbm %s1, %s118
    %s120 = scalar_lea.vmem [#allocation2], 3
    // Predicated region
    $region38: #{tpu_custom_call.1} parent=1 // pred_check
      _
    $region39: #{tpu_custom_call.1} parent=1 // pred_check_branch
      %122 = sbr.rel target = $region41
    $region40: #{tpu_custom_call.1} parent=1 // pred_region
      %123 = sst [smem:[#allocation14]] [#allocation21]
      %124 = sst [smem:[#allocation15]] [#allocation20]
    $region41: #{tpu_custom_call.1} parent=1 // pred_fallthru
      _
    %126 = shalt.err (0)
    %s128 = sshll.u32 %s120, 4
    %s129 = int_to_ptr.vmem [resolvable:$true] %s128
    %131 = dma.hbm_to_vmem [thread:$0]  %s119, 16, %s129, [#allocation3]
    %s132 = smul.addr %s67, 16
    %s133 = scalar_lea.hbm %s1, %s132
    %s134 = scalar_lea.vmem [#allocation2], 4
    // Predicated region
    $region42: #{tpu_custom_call.1} parent=1 // pred_check
      _
    $region43: #{tpu_custom_call.1} parent=1 // pred_check_branch
      %136 = sbr.rel target = $region45
    $region44: #{tpu_custom_call.1} parent=1 // pred_region
      %137 = sst [smem:[#allocation14]] [#allocation23]
      %138 = sst [smem:[#allocation15]] [#allocation22]
    $region45: #{tpu_custom_call.1} parent=1 // pred_fallthru
      _
    %140 = shalt.err (0)
    %s142 = sshll.u32 %s134, 4
    %s143 = int_to_ptr.vmem [resolvable:$true] %s142
    %145 = dma.hbm_to_vmem [thread:$0]  %s133, 16, %s143, [#allocation3]
    %s146 = smul.addr %s70, 16
    %s147 = scalar_lea.hbm %s1, %s146
    %s148 = scalar_lea.vmem [#allocation2], 5
    // Predicated region
    $region46: #{tpu_custom_call.1} parent=1 // pred_check
      _
    $region47: #{tpu_custom_call.1} parent=1 // pred_check_branch
      %150 = sbr.rel target = $region49
    $region48: #{tpu_custom_call.1} parent=1 // pred_region
      %151 = sst [smem:[#allocation14]] [#allocation25]
      %152 = sst [smem:[#allocation15]] [#allocation24]
    $region49: #{tpu_custom_call.1} parent=1 // pred_fallthru
      _
    %154 = shalt.err (0)
    %s156 = sshll.u32 %s148, 4
    %s157 = int_to_ptr.vmem [resolvable:$true] %s156
    %159 = dma.hbm_to_vmem [thread:$0]  %s147, 16, %s157, [#allocation3]
    %s160 = smul.addr %s73, 16
    %s161 = scalar_lea.hbm %s1, %s160
    %s162 = scalar_lea.vmem [#allocation2], 6
    // Predicated region
    $region50: #{tpu_custom_call.1} parent=1 // pred_check
      _
    $region51: #{tpu_custom_call.1} parent=1 // pred_check_branch
      %164 = sbr.rel target = $region53
    $region52: #{tpu_custom_call.1} parent=1 // pred_region
      %165 = sst [smem:[#allocation14]] [#allocation27]
      %166 = sst [smem:[#allocation15]] [#allocation26]
    $region53: #{tpu_custom_call.1} parent=1 // pred_fallthru
      _
    %168 = shalt.err (0)
    %s170 = sshll.u32 %s162, 4
    %s171 = int_to_ptr.vmem [resolvable:$true] %s170
    %173 = dma.hbm_to_vmem [thread:$0]  %s161, 16, %s171, [#allocation3]
    %s174 = smul.addr %s76, 16
    %s175 = scalar_lea.hbm %s1, %s174
    %s176 = scalar_lea.vmem [#allocation2], 7
    // Predicated region
    $region54: #{tpu_custom_call.1} parent=1 // pred_check
      _
    $region55: #{tpu_custom_call.1} parent=1 // pred_check_branch
      %178 = sbr.rel target = $region57
    $region56: #{tpu_custom_call.1} parent=1 // pred_region
      %179 = sst [smem:[#allocation14]] [#allocation29]
      %180 = sst [smem:[#allocation15]] [#allocation28]
    $region57: #{tpu_custom_call.1} parent=1 // pred_fallthru
      _
    %182 = shalt.err (0)
    %s184 = sshll.u32 %s176, 4
    %s185 = int_to_ptr.vmem [resolvable:$true] %s184
    %187 = dma.hbm_to_vmem [thread:$0]  %s175, 16, %s185, [#allocation3]
    %s188 = sadd.s32 %s54, 1
    %s189 = sld [smem:[#allocation5 + %s188]]
    %s190 = sadd.s32 %s57, 1
    %s191 = sld [smem:[#allocation5 + %s190]]
    %s192 = sadd.s32 %s60, 1
    %s193 = sld [smem:[#allocation5 + %s192]]
    %s194 = sadd.s32 %s63, 1
    %s195 = sld [smem:[#allocation5 + %s194]]
    %s196 = sadd.s32 %s66, 1
    %s197 = sld [smem:[#allocation5 + %s196]]
    %s198 = sadd.s32 %s69, 1
    %s199 = sld [smem:[#allocation5 + %s198]]
    %s200 = sadd.s32 %s72, 1
    %s201 = sld [smem:[#allocation5 + %s200]]
    %s202 = sadd.s32 %s75, 1
    %s203 = sld [smem:[#allocation5 + %s202]]
    %s204 = smul.addr %s189, 16
    %s205 = scalar_lea.hbm %s1, %s204
    %s206 = scalar_lea.vmem [#allocation2], 8
    %s207 = scalar_lea.sflag [#allocation3], 1
    // Predicated region
    $region58: #{tpu_custom_call.1} parent=1 // pred_check
      _
    $region59: #{tpu_custom_call.1} parent=1 // pred_check_branch
      %209 = sbr.rel target = $region61
    $region60: #{tpu_custom_call.1} parent=1 // pred_region
      %210 = sst [smem:[#allocation14]] [#allocation31]
      %211 = sst [smem:[#allocation15]] [#allocation30]
    $region61: #{tpu_custom_call.1} parent=1 // pred_fallthru
      _
    %213 = shalt.err (0)
    %s215 = sshll.u32 %s206, 4
    %s216 = int_to_ptr.vmem [resolvable:$true] %s215
    %218 = dma.hbm_to_vmem [thread:$0]  %s205, 16, %s216, %s207
    %s219 = smul.addr %s191, 16
    %s220 = scalar_lea.hbm %s1, %s219
    %s221 = scalar_lea.vmem [#allocation2], 9
    // Predicated region
    $region62: #{tpu_custom_call.1} parent=1 // pred_check
      _
    $region63: #{tpu_custom_call.1} parent=1 // pred_check_branch
      %223 = sbr.rel target = $region65
    $region64: #{tpu_custom_call.1} parent=1 // pred_region
      %224 = sst [smem:[#allocation14]] [#allocation33]
      %225 = sst [smem:[#allocation15]] [#allocation32]
    $region65: #{tpu_custom_call.1} parent=1 // pred_fallthru
      _
    %227 = shalt.err (0)
    %s229 = sshll.u32 %s221, 4
    %s230 = int_to_ptr.vmem [resolvable:$true] %s229
    %232 = dma.hbm_to_vmem [thread:$0]  %s220, 16, %s230, %s207
    %s233 = smul.addr %s193, 16
    %s234 = scalar_lea.hbm %s1, %s233
    %s235 = scalar_lea.vmem [#allocation2], 10
    // Predicated region
    $region66: #{tpu_custom_call.1} parent=1 // pred_check
      _
    $region67: #{tpu_custom_call.1} parent=1 // pred_check_branch
      %237 = sbr.rel target = $region69
    $region68: #{tpu_custom_call.1} parent=1 // pred_region
      %238 = sst [smem:[#allocation14]] [#allocation35]
      %239 = sst [smem:[#allocation15]] [#allocation34]
    $region69: #{tpu_custom_call.1} parent=1 // pred_fallthru
      _
    %241 = shalt.err (0)
    %s243 = sshll.u32 %s235, 4
    %s244 = int_to_ptr.vmem [resolvable:$true] %s243
    %246 = dma.hbm_to_vmem [thread:$0]  %s234, 16, %s244, %s207
    %s247 = smul.addr %s195, 16
    %s248 = scalar_lea.hbm %s1, %s247
    %s249 = scalar_lea.vmem [#allocation2], 11
    // Predicated region
    $region70: #{tpu_custom_call.1} parent=1 // pred_check
      _
    $region71: #{tpu_custom_call.1} parent=1 // pred_check_branch
      %251 = sbr.rel target = $region73
    $region72: #{tpu_custom_call.1} parent=1 // pred_region
      %252 = sst [smem:[#allocation14]] [#allocation37]
      %253 = sst [smem:[#allocation15]] [#allocation36]
    $region73: #{tpu_custom_call.1} parent=1 // pred_fallthru
      _
    %255 = shalt.err (0)
    %s257 = sshll.u32 %s249, 4
    %s258 = int_to_ptr.vmem [resolvable:$true] %s257
    %260 = dma.hbm_to_vmem [thread:$0]  %s248, 16, %s258, %s207
    %s261 = smul.addr %s197, 16
    %s262 = scalar_lea.hbm %s1, %s261
    %s263 = scalar_lea.vmem [#allocation2], 12
    // Predicated region
    $region74: #{tpu_custom_call.1} parent=1 // pred_check
      _
    $region75: #{tpu_custom_call.1} parent=1 // pred_check_branch
      %265 = sbr.rel target = $region77
    $region76: #{tpu_custom_call.1} parent=1 // pred_region
      %266 = sst [smem:[#allocation14]] [#allocation39]
      %267 = sst [smem:[#allocation15]] [#allocation38]
    $region77: #{tpu_custom_call.1} parent=1 // pred_fallthru
      _
    %269 = shalt.err (0)
    %s271 = sshll.u32 %s263, 4
    %s272 = int_to_ptr.vmem [resolvable:$true] %s271
    %274 = dma.hbm_to_vmem [thread:$0]  %s262, 16, %s272, %s207
    %s275 = smul.addr %s199, 16
    %s276 = scalar_lea.hbm %s1, %s275
    %s277 = scalar_lea.vmem [#allocation2], 13
    // Predicated region
    $region78: #{tpu_custom_call.1} parent=1 // pred_check
      _
    $region79: #{tpu_custom_call.1} parent=1 // pred_check_branch
      %279 = sbr.rel target = $region81
    $region80: #{tpu_custom_call.1} parent=1 // pred_region
      %280 = sst [smem:[#allocation14]] [#allocation41]
      %281 = sst [smem:[#allocation15]] [#allocation40]
    $region81: #{tpu_custom_call.1} parent=1 // pred_fallthru
      _
    %283 = shalt.err (0)
    %s285 = sshll.u32 %s277, 4
    %s286 = int_to_ptr.vmem [resolvable:$true] %s285
    %288 = dma.hbm_to_vmem [thread:$0]  %s276, 16, %s286, %s207
    %s289 = smul.addr %s201, 16
    %s290 = scalar_lea.hbm %s1, %s289
    %s291 = scalar_lea.vmem [#allocation2], 14
    // Predicated region
    $region82: #{tpu_custom_call.1} parent=1 // pred_check
      _
    $region83: #{tpu_custom_call.1} parent=1 // pred_check_branch
      %293 = sbr.rel target = $region85
    $region84: #{tpu_custom_call.1} parent=1 // pred_region
      %294 = sst [smem:[#allocation14]] [#allocation43]
      %295 = sst [smem:[#allocation15]] [#allocation42]
    $region85: #{tpu_custom_call.1} parent=1 // pred_fallthru
      _
    %297 = shalt.err (0)
    %s299 = sshll.u32 %s291, 4
    %s300 = int_to_ptr.vmem [resolvable:$true] %s299
    %302 = dma.hbm_to_vmem [thread:$0]  %s290, 16, %s300, %s207
    %s303 = smul.addr %s203, 16
    %s304 = scalar_lea.hbm %s1, %s303
    %s305 = scalar_lea.vmem [#allocation2], 15
    // Predicated region
    $region86: #{tpu_custom_call.1} parent=1 // pred_check
      _
    $region87: #{tpu_custom_call.1} parent=1 // pred_check_branch
      %307 = sbr.rel target = $region89
    $region88: #{tpu_custom_call.1} parent=1 // pred_region
      %308 = sst [smem:[#allocation14]] [#allocation45]
      %309 = sst [smem:[#allocation15]] [#allocation44]
    $region89: #{tpu_custom_call.1} parent=1 // pred_fallthru
      _
    %311 = shalt.err (0)
    %s313 = sshll.u32 %s305, 4
    %s314 = int_to_ptr.vmem [resolvable:$true] %s313
    %316 = dma.hbm_to_vmem [thread:$0]  %s304, 16, %s314, %s207
    %s317 = sadd.s32 %s54, 2
    %s318 = sld [smem:[#allocation5 + %s317]]
    %s319 = sadd.s32 %s57, 2
    %s320 = sld [smem:[#allocation5 + %s319]]
    %s321 = sadd.s32 %s60, 2
    %s322 = sld [smem:[#allocation5 + %s321]]
    %s323 = sadd.s32 %s63, 2
    %s324 = sld [smem:[#allocation5 + %s323]]
    %s325 = sadd.s32 %s66, 2
    %s326 = sld [smem:[#allocation5 + %s325]]
    %s327 = sadd.s32 %s69, 2
    %s328 = sld [smem:[#allocation5 + %s327]]
    %s329 = sadd.s32 %s72, 2
    %s330 = sld [smem:[#allocation5 + %s329]]
    %s331 = sadd.s32 %s75, 2
    %s332 = sld [smem:[#allocation5 + %s331]]
    %s333 = smul.addr %s318, 16
    %s334 = scalar_lea.hbm %s1, %s333
    %s335 = scalar_lea.vmem [#allocation2], 16
    %s336 = scalar_lea.sflag [#allocation3], 2
    // Predicated region
    $region90: #{tpu_custom_call.1} parent=1 // pred_check
      _
    $region91: #{tpu_custom_call.1} parent=1 // pred_check_branch
      %338 = sbr.rel target = $region93
    $region92: #{tpu_custom_call.1} parent=1 // pred_region
      %339 = sst [smem:[#allocation14]] [#allocation47]
      %340 = sst [smem:[#allocation15]] [#allocation46]
    $region93: #{tpu_custom_call.1} parent=1 // pred_fallthru
      _
    %342 = shalt.err (0)
    %s344 = sshll.u32 %s335, 4
    %s345 = int_to_ptr.vmem [resolvable:$true] %s344
    %347 = dma.hbm_to_vmem [thread:$0]  %s334, 16, %s345, %s336
    %s348 = smul.addr %s320, 16
    %s349 = scalar_lea.hbm %s1, %s348
    %s350 = scalar_lea.vmem [#allocation2], 17
    // Predicated region
    $region94: #{tpu_custom_call.1} parent=1 // pred_check
      _
    $region95: #{tpu_custom_call.1} parent=1 // pred_check_branch
      %352 = sbr.rel target = $region97
    $region96: #{tpu_custom_call.1} parent=1 // pred_region
      %353 = sst [smem:[#allocation14]] [#allocation49]
      %354 = sst [smem:[#allocation15]] [#allocation48]
    $region97: #{tpu_custom_call.1} parent=1 // pred_fallthru
      _
    %356 = shalt.err (0)
    %s358 = sshll.u32 %s350, 4
    %s359 = int_to_ptr.vmem [resolvable:$true] %s358
    %361 = dma.hbm_to_vmem [thread:$0]  %s349, 16, %s359, %s336
    %s362 = smul.addr %s322, 16
    %s363 = scalar_lea.hbm %s1, %s362
    %s364 = scalar_lea.vmem [#allocation2], 18
    // Predicated region
    $region98: #{tpu_custom_call.1} parent=1 // pred_check
      _
    $region99: #{tpu_custom_call.1} parent=1 // pred_check_branch
      %366 = sbr.rel target = $region101
    $region100: #{tpu_custom_call.1} parent=1 // pred_region
      %367 = sst [smem:[#allocation14]] [#allocation51]
      %368 = sst [smem:[#allocation15]] [#allocation50]
    $region101: #{tpu_custom_call.1} parent=1 // pred_fallthru
      _
    %370 = shalt.err (0)
    %s372 = sshll.u32 %s364, 4
    %s373 = int_to_ptr.vmem [resolvable:$true] %s372
    %375 = dma.hbm_to_vmem [thread:$0]  %s363, 16, %s373, %s336
    %s376 = smul.addr %s324, 16
    %s377 = scalar_lea.hbm %s1, %s376
    %s378 = scalar_lea.vmem [#allocation2], 19
    // Predicated region
    $region102: #{tpu_custom_call.1} parent=1 // pred_check
      _
    $region103: #{tpu_custom_call.1} parent=1 // pred_check_branch
      %380 = sbr.rel target = $region105
    $region104: #{tpu_custom_call.1} parent=1 // pred_region
      %381 = sst [smem:[#allocation14]] [#allocation53]
      %382 = sst [smem:[#allocation15]] [#allocation52]
    $region105: #{tpu_custom_call.1} parent=1 // pred_fallthru
      _
    %384 = shalt.err (0)
    %s386 = sshll.u32 %s378, 4
    %s387 = int_to_ptr.vmem [resolvable:$true] %s386
    %389 = dma.hbm_to_vmem [thread:$0]  %s377, 16, %s387, %s336
    %s390 = smul.addr %s326, 16
    %s391 = scalar_lea.hbm %s1, %s390
    %s392 = scalar_lea.vmem [#allocation2], 20
    // Predicated region
    $region106: #{tpu_custom_call.1} parent=1 // pred_check
      _
    $region107: #{tpu_custom_call.1} parent=1 // pred_check_branch
      %394 = sbr.rel target = $region109
    $region108: #{tpu_custom_call.1} parent=1 // pred_region
      %395 = sst [smem:[#allocation14]] [#allocation55]
      %396 = sst [smem:[#allocation15]] [#allocation54]
    $region109: #{tpu_custom_call.1} parent=1 // pred_fallthru
      _
    %398 = shalt.err (0)
    %s400 = sshll.u32 %s392, 4
    %s401 = int_to_ptr.vmem [resolvable:$true] %s400
    %403 = dma.hbm_to_vmem [thread:$0]  %s391, 16, %s401, %s336
    %s404 = smul.addr %s328, 16
    %s405 = scalar_lea.hbm %s1, %s404
    %s406 = scalar_lea.vmem [#allocation2], 21
    // Predicated region
    $region110: #{tpu_custom_call.1} parent=1 // pred_check
      _
    $region111: #{tpu_custom_call.1} parent=1 // pred_check_branch
      %408 = sbr.rel target = $region113
    $region112: #{tpu_custom_call.1} parent=1 // pred_region
      %409 = sst [smem:[#allocation14]] [#allocation57]
      %410 = sst [smem:[#allocation15]] [#allocation56]
    $region113: #{tpu_custom_call.1} parent=1 // pred_fallthru
      _
    %412 = shalt.err (0)
    %s414 = sshll.u32 %s406, 4
    %s415 = int_to_ptr.vmem [resolvable:$true] %s414
    %417 = dma.hbm_to_vmem [thread:$0]  %s405, 16, %s415, %s336
    %s418 = smul.addr %s330, 16
    %s419 = scalar_lea.hbm %s1, %s418
    %s420 = scalar_lea.vmem [#allocation2], 22
    // Predicated region
    $region114: #{tpu_custom_call.1} parent=1 // pred_check
      _
    $region115: #{tpu_custom_call.1} parent=1 // pred_check_branch
      %422 = sbr.rel target = $region117
    $region116: #{tpu_custom_call.1} parent=1 // pred_region
      %423 = sst [smem:[#allocation14]] [#allocation59]
      %424 = sst [smem:[#allocation15]] [#allocation58]
    $region117: #{tpu_custom_call.1} parent=1 // pred_fallthru
      _
    %426 = shalt.err (0)
    %s428 = sshll.u32 %s420, 4
    %s429 = int_to_ptr.vmem [resolvable:$true] %s428
    %431 = dma.hbm_to_vmem [thread:$0]  %s419, 16, %s429, %s336
    %s432 = smul.addr %s332, 16
    %s433 = scalar_lea.hbm %s1, %s432
    %s434 = scalar_lea.vmem [#allocation2], 23
    // Predicated region
    $region118: #{tpu_custom_call.1} parent=1 // pred_check
      _
    $region119: #{tpu_custom_call.1} parent=1 // pred_check_branch
      %436 = sbr.rel target = $region121
    $region120: #{tpu_custom_call.1} parent=1 // pred_region
      %437 = sst [smem:[#allocation14]] [#allocation61]
      %438 = sst [smem:[#allocation15]] [#allocation60]
    $region121: #{tpu_custom_call.1} parent=1 // pred_fallthru
      _
    %440 = shalt.err (0)
    %s442 = sshll.u32 %s434, 4
    %s443 = int_to_ptr.vmem [resolvable:$true] %s442
    %445 = dma.hbm_to_vmem [thread:$0]  %s433, 16, %s443, %s336
    %s446 = sadd.s32 %s54, 3
    %s447 = sld [smem:[#allocation5 + %s446]]
    %s448 = sadd.s32 %s57, 3
    %s449 = sld [smem:[#allocation5 + %s448]]
    %s450 = sadd.s32 %s60, 3
    %s451 = sld [smem:[#allocation5 + %s450]]
    %s452 = sadd.s32 %s63, 3
    %s453 = sld [smem:[#allocation5 + %s452]]
    %s454 = sadd.s32 %s66, 3
    %s455 = sld [smem:[#allocation5 + %s454]]
    %s456 = sadd.s32 %s69, 3
    %s457 = sld [smem:[#allocation5 + %s456]]
    %s458 = sadd.s32 %s72, 3
    %s459 = sld [smem:[#allocation5 + %s458]]
    %s460 = sadd.s32 %s75, 3
    %s461 = sld [smem:[#allocation5 + %s460]]
    %s462 = smul.addr %s447, 16
    %s463 = scalar_lea.hbm %s1, %s462
    %s464 = scalar_lea.vmem [#allocation2], 24
    %s465 = scalar_lea.sflag [#allocation3], 3
    // Predicated region
    $region122: #{tpu_custom_call.1} parent=1 // pred_check
      _
    $region123: #{tpu_custom_call.1} parent=1 // pred_check_branch
      %467 = sbr.rel target = $region125
    $region124: #{tpu_custom_call.1} parent=1 // pred_region
      %468 = sst [smem:[#allocation14]] [#allocation63]
      %469 = sst [smem:[#allocation15]] [#allocation62]
    $region125: #{tpu_custom_call.1} parent=1 // pred_fallthru
      _
    %471 = shalt.err (0)
    %s473 = sshll.u32 %s464, 4
    %s474 = int_to_ptr.vmem [resolvable:$true] %s473
    %476 = dma.hbm_to_vmem [thread:$0]  %s463, 16, %s474, %s465
    %s477 = smul.addr %s449, 16
    %s478 = scalar_lea.hbm %s1, %s477
    %s479 = scalar_lea.vmem [#allocation2], 25
    // Predicated region
    $region126: #{tpu_custom_call.1} parent=1 // pred_check
      _
    $region127: #{tpu_custom_call.1} parent=1 // pred_check_branch
      %481 = sbr.rel target = $region129
    $region128: #{tpu_custom_call.1} parent=1 // pred_region
      %482 = sst [smem:[#allocation14]] [#allocation65]
      %483 = sst [smem:[#allocation15]] [#allocation64]
    $region129: #{tpu_custom_call.1} parent=1 // pred_fallthru
      _
    %485 = shalt.err (0)
    %s487 = sshll.u32 %s479, 4
    %s488 = int_to_ptr.vmem [resolvable:$true] %s487
    %490 = dma.hbm_to_vmem [thread:$0]  %s478, 16, %s488, %s465
    %s491 = smul.addr %s451, 16
    %s492 = scalar_lea.hbm %s1, %s491
    %s493 = scalar_lea.vmem [#allocation2], 26
    // Predicated region
    $region130: #{tpu_custom_call.1} parent=1 // pred_check
      _
    $region131: #{tpu_custom_call.1} parent=1 // pred_check_branch
      %495 = sbr.rel target = $region133
    $region132: #{tpu_custom_call.1} parent=1 // pred_region
      %496 = sst [smem:[#allocation14]] [#allocation67]
      %497 = sst [smem:[#allocation15]] [#allocation66]
    $region133: #{tpu_custom_call.1} parent=1 // pred_fallthru
      _
    %499 = shalt.err (0)
    %s501 = sshll.u32 %s493, 4
    %s502 = int_to_ptr.vmem [resolvable:$true] %s501
    %504 = dma.hbm_to_vmem [thread:$0]  %s492, 16, %s502, %s465
    %s505 = smul.addr %s453, 16
    %s506 = scalar_lea.hbm %s1, %s505
    %s507 = scalar_lea.vmem [#allocation2], 27
    // Predicated region
    $region134: #{tpu_custom_call.1} parent=1 // pred_check
      _
    $region135: #{tpu_custom_call.1} parent=1 // pred_check_branch
      %509 = sbr.rel target = $region137
    $region136: #{tpu_custom_call.1} parent=1 // pred_region
      %510 = sst [smem:[#allocation14]] [#allocation69]
      %511 = sst [smem:[#allocation15]] [#allocation68]
    $region137: #{tpu_custom_call.1} parent=1 // pred_fallthru
      _
    %513 = shalt.err (0)
    %s515 = sshll.u32 %s507, 4
    %s516 = int_to_ptr.vmem [resolvable:$true] %s515
    %518 = dma.hbm_to_vmem [thread:$0]  %s506, 16, %s516, %s465
    %s519 = smul.addr %s455, 16
    %s520 = scalar_lea.hbm %s1, %s519
    %s521 = scalar_lea.vmem [#allocation2], 28
    // Predicated region
    $region138: #{tpu_custom_call.1} parent=1 // pred_check
      _
    $region139: #{tpu_custom_call.1} parent=1 // pred_check_branch
      %523 = sbr.rel target = $region141
    $region140: #{tpu_custom_call.1} parent=1 // pred_region
      %524 = sst [smem:[#allocation14]] [#allocation71]
      %525 = sst [smem:[#allocation15]] [#allocation70]
    $region141: #{tpu_custom_call.1} parent=1 // pred_fallthru
      _
    %527 = shalt.err (0)
    %s529 = sshll.u32 %s521, 4
    %s530 = int_to_ptr.vmem [resolvable:$true] %s529
    %532 = dma.hbm_to_vmem [thread:$0]  %s520, 16, %s530, %s465
    %s533 = smul.addr %s457, 16
    %s534 = scalar_lea.hbm %s1, %s533
    %s535 = scalar_lea.vmem [#allocation2], 29
    // Predicated region
    $region142: #{tpu_custom_call.1} parent=1 // pred_check
      _
    $region143: #{tpu_custom_call.1} parent=1 // pred_check_branch
      %537 = sbr.rel target = $region145
    $region144: #{tpu_custom_call.1} parent=1 // pred_region
      %538 = sst [smem:[#allocation14]] [#allocation73]
      %539 = sst [smem:[#allocation15]] [#allocation72]
    $region145: #{tpu_custom_call.1} parent=1 // pred_fallthru
      _
    %541 = shalt.err (0)
    %s543 = sshll.u32 %s535, 4
    %s544 = int_to_ptr.vmem [resolvable:$true] %s543
    %546 = dma.hbm_to_vmem [thread:$0]  %s534, 16, %s544, %s465
    %s547 = smul.addr %s459, 16
    %s548 = scalar_lea.hbm %s1, %s547
    %s549 = scalar_lea.vmem [#allocation2], 30
    // Predicated region
    $region146: #{tpu_custom_call.1} parent=1 // pred_check
      _
    $region147: #{tpu_custom_call.1} parent=1 // pred_check_branch
      %551 = sbr.rel target = $region149
    $region148: #{tpu_custom_call.1} parent=1 // pred_region
      %552 = sst [smem:[#allocation14]] [#allocation75]
      %553 = sst [smem:[#allocation15]] [#allocation74]
    $region149: #{tpu_custom_call.1} parent=1 // pred_fallthru
      _
    %555 = shalt.err (0)
    %s557 = sshll.u32 %s549, 4
    %s558 = int_to_ptr.vmem [resolvable:$true] %s557
    %560 = dma.hbm_to_vmem [thread:$0]  %s548, 16, %s558, %s465
    %s561 = smul.addr %s461, 16
    %s562 = scalar_lea.hbm %s1, %s561
    %s563 = scalar_lea.vmem [#allocation2], 31
    // Predicated region
    $region150: #{tpu_custom_call.1} parent=1 // pred_check
      _
    $region151: #{tpu_custom_call.1} parent=1 // pred_check_branch
      %565 = sbr.rel target = $region153
    $region152: #{tpu_custom_call.1} parent=1 // pred_region
      %566 = sst [smem:[#allocation14]] [#allocation77]
      %567 = sst [smem:[#allocation15]] [#allocation76]
    $region153: #{tpu_custom_call.1} parent=1 // pred_fallthru
      _
    %569 = shalt.err (0)
    %s571 = sshll.u32 %s563, 4
    %s572 = int_to_ptr.vmem [resolvable:$true] %s571
    %574 = dma.hbm_to_vmem [thread:$0]  %s562, 16, %s572, %s465
    %s575 = sadd.s32 %s54, 4
    %s576 = sld [smem:[#allocation5 + %s575]]
    %s577 = sadd.s32 %s57, 4
    %s578 = sld [smem:[#allocation5 + %s577]]
    %s579 = sadd.s32 %s60, 4
    %s580 = sld [smem:[#allocation5 + %s579]]
    %s581 = sadd.s32 %s63, 4
    %s582 = sld [smem:[#allocation5 + %s581]]
    %s583 = sadd.s32 %s66, 4
    %s584 = sld [smem:[#allocation5 + %s583]]
    %s585 = sadd.s32 %s69, 4
    %s586 = sld [smem:[#allocation5 + %s585]]
    %s587 = sadd.s32 %s72, 4
    %s588 = sld [smem:[#allocation5 + %s587]]
    %s589 = sadd.s32 %s75, 4
    %s590 = sld [smem:[#allocation5 + %s589]]
    %s591 = smul.addr %s576, 16
    %s592 = scalar_lea.hbm %s1, %s591
    %s593 = scalar_lea.vmem [#allocation2], 32
    %s594 = scalar_lea.sflag [#allocation3], 4
    // Predicated region
    $region154: #{tpu_custom_call.1} parent=1 // pred_check
      _
    $region155: #{tpu_custom_call.1} parent=1 // pred_check_branch
      %596 = sbr.rel target = $region157
    $region156: #{tpu_custom_call.1} parent=1 // pred_region
      %597 = sst [smem:[#allocation14]] [#allocation79]
      %598 = sst [smem:[#allocation15]] [#allocation78]
    $region157: #{tpu_custom_call.1} parent=1 // pred_fallthru
      _
    %600 = shalt.err (0)
    %s602 = sshll.u32 %s593, 4
    %s603 = int_to_ptr.vmem [resolvable:$true] %s602
    %605 = dma.hbm_to_vmem [thread:$0]  %s592, 16, %s603, %s594
    %s606 = smul.addr %s578, 16
    %s607 = scalar_lea.hbm %s1, %s606
    %s608 = scalar_lea.vmem [#allocation2], 33
    // Predicated region
    $region158: #{tpu_custom_call.1} parent=1 // pred_check
      _
    $region159: #{tpu_custom_call.1} parent=1 // pred_check_branch
      %610 = sbr.rel target = $region161
    $region160: #{tpu_custom_call.1} parent=1 // pred_region
      %611 = sst [smem:[#allocation14]] [#allocation81]
      %612 = sst [smem:[#allocation15]] [#allocation80]
    $region161: #{tpu_custom_call.1} parent=1 // pred_fallthru
      _
    %614 = shalt.err (0)
    %s616 = sshll.u32 %s608, 4
    %s617 = int_to_ptr.vmem [resolvable:$true] %s616
    %619 = dma.hbm_to_vmem [thread:$0]  %s607, 16, %s617, %s594
    %s620 = smul.addr %s580, 16
    %s621 = scalar_lea.hbm %s1, %s620
    %s622 = scalar_lea.vmem [#allocation2], 34
    // Predicated region
    $region162: #{tpu_custom_call.1} parent=1 // pred_check
      _
    $region163: #{tpu_custom_call.1} parent=1 // pred_check_branch
      %624 = sbr.rel target = $region165
    $region164: #{tpu_custom_call.1} parent=1 // pred_region
      %625 = sst [smem:[#allocation14]] [#allocation83]
      %626 = sst [smem:[#allocation15]] [#allocation82]
    $region165: #{tpu_custom_call.1} parent=1 // pred_fallthru
      _
    %628 = shalt.err (0)
    %s630 = sshll.u32 %s622, 4
    %s631 = int_to_ptr.vmem [resolvable:$true] %s630
    %633 = dma.hbm_to_vmem [thread:$0]  %s621, 16, %s631, %s594
    %s634 = smul.addr %s582, 16
    %s635 = scalar_lea.hbm %s1, %s634
    %s636 = scalar_lea.vmem [#allocation2], 35
    // Predicated region
    $region166: #{tpu_custom_call.1} parent=1 // pred_check
      _
    $region167: #{tpu_custom_call.1} parent=1 // pred_check_branch
      %638 = sbr.rel target = $region169
    $region168: #{tpu_custom_call.1} parent=1 // pred_region
      %639 = sst [smem:[#allocation14]] [#allocation85]
      %640 = sst [smem:[#allocation15]] [#allocation84]
    $region169: #{tpu_custom_call.1} parent=1 // pred_fallthru
      _
    %642 = shalt.err (0)
    %s644 = sshll.u32 %s636, 4
    %s645 = int_to_ptr.vmem [resolvable:$true] %s644
    %647 = dma.hbm_to_vmem [thread:$0]  %s635, 16, %s645, %s594
    %s648 = smul.addr %s584, 16
    %s649 = scalar_lea.hbm %s1, %s648
    %s650 = scalar_lea.vmem [#allocation2], 36
    // Predicated region
    $region170: #{tpu_custom_call.1} parent=1 // pred_check
      _
    $region171: #{tpu_custom_call.1} parent=1 // pred_check_branch
      %652 = sbr.rel target = $region173
    $region172: #{tpu_custom_call.1} parent=1 // pred_region
      %653 = sst [smem:[#allocation14]] [#allocation87]
      %654 = sst [smem:[#allocation15]] [#allocation86]
    $region173: #{tpu_custom_call.1} parent=1 // pred_fallthru
      _
    %656 = shalt.err (0)
    %s658 = sshll.u32 %s650, 4
    %s659 = int_to_ptr.vmem [resolvable:$true] %s658
    %661 = dma.hbm_to_vmem [thread:$0]  %s649, 16, %s659, %s594
    %s662 = smul.addr %s586, 16
    %s663 = scalar_lea.hbm %s1, %s662
    %s664 = scalar_lea.vmem [#allocation2], 37
    // Predicated region
    $region174: #{tpu_custom_call.1} parent=1 // pred_check
      _
    $region175: #{tpu_custom_call.1} parent=1 // pred_check_branch
      %666 = sbr.rel target = $region177
    $region176: #{tpu_custom_call.1} parent=1 // pred_region
      %667 = sst [smem:[#allocation14]] [#allocation89]
      %668 = sst [smem:[#allocation15]] [#allocation88]
    $region177: #{tpu_custom_call.1} parent=1 // pred_fallthru
      _
    %670 = shalt.err (0)
    %s672 = sshll.u32 %s664, 4
    %s673 = int_to_ptr.vmem [resolvable:$true] %s672
    %675 = dma.hbm_to_vmem [thread:$0]  %s663, 16, %s673, %s594
    %s676 = smul.addr %s588, 16
    %s677 = scalar_lea.hbm %s1, %s676
    %s678 = scalar_lea.vmem [#allocation2], 38
    // Predicated region
    $region178: #{tpu_custom_call.1} parent=1 // pred_check
      _
    $region179: #{tpu_custom_call.1} parent=1 // pred_check_branch
      %680 = sbr.rel target = $region181
    $region180: #{tpu_custom_call.1} parent=1 // pred_region
      %681 = sst [smem:[#allocation14]] [#allocation91]
      %682 = sst [smem:[#allocation15]] [#allocation90]
    $region181: #{tpu_custom_call.1} parent=1 // pred_fallthru
      _
    %684 = shalt.err (0)
    %s686 = sshll.u32 %s678, 4
    %s687 = int_to_ptr.vmem [resolvable:$true] %s686
    %689 = dma.hbm_to_vmem [thread:$0]  %s677, 16, %s687, %s594
    %s690 = smul.addr %s590, 16
    %s691 = scalar_lea.hbm %s1, %s690
    %s692 = scalar_lea.vmem [#allocation2], 39
    // Predicated region
    $region182: #{tpu_custom_call.1} parent=1 // pred_check
      _
    $region183: #{tpu_custom_call.1} parent=1 // pred_check_branch
      %694 = sbr.rel target = $region185
    $region184: #{tpu_custom_call.1} parent=1 // pred_region
      %695 = sst [smem:[#allocation14]] [#allocation93]
      %696 = sst [smem:[#allocation15]] [#allocation92]
    $region185: #{tpu_custom_call.1} parent=1 // pred_fallthru
      _
    %698 = shalt.err (0)
    %s700 = sshll.u32 %s692, 4
    %s701 = int_to_ptr.vmem [resolvable:$true] %s700
    %703 = dma.hbm_to_vmem [thread:$0]  %s691, 16, %s701, %s594
    %s704 = sadd.s32 %s54, 5
    %s705 = sld [smem:[#allocation5 + %s704]]
    %s706 = sadd.s32 %s57, 5
    %s707 = sld [smem:[#allocation5 + %s706]]
    %s708 = sadd.s32 %s60, 5
    %s709 = sld [smem:[#allocation5 + %s708]]
    %s710 = sadd.s32 %s63, 5
    %s711 = sld [smem:[#allocation5 + %s710]]
    %s712 = sadd.s32 %s66, 5
    %s713 = sld [smem:[#allocation5 + %s712]]
    %s714 = sadd.s32 %s69, 5
    %s715 = sld [smem:[#allocation5 + %s714]]
    %s716 = sadd.s32 %s72, 5
    %s717 = sld [smem:[#allocation5 + %s716]]
    %s718 = sadd.s32 %s75, 5
    %s719 = sld [smem:[#allocation5 + %s718]]
    %s720 = smul.addr %s705, 16
    %s721 = scalar_lea.hbm %s1, %s720
    %s722 = scalar_lea.vmem [#allocation2], 40
    %s723 = scalar_lea.sflag [#allocation3], 5
    // Predicated region
    $region186: #{tpu_custom_call.1} parent=1 // pred_check
      _
    $region187: #{tpu_custom_call.1} parent=1 // pred_check_branch
      %725 = sbr.rel target = $region189
    $region188: #{tpu_custom_call.1} parent=1 // pred_region
      %726 = sst [smem:[#allocation14]] [#allocation95]
      %727 = sst [smem:[#allocation15]] [#allocation94]
    $region189: #{tpu_custom_call.1} parent=1 // pred_fallthru
      _
    %729 = shalt.err (0)
    %s731 = sshll.u32 %s722, 4
    %s732 = int_to_ptr.vmem [resolvable:$true] %s731
    %734 = dma.hbm_to_vmem [thread:$0]  %s721, 16, %s732, %s723
    %s735 = smul.addr %s707, 16
    %s736 = scalar_lea.hbm %s1, %s735
    %s737 = scalar_lea.vmem [#allocation2], 41
    // Predicated region
    $region190: #{tpu_custom_call.1} parent=1 // pred_check
      _
    $region191: #{tpu_custom_call.1} parent=1 // pred_check_branch
      %739 = sbr.rel target = $region193
    $region192: #{tpu_custom_call.1} parent=1 // pred_region
      %740 = sst [smem:[#allocation14]] [#allocation97]
      %741 = sst [smem:[#allocation15]] [#allocation96]
    $region193: #{tpu_custom_call.1} parent=1 // pred_fallthru
      _
    %743 = shalt.err (0)
    %s745 = sshll.u32 %s737, 4
    %s746 = int_to_ptr.vmem [resolvable:$true] %s745
    %748 = dma.hbm_to_vmem [thread:$0]  %s736, 16, %s746, %s723
    %s749 = smul.addr %s709, 16
    %s750 = scalar_lea.hbm %s1, %s749
    %s751 = scalar_lea.vmem [#allocation2], 42
    // Predicated region
    $region194: #{tpu_custom_call.1} parent=1 // pred_check
      _
    $region195: #{tpu_custom_call.1} parent=1 // pred_check_branch
      %753 = sbr.rel target = $region197
    $region196: #{tpu_custom_call.1} parent=1 // pred_region
      %754 = sst [smem:[#allocation14]] [#allocation99]
      %755 = sst [smem:[#allocation15]] [#allocation98]
    $region197: #{tpu_custom_call.1} parent=1 // pred_fallthru
      _
    %757 = shalt.err (0)
    %s759 = sshll.u32 %s751, 4
    %s760 = int_to_ptr.vmem [resolvable:$true] %s759
    %762 = dma.hbm_to_vmem [thread:$0]  %s750, 16, %s760, %s723
    %s763 = smul.addr %s711, 16
    %s764 = scalar_lea.hbm %s1, %s763
    %s765 = scalar_lea.vmem [#allocation2], 43
    // Predicated region
    $region198: #{tpu_custom_call.1} parent=1 // pred_check
      _
    $region199: #{tpu_custom_call.1} parent=1 // pred_check_branch
      %767 = sbr.rel target = $region201
    $region200: #{tpu_custom_call.1} parent=1 // pred_region
      %768 = sst [smem:[#allocation14]] [#allocation101]
      %769 = sst [smem:[#allocation15]] [#allocation100]
    $region201: #{tpu_custom_call.1} parent=1 // pred_fallthru
      _
    %771 = shalt.err (0)
    %s773 = sshll.u32 %s765, 4
    %s774 = int_to_ptr.vmem [resolvable:$true] %s773
    %776 = dma.hbm_to_vmem [thread:$0]  %s764, 16, %s774, %s723
    %s777 = smul.addr %s713, 16
    %s778 = scalar_lea.hbm %s1, %s777
    %s779 = scalar_lea.vmem [#allocation2], 44
    // Predicated region
    $region202: #{tpu_custom_call.1} parent=1 // pred_check
      _
    $region203: #{tpu_custom_call.1} parent=1 // pred_check_branch
      %781 = sbr.rel target = $region205
    $region204: #{tpu_custom_call.1} parent=1 // pred_region
      %782 = sst [smem:[#allocation14]] [#allocation103]
      %783 = sst [smem:[#allocation15]] [#allocation102]
    $region205: #{tpu_custom_call.1} parent=1 // pred_fallthru
      _
    %785 = shalt.err (0)
    %s787 = sshll.u32 %s779, 4
    %s788 = int_to_ptr.vmem [resolvable:$true] %s787
    %790 = dma.hbm_to_vmem [thread:$0]  %s778, 16, %s788, %s723
    %s791 = smul.addr %s715, 16
    %s792 = scalar_lea.hbm %s1, %s791
    %s793 = scalar_lea.vmem [#allocation2], 45
    // Predicated region
    $region206: #{tpu_custom_call.1} parent=1 // pred_check
      _
    $region207: #{tpu_custom_call.1} parent=1 // pred_check_branch
      %795 = sbr.rel target = $region209
    $region208: #{tpu_custom_call.1} parent=1 // pred_region
      %796 = sst [smem:[#allocation14]] [#allocation105]
      %797 = sst [smem:[#allocation15]] [#allocation104]
    $region209: #{tpu_custom_call.1} parent=1 // pred_fallthru
      _
    %799 = shalt.err (0)
    %s801 = sshll.u32 %s793, 4
    %s802 = int_to_ptr.vmem [resolvable:$true] %s801
    %804 = dma.hbm_to_vmem [thread:$0]  %s792, 16, %s802, %s723
    %s805 = smul.addr %s717, 16
    %s806 = scalar_lea.hbm %s1, %s805
    %s807 = scalar_lea.vmem [#allocation2], 46
    // Predicated region
    $region210: #{tpu_custom_call.1} parent=1 // pred_check
      _
    $region211: #{tpu_custom_call.1} parent=1 // pred_check_branch
      %809 = sbr.rel target = $region213
    $region212: #{tpu_custom_call.1} parent=1 // pred_region
      %810 = sst [smem:[#allocation14]] [#allocation107]
      %811 = sst [smem:[#allocation15]] [#allocation106]
    $region213: #{tpu_custom_call.1} parent=1 // pred_fallthru
      _
    %813 = shalt.err (0)
    %s815 = sshll.u32 %s807, 4
    %s816 = int_to_ptr.vmem [resolvable:$true] %s815
    %818 = dma.hbm_to_vmem [thread:$0]  %s806, 16, %s816, %s723
    %s819 = smul.addr %s719, 16
    %s820 = scalar_lea.hbm %s1, %s819
    %s821 = scalar_lea.vmem [#allocation2], 47
    // Predicated region
    $region214: #{tpu_custom_call.1} parent=1 // pred_check
      _
    $region215: #{tpu_custom_call.1} parent=1 // pred_check_branch
      %823 = sbr.rel target = $region217
    $region216: #{tpu_custom_call.1} parent=1 // pred_region
      %824 = sst [smem:[#allocation14]] [#allocation109]
      %825 = sst [smem:[#allocation15]] [#allocation108]
    $region217: #{tpu_custom_call.1} parent=1 // pred_fallthru
      _
    %827 = shalt.err (0)
    %s829 = sshll.u32 %s821, 4
    %s830 = int_to_ptr.vmem [resolvable:$true] %s829
    %832 = dma.hbm_to_vmem [thread:$0]  %s820, 16, %s830, %s723
    %s833 = sadd.s32 %s54, 6
    %s834 = sld [smem:[#allocation5 + %s833]]
    %s835 = sadd.s32 %s57, 6
    %s836 = sld [smem:[#allocation5 + %s835]]
    %s837 = sadd.s32 %s60, 6
    %s838 = sld [smem:[#allocation5 + %s837]]
    %s839 = sadd.s32 %s63, 6
    %s840 = sld [smem:[#allocation5 + %s839]]
    %s841 = sadd.s32 %s66, 6
    %s842 = sld [smem:[#allocation5 + %s841]]
    %s843 = sadd.s32 %s69, 6
    %s844 = sld [smem:[#allocation5 + %s843]]
    %s845 = sadd.s32 %s72, 6
    %s846 = sld [smem:[#allocation5 + %s845]]
    %s847 = sadd.s32 %s75, 6
    %s848 = sld [smem:[#allocation5 + %s847]]
    %s849 = smul.addr %s834, 16
    %s850 = scalar_lea.hbm %s1, %s849
    %s851 = scalar_lea.vmem [#allocation2], 48
    %s852 = scalar_lea.sflag [#allocation3], 6
    // Predicated region
    $region218: #{tpu_custom_call.1} parent=1 // pred_check
      _
    $region219: #{tpu_custom_call.1} parent=1 // pred_check_branch
      %854 = sbr.rel target = $region221
    $region220: #{tpu_custom_call.1} parent=1 // pred_region
      %855 = sst [smem:[#allocation14]] [#allocation111]
      %856 = sst [smem:[#allocation15]] [#allocation110]
    $region221: #{tpu_custom_call.1} parent=1 // pred_fallthru
      _
    %858 = shalt.err (0)
    %s860 = sshll.u32 %s851, 4
    %s861 = int_to_ptr.vmem [resolvable:$true] %s860
    %863 = dma.hbm_to_vmem [thread:$0]  %s850, 16, %s861, %s852
    %s864 = smul.addr %s836, 16
    %s865 = scalar_lea.hbm %s1, %s864
    %s866 = scalar_lea.vmem [#allocation2], 49
    // Predicated region
    $region222: #{tpu_custom_call.1} parent=1 // pred_check
      _
    $region223: #{tpu_custom_call.1} parent=1 // pred_check_branch
      %868 = sbr.rel target = $region225
    $region224: #{tpu_custom_call.1} parent=1 // pred_region
      %869 = sst [smem:[#allocation14]] [#allocation113]
      %870 = sst [smem:[#allocation15]] [#allocation112]
    $region225: #{tpu_custom_call.1} parent=1 // pred_fallthru
      _
    %872 = shalt.err (0)
    %s874 = sshll.u32 %s866, 4
    %s875 = int_to_ptr.vmem [resolvable:$true] %s874
    %877 = dma.hbm_to_vmem [thread:$0]  %s865, 16, %s875, %s852
    %s878 = smul.addr %s838, 16
    %s879 = scalar_lea.hbm %s1, %s878
    %s880 = scalar_lea.vmem [#allocation2], 50
    // Predicated region
    $region226: #{tpu_custom_call.1} parent=1 // pred_check
      _
    $region227: #{tpu_custom_call.1} parent=1 // pred_check_branch
      %882 = sbr.rel target = $region229
    $region228: #{tpu_custom_call.1} parent=1 // pred_region
      %883 = sst [smem:[#allocation14]] [#allocation115]
      %884 = sst [smem:[#allocation15]] [#allocation114]
    $region229: #{tpu_custom_call.1} parent=1 // pred_fallthru
      _
    %886 = shalt.err (0)
    %s888 = sshll.u32 %s880, 4
    %s889 = int_to_ptr.vmem [resolvable:$true] %s888
    %891 = dma.hbm_to_vmem [thread:$0]  %s879, 16, %s889, %s852
    %s892 = smul.addr %s840, 16
    %s893 = scalar_lea.hbm %s1, %s892
    %s894 = scalar_lea.vmem [#allocation2], 51
    // Predicated region
    $region230: #{tpu_custom_call.1} parent=1 // pred_check
      _
    $region231: #{tpu_custom_call.1} parent=1 // pred_check_branch
      %896 = sbr.rel target = $region233
    $region232: #{tpu_custom_call.1} parent=1 // pred_region
      %897 = sst [smem:[#allocation14]] [#allocation117]
      %898 = sst [smem:[#allocation15]] [#allocation116]
    $region233: #{tpu_custom_call.1} parent=1 // pred_fallthru
      _
    %900 = shalt.err (0)
    %s902 = sshll.u32 %s894, 4
    %s903 = int_to_ptr.vmem [resolvable:$true] %s902
    %905 = dma.hbm_to_vmem [thread:$0]  %s893, 16, %s903, %s852
    %s906 = smul.addr %s842, 16
    %s907 = scalar_lea.hbm %s1, %s906
    %s908 = scalar_lea.vmem [#allocation2], 52
    // Predicated region
    $region234: #{tpu_custom_call.1} parent=1 // pred_check
      _
    $region235: #{tpu_custom_call.1} parent=1 // pred_check_branch
      %910 = sbr.rel target = $region237
    $region236: #{tpu_custom_call.1} parent=1 // pred_region
      %911 = sst [smem:[#allocation14]] [#allocation119]
      %912 = sst [smem:[#allocation15]] [#allocation118]
    $region237: #{tpu_custom_call.1} parent=1 // pred_fallthru
      _
    %914 = shalt.err (0)
    %s916 = sshll.u32 %s908, 4
    %s917 = int_to_ptr.vmem [resolvable:$true] %s916
    %919 = dma.hbm_to_vmem [thread:$0]  %s907, 16, %s917, %s852
    %s920 = smul.addr %s844, 16
    %s921 = scalar_lea.hbm %s1, %s920
    %s922 = scalar_lea.vmem [#allocation2], 53
    // Predicated region
    $region238: #{tpu_custom_call.1} parent=1 // pred_check
      _
    $region239: #{tpu_custom_call.1} parent=1 // pred_check_branch
      %924 = sbr.rel target = $region241
    $region240: #{tpu_custom_call.1} parent=1 // pred_region
      %925 = sst [smem:[#allocation14]] [#allocation121]
      %926 = sst [smem:[#allocation15]] [#allocation120]
    $region241: #{tpu_custom_call.1} parent=1 // pred_fallthru
      _
    %928 = shalt.err (0)
    %s930 = sshll.u32 %s922, 4
    %s931 = int_to_ptr.vmem [resolvable:$true] %s930
    %933 = dma.hbm_to_vmem [thread:$0]  %s921, 16, %s931, %s852
    %s934 = smul.addr %s846, 16
    %s935 = scalar_lea.hbm %s1, %s934
    %s936 = scalar_lea.vmem [#allocation2], 54
    // Predicated region
    $region242: #{tpu_custom_call.1} parent=1 // pred_check
      _
    $region243: #{tpu_custom_call.1} parent=1 // pred_check_branch
      %938 = sbr.rel target = $region245
    $region244: #{tpu_custom_call.1} parent=1 // pred_region
      %939 = sst [smem:[#allocation14]] [#allocation123]
      %940 = sst [smem:[#allocation15]] [#allocation122]
    $region245: #{tpu_custom_call.1} parent=1 // pred_fallthru
      _
    %942 = shalt.err (0)
    %s944 = sshll.u32 %s936, 4
    %s945 = int_to_ptr.vmem [resolvable:$true] %s944
    %947 = dma.hbm_to_vmem [thread:$0]  %s935, 16, %s945, %s852
    %s948 = smul.addr %s848, 16
    %s949 = scalar_lea.hbm %s1, %s948
    %s950 = scalar_lea.vmem [#allocation2], 55
    // Predicated region
    $region246: #{tpu_custom_call.1} parent=1 // pred_check
      _
    $region247: #{tpu_custom_call.1} parent=1 // pred_check_branch
      %952 = sbr.rel target = $region249
    $region248: #{tpu_custom_call.1} parent=1 // pred_region
      %953 = sst [smem:[#allocation14]] [#allocation125]
      %954 = sst [smem:[#allocation15]] [#allocation124]
    $region249: #{tpu_custom_call.1} parent=1 // pred_fallthru
      _
    %956 = shalt.err (0)
    %s958 = sshll.u32 %s950, 4
    %s959 = int_to_ptr.vmem [resolvable:$true] %s958
    %961 = dma.hbm_to_vmem [thread:$0]  %s949, 16, %s959, %s852
    %s962 = sadd.s32 %s54, 7
    %s963 = sld [smem:[#allocation5 + %s962]]
    %s964 = sadd.s32 %s57, 7
    %s965 = sld [smem:[#allocation5 + %s964]]
    %s966 = sadd.s32 %s60, 7
    %s967 = sld [smem:[#allocation5 + %s966]]
    %s968 = sadd.s32 %s63, 7
    %s969 = sld [smem:[#allocation5 + %s968]]
    %s970 = sadd.s32 %s66, 7
    %s971 = sld [smem:[#allocation5 + %s970]]
    %s972 = sadd.s32 %s69, 7
    %s973 = sld [smem:[#allocation5 + %s972]]
    %s974 = sadd.s32 %s72, 7
    %s975 = sld [smem:[#allocation5 + %s974]]
    %s976 = sadd.s32 %s75, 7
    %s977 = sld [smem:[#allocation5 + %s976]]
    %s978 = smul.addr %s963, 16
    %s979 = scalar_lea.hbm %s1, %s978
    %s980 = scalar_lea.vmem [#allocation2], 56
    %s981 = scalar_lea.sflag [#allocation3], 7
    // Predicated region
    $region250: #{tpu_custom_call.1} parent=1 // pred_check
      _
    $region251: #{tpu_custom_call.1} parent=1 // pred_check_branch
      %983 = sbr.rel target = $region253
    $region252: #{tpu_custom_call.1} parent=1 // pred_region
      %984 = sst [smem:[#allocation14]] [#allocation127]
      %985 = sst [smem:[#allocation15]] [#allocation126]
    $region253: #{tpu_custom_call.1} parent=1 // pred_fallthru
      _
    %987 = shalt.err (0)
    %s989 = sshll.u32 %s980, 4
    %s990 = int_to_ptr.vmem [resolvable:$true] %s989
    %992 = dma.hbm_to_vmem [thread:$0]  %s979, 16, %s990, %s981
    %s993 = smul.addr %s965, 16
    %s994 = scalar_lea.hbm %s1, %s993
    %s995 = scalar_lea.vmem [#allocation2], 57
    // Predicated region
    $region254: #{tpu_custom_call.1} parent=1 // pred_check
      _
    $region255: #{tpu_custom_call.1} parent=1 // pred_check_branch
      %997 = sbr.rel target = $region257
    $region256: #{tpu_custom_call.1} parent=1 // pred_region
      %998 = sst [smem:[#allocation14]] [#allocation129]
      %999 = sst [smem:[#allocation15]] [#allocation128]
    $region257: #{tpu_custom_call.1} parent=1 // pred_fallthru
      _
    %1001 = shalt.err (0)
    %s1003 = sshll.u32 %s995, 4
    %s1004 = int_to_ptr.vmem [resolvable:$true] %s1003
    %1006 = dma.hbm_to_vmem [thread:$0]  %s994, 16, %s1004, %s981
    %s1007 = smul.addr %s967, 16
    %s1008 = scalar_lea.hbm %s1, %s1007
    %s1009 = scalar_lea.vmem [#allocation2], 58
    // Predicated region
    $region258: #{tpu_custom_call.1} parent=1 // pred_check
      _
    $region259: #{tpu_custom_call.1} parent=1 // pred_check_branch
      %1011 = sbr.rel target = $region261
    $region260: #{tpu_custom_call.1} parent=1 // pred_region
      %1012 = sst [smem:[#allocation14]] [#allocation131]
      %1013 = sst [smem:[#allocation15]] [#allocation130]
    $region261: #{tpu_custom_call.1} parent=1 // pred_fallthru
      _
    %1015 = shalt.err (0)
    %s1017 = sshll.u32 %s1009, 4
    %s1018 = int_to_ptr.vmem [resolvable:$true] %s1017
    %1020 = dma.hbm_to_vmem [thread:$0]  %s1008, 16, %s1018, %s981
    %s1021 = smul.addr %s969, 16
    %s1022 = scalar_lea.hbm %s1, %s1021
    %s1023 = scalar_lea.vmem [#allocation2], 59
    // Predicated region
    $region262: #{tpu_custom_call.1} parent=1 // pred_check
      _
    $region263: #{tpu_custom_call.1} parent=1 // pred_check_branch
      %1025 = sbr.rel target = $region265
    $region264: #{tpu_custom_call.1} parent=1 // pred_region
      %1026 = sst [smem:[#allocation14]] [#allocation133]
      %1027 = sst [smem:[#allocation15]] [#allocation132]
    $region265: #{tpu_custom_call.1} parent=1 // pred_fallthru
      _
    %1029 = shalt.err (0)
    %s1031 = sshll.u32 %s1023, 4
    %s1032 = int_to_ptr.vmem [resolvable:$true] %s1031
    %1034 = dma.hbm_to_vmem [thread:$0]  %s1022, 16, %s1032, %s981
    %s1035 = smul.addr %s971, 16
    %s1036 = scalar_lea.hbm %s1, %s1035
    %s1037 = scalar_lea.vmem [#allocation2], 60
    // Predicated region
    $region266: #{tpu_custom_call.1} parent=1 // pred_check
      _
    $region267: #{tpu_custom_call.1} parent=1 // pred_check_branch
      %1039 = sbr.rel target = $region269
    $region268: #{tpu_custom_call.1} parent=1 // pred_region
      %1040 = sst [smem:[#allocation14]] [#allocation135]
      %1041 = sst [smem:[#allocation15]] [#allocation134]
    $region269: #{tpu_custom_call.1} parent=1 // pred_fallthru
      _
    %1043 = shalt.err (0)
    %s1045 = sshll.u32 %s1037, 4
    %s1046 = int_to_ptr.vmem [resolvable:$true] %s1045
    %1048 = dma.hbm_to_vmem [thread:$0]  %s1036, 16, %s1046, %s981
    %s1049 = smul.addr %s973, 16
    %s1050 = scalar_lea.hbm %s1, %s1049
    %s1051 = scalar_lea.vmem [#allocation2], 61
    // Predicated region
    $region270: #{tpu_custom_call.1} parent=1 // pred_check
      _
    $region271: #{tpu_custom_call.1} parent=1 // pred_check_branch
      %1053 = sbr.rel target = $region273
    $region272: #{tpu_custom_call.1} parent=1 // pred_region
      %1054 = sst [smem:[#allocation14]] [#allocation137]
      %1055 = sst [smem:[#allocation15]] [#allocation136]
    $region273: #{tpu_custom_call.1} parent=1 // pred_fallthru
      _
    %1057 = shalt.err (0)
    %s1059 = sshll.u32 %s1051, 4
    %s1060 = int_to_ptr.vmem [resolvable:$true] %s1059
    %1062 = dma.hbm_to_vmem [thread:$0]  %s1050, 16, %s1060, %s981
    %s1063 = smul.addr %s975, 16
    %s1064 = scalar_lea.hbm %s1, %s1063
    %s1065 = scalar_lea.vmem [#allocation2], 62
    // Predicated region
    $region274: #{tpu_custom_call.1} parent=1 // pred_check
      _
    $region275: #{tpu_custom_call.1} parent=1 // pred_check_branch
      %1067 = sbr.rel target = $region277
    $region276: #{tpu_custom_call.1} parent=1 // pred_region
      %1068 = sst [smem:[#allocation14]] [#allocation139]
      %1069 = sst [smem:[#allocation15]] [#allocation138]
    $region277: #{tpu_custom_call.1} parent=1 // pred_fallthru
      _
    %1071 = shalt.err (0)
    %s1073 = sshll.u32 %s1065, 4
    %s1074 = int_to_ptr.vmem [resolvable:$true] %s1073
    %1076 = dma.hbm_to_vmem [thread:$0]  %s1064, 16, %s1074, %s981
    %s1077 = smul.addr %s977, 16
    %s1078 = scalar_lea.hbm %s1, %s1077
    %s1079 = scalar_lea.vmem [#allocation2], 63
    // Predicated region
    $region278: #{tpu_custom_call.1} parent=1 // pred_check
      _
    $region279: #{tpu_custom_call.1} parent=1 // pred_check_branch
      %1081 = sbr.rel target = $region281
    $region280: #{tpu_custom_call.1} parent=1 // pred_region
      %1082 = sst [smem:[#allocation14]] [#allocation141]
      %1083 = sst [smem:[#allocation15]] [#allocation140]
    $region281: #{tpu_custom_call.1} parent=1 // pred_fallthru
      _
    %1085 = shalt.err (0)
    %s1087 = sshll.u32 %s1079, 4
    %s1088 = int_to_ptr.vmem [resolvable:$true] %s1087
    %1090 = dma.hbm_to_vmem [thread:$0]  %s1078, 16, %s1088, %s981
    %s1091 = smul.u32 1, 1
    %s1092 = sshll.u32 %s1091, 4
    %1093 = dma.done [#allocation3], %s1092
    %s1094 = sshll.u32 %s1091, 4
    %1095 = dma.done [#allocation3], %s1094
    %s1096 = sshll.u32 %s1091, 4
    %1097 = dma.done [#allocation3], %s1096
    %s1098 = sshll.u32 %s1091, 4
    %1099 = dma.done [#allocation3], %s1098
    %s1100 = sshll.u32 %s1091, 4
    %1101 = dma.done [#allocation3], %s1100
    %s1102 = sshll.u32 %s1091, 4
    %1103 = dma.done [#allocation3], %s1102
    %s1104 = sshll.u32 %s1091, 4
    %1105 = dma.done [#allocation3], %s1104
    %s1106 = sshll.u32 %s1091, 4
    %1107 = dma.done [#allocation3], %s1106
    %v1108 = vld [vmem:[#allocation2] sm:$0xff]
    %v1109 = vadd.f32 %v1108, 0.0
    %s1110 = sshll.u32 %s1091, 4
    %1111 = dma.done %s207, %s1110
    %s1112 = sshll.u32 %s1091, 4
    %1113 = dma.done %s207, %s1112
    %s1114 = sshll.u32 %s1091, 4
    %1115 = dma.done %s207, %s1114
    %s1116 = sshll.u32 %s1091, 4
    %1117 = dma.done %s207, %s1116
    %s1118 = sshll.u32 %s1091, 4
    %1119 = dma.done %s207, %s1118
    %s1120 = sshll.u32 %s1091, 4
    %1121 = dma.done %s207, %s1120
    %s1122 = sshll.u32 %s1091, 4
    %1123 = dma.done %s207, %s1122
    %s1124 = sshll.u32 %s1091, 4
    %1125 = dma.done %s207, %s1124
    %v1126 = vld [vmem:[%s206] sm:$0xff]
    %v1127 = vadd.f32 %v1109, %v1126
    %s1128 = sshll.u32 %s1091, 4
    %1129 = dma.done %s336, %s1128
    %s1130 = sshll.u32 %s1091, 4
    %1131 = dma.done %s336, %s1130
    %s1132 = sshll.u32 %s1091, 4
    %1133 = dma.done %s336, %s1132
    %s1134 = sshll.u32 %s1091, 4
    %1135 = dma.done %s336, %s1134
    %s1136 = sshll.u32 %s1091, 4
    %1137 = dma.done %s336, %s1136
    %s1138 = sshll.u32 %s1091, 4
    %1139 = dma.done %s336, %s1138
    %s1140 = sshll.u32 %s1091, 4
    %1141 = dma.done %s336, %s1140
    %s1142 = sshll.u32 %s1091, 4
    %1143 = dma.done %s336, %s1142
    %v1144 = vld [vmem:[%s335] sm:$0xff]
    %v1145 = vadd.f32 %v1127, %v1144
    %s1146 = sshll.u32 %s1091, 4
    %1147 = dma.done %s465, %s1146
    %s1148 = sshll.u32 %s1091, 4
    %1149 = dma.done %s465, %s1148
    %s1150 = sshll.u32 %s1091, 4
    %1151 = dma.done %s465, %s1150
    %s1152 = sshll.u32 %s1091, 4
    %1153 = dma.done %s465, %s1152
    %s1154 = sshll.u32 %s1091, 4
    %1155 = dma.done %s465, %s1154
    %s1156 = sshll.u32 %s1091, 4
    %1157 = dma.done %s465, %s1156
    %s1158 = sshll.u32 %s1091, 4
    %1159 = dma.done %s465, %s1158
    %s1160 = sshll.u32 %s1091, 4
    %1161 = dma.done %s465, %s1160
    %v1162 = vld [vmem:[%s464] sm:$0xff]
    %v1163 = vadd.f32 %v1145, %v1162
    %s1164 = sshll.u32 %s1091, 4
    %1165 = dma.done %s594, %s1164
    %s1166 = sshll.u32 %s1091, 4
    %1167 = dma.done %s594, %s1166
    %s1168 = sshll.u32 %s1091, 4
    %1169 = dma.done %s594, %s1168
    %s1170 = sshll.u32 %s1091, 4
    %1171 = dma.done %s594, %s1170
    %s1172 = sshll.u32 %s1091, 4
    %1173 = dma.done %s594, %s1172
    %s1174 = sshll.u32 %s1091, 4
    %1175 = dma.done %s594, %s1174
    %s1176 = sshll.u32 %s1091, 4
    %1177 = dma.done %s594, %s1176
    %s1178 = sshll.u32 %s1091, 4
    %1179 = dma.done %s594, %s1178
    %v1180 = vld [vmem:[%s593] sm:$0xff]
    %v1181 = vadd.f32 %v1163, %v1180
    %s1182 = sshll.u32 %s1091, 4
    %1183 = dma.done %s723, %s1182
    %s1184 = sshll.u32 %s1091, 4
    %1185 = dma.done %s723, %s1184
    %s1186 = sshll.u32 %s1091, 4
    %1187 = dma.done %s723, %s1186
    %s1188 = sshll.u32 %s1091, 4
    %1189 = dma.done %s723, %s1188
    %s1190 = sshll.u32 %s1091, 4
    %1191 = dma.done %s723, %s1190
    %s1192 = sshll.u32 %s1091, 4
    %1193 = dma.done %s723, %s1192
    %s1194 = sshll.u32 %s1091, 4
    %1195 = dma.done %s723, %s1194
    %s1196 = sshll.u32 %s1091, 4
    %1197 = dma.done %s723, %s1196
    %v1198 = vld [vmem:[%s722] sm:$0xff]
    %v1199 = vadd.f32 %v1181, %v1198
    %s1200 = sshll.u32 %s1091, 4
    %1201 = dma.done %s852, %s1200
    %s1202 = sshll.u32 %s1091, 4
    %1203 = dma.done %s852, %s1202
    %s1204 = sshll.u32 %s1091, 4
    %1205 = dma.done %s852, %s1204
    %s1206 = sshll.u32 %s1091, 4
    %1207 = dma.done %s852, %s1206
    %s1208 = sshll.u32 %s1091, 4
    %1209 = dma.done %s852, %s1208
    %s1210 = sshll.u32 %s1091, 4
    %1211 = dma.done %s852, %s1210
    %s1212 = sshll.u32 %s1091, 4
    %1213 = dma.done %s852, %s1212
    %s1214 = sshll.u32 %s1091, 4
    %1215 = dma.done %s852, %s1214
    %v1216 = vld [vmem:[%s851] sm:$0xff]
    %v1217 = vadd.f32 %v1199, %v1216
    %s1218 = sshll.u32 %s1091, 4
    %1219 = dma.done %s981, %s1218
    %s1220 = sshll.u32 %s1091, 4
    %1221 = dma.done %s981, %s1220
    %s1222 = sshll.u32 %s1091, 4
    %1223 = dma.done %s981, %s1222
    %s1224 = sshll.u32 %s1091, 4
    %1225 = dma.done %s981, %s1224
    %s1226 = sshll.u32 %s1091, 4
    %1227 = dma.done %s981, %s1226
    %s1228 = sshll.u32 %s1091, 4
    %1229 = dma.done %s981, %s1228
    %s1230 = sshll.u32 %s1091, 4
    %1231 = dma.done %s981, %s1230
    %s1232 = sshll.u32 %s1091, 4
    %1233 = dma.done %s981, %s1232
    %v1234 = vld [vmem:[%s980] sm:$0xff]
    %v1235 = vadd.f32 %v1217, %v1234
    %v1236 = vmul.f32 %v1235, 0.125
    %v1237 = vpack.c.bf16 %v1236, %v1236
    %v1238 = vld [vmem:[#allocation6] sm:$0xf]
    %v1239 = vld [vmem:[#allocation6 + $0x4] sm:$0xf]
    %v1240 = vld [vmem:[#allocation6 + $0x8] sm:$0xf]
    %v1241 = vld [vmem:[#allocation6 + $0xc] sm:$0xf]
    %v1242 = vld [vmem:[#allocation6 + $0x10] sm:$0xf]
    %v1243 = vld [vmem:[#allocation6 + $0x14] sm:$0xf]
    %v1244 = vld [vmem:[#allocation6 + $0x18] sm:$0xf]
    %v1245 = vld [vmem:[#allocation6 + $0x1c] sm:$0xf]
    %v1246 = vld [vmem:[#allocation6 + $0x20] sm:$0xf]
    %v1247 = vld [vmem:[#allocation6 + $0x24] sm:$0xf]
    %v1248 = vld [vmem:[#allocation6 + $0x28] sm:$0xf]
    %v1249 = vld [vmem:[#allocation6 + $0x2c] sm:$0xf]
    %v1250 = vld [vmem:[#allocation6 + $0x30] sm:$0xf]
    %v1251 = vld [vmem:[#allocation6 + $0x34] sm:$0xf]
    %v1252 = vld [vmem:[#allocation6 + $0x38] sm:$0xf]
    %v1253 = vld [vmem:[#allocation6 + $0x3c] sm:$0xf]
    %v1254 = vld [vmem:[%s3] sm:$0x1]
    %v1256 = vlaneseq
    %v1257 = vshrl.u32 %v1256, 7
    %v1258 = vsub.s32 0, %v1257
    %v1259 = vrot.slane %v1254, %v1258
    %v1277 = vunpack.c.l.b16 %v1238
    %v1278 = vunpack.c.l.b16 %v1239
    %v1279 = vunpack.c.l.b16 %v1240
    %v1280 = vunpack.c.l.b16 %v1241
    %v1281 = vunpack.c.l.b16 %v1242
    %v1282 = vunpack.c.l.b16 %v1243
    %v1283 = vunpack.c.l.b16 %v1244
    %v1284 = vunpack.c.l.b16 %v1245
    %v1285 = vunpack.c.l.b16 %v1246
    %v1286 = vunpack.c.l.b16 %v1247
    %v1287 = vunpack.c.l.b16 %v1248
    %v1288 = vunpack.c.l.b16 %v1249
    %v1289 = vunpack.c.l.b16 %v1250
    %v1290 = vunpack.c.l.b16 %v1251
    %v1291 = vunpack.c.l.b16 %v1252
    %v1292 = vunpack.c.l.b16 %v1253
    %v1293 = vpack.c.b16 %v1278, %v1277
    %v1294 = vpack.c.b16 %v1280, %v1279
    %v1295 = vpack.c.b16 %v1282, %v1281
    %v1296 = vpack.c.b16 %v1284, %v1283
    %v1297 = vpack.c.b16 %v1286, %v1285
    %v1298 = vpack.c.b16 %v1288, %v1287
    %v1299 = vpack.c.b16 %v1290, %v1289
    %v1300 = vpack.c.b16 %v1292, %v1291
    %1309 = vmatprep.subr.bf16.mxu0 0
    %1310 = vmatpush1.bf16.msra.mxu0 %v1300
    %1311 = vmatprep.subr.bf16.mxu0 0
    %1312 = vmatpush1.bf16.msra.mxu0 %v1299
    %1313 = vmatprep.subr.bf16.mxu0 0
    %1314 = vmatpush1.bf16.msra.mxu0 %v1298
    %1315 = vmatprep.subr.bf16.mxu0 0
    %1316 = vmatpush1.bf16.msra.mxu0 %v1297
    %1317 = vmatprep.subr.bf16.mxu0 0
    %1318 = vmatpush1.bf16.msra.mxu0 %v1296
    %1319 = vmatprep.subr.bf16.mxu0 0
    %1320 = vmatpush1.bf16.msra.mxu0 %v1295
    %1321 = vmatprep.subr.bf16.mxu0 0
    %1322 = vmatpush1.bf16.msra.mxu0 %v1294
    %1323 = vmatprep.subr.bf16.mxu0 0
    %1324 = vmatpush1.bf16.msra.mxu0 %v1293
    %1325 = vmatprep.subr.bf16.mxu0 0
    %1326 = vmatpush2.bf16.msra.mxu0 0
    %1327 = vmatprep.subr.bf16.mxu0 0
    %1328 = vmatpush2.bf16.msra.mxu0 0
    %1329 = vmatprep.subr.bf16.mxu0 0
    %1330 = vmatpush2.bf16.msra.mxu0 0
    %1331 = vmatprep.subr.bf16.mxu0 0
    %1332 = vmatpush2.bf16.msra.mxu0 0
    %1333 = vmatprep.subr.bf16.mxu0 0
    %1334 = vmatpush2.bf16.msra.mxu0 0
    %1335 = vmatprep.subr.bf16.mxu0 0
    %1336 = vmatpush2.bf16.msra.mxu0 0
    %1337 = vmatprep.subr.bf16.mxu0 0
    %1338 = vmatpush2.bf16.msra.mxu0 0
    %1339 = vmatprep.subr.bf16.mxu0 0
    %1340 = vmatpush2.bf16.msra.mxu0 0
    %1341 = vmatprep.mubr.bf16.mxu0 0
    %1342 = vmatmul.mubr.bf16.gmra.mxu0 %v1237
    %v1343 = vpop.f32.mrf.mxu0
    %v1344 = vadd.f32 %v1259, %v1343
    %v1345 = vpop.f32.mrf.mxu0
    %v1346 = vpop.f32.mrf.mxu0
    %v1347 = vpop.f32.mrf.mxu0
    %1348 = vdwg.mxu0
    %v1349 = vtanh.pop %v1344
    %v1350 = vpack.c.bf16 %v1349, %v1349
    %v1351 = vld [vmem:[#allocation9] sm:$0xf]
    %v1352 = vld [vmem:[#allocation9 + $0x4] sm:$0xf]
    %v1353 = vld [vmem:[#allocation9 + $0x8] sm:$0xf]
    %v1354 = vld [vmem:[#allocation9 + $0xc] sm:$0xf]
    %v1355 = vld [vmem:[#allocation9 + $0x10] sm:$0xf]
    %v1356 = vld [vmem:[#allocation9 + $0x14] sm:$0xf]
    %v1357 = vld [vmem:[#allocation9 + $0x18] sm:$0xf]
    %v1358 = vld [vmem:[#allocation9 + $0x1c] sm:$0xf]
    %v1359 = vld [vmem:[#allocation9 + $0x20] sm:$0xf]
    %v1360 = vld [vmem:[#allocation9 + $0x24] sm:$0xf]
    %v1361 = vld [vmem:[#allocation9 + $0x28] sm:$0xf]
    %v1362 = vld [vmem:[#allocation9 + $0x2c] sm:$0xf]
    %v1363 = vld [vmem:[#allocation9 + $0x30] sm:$0xf]
    %v1364 = vld [vmem:[#allocation9 + $0x34] sm:$0xf]
    %v1365 = vld [vmem:[#allocation9 + $0x38] sm:$0xf]
    %v1366 = vld [vmem:[#allocation9 + $0x3c] sm:$0xf]
    %v1367 = vld [vmem:[%s5] sm:$0x1]
    %v1369 = vlaneseq
    %v1370 = vshrl.u32 %v1369, 7
    %v1371 = vsub.s32 0, %v1370
    %v1372 = vrot.slane %v1367, %v1371
    %v1390 = vunpack.c.l.b16 %v1351
    %v1391 = vunpack.c.l.b16 %v1352
    %v1392 = vunpack.c.l.b16 %v1353
    %v1393 = vunpack.c.l.b16 %v1354
    %v1394 = vunpack.c.l.b16 %v1355
    %v1395 = vunpack.c.l.b16 %v1356
    %v1396 = vunpack.c.l.b16 %v1357
    %v1397 = vunpack.c.l.b16 %v1358
    %v1398 = vunpack.c.l.b16 %v1359
    %v1399 = vunpack.c.l.b16 %v1360
    %v1400 = vunpack.c.l.b16 %v1361
    %v1401 = vunpack.c.l.b16 %v1362
    %v1402 = vunpack.c.l.b16 %v1363
    %v1403 = vunpack.c.l.b16 %v1364
    %v1404 = vunpack.c.l.b16 %v1365
    %v1405 = vunpack.c.l.b16 %v1366
    %v1406 = vpack.c.b16 %v1391, %v1390
    %v1407 = vpack.c.b16 %v1393, %v1392
    %v1408 = vpack.c.b16 %v1395, %v1394
    %v1409 = vpack.c.b16 %v1397, %v1396
    %v1410 = vpack.c.b16 %v1399, %v1398
    %v1411 = vpack.c.b16 %v1401, %v1400
    %v1412 = vpack.c.b16 %v1403, %v1402
    %v1413 = vpack.c.b16 %v1405, %v1404
    %1422 = vmatprep.subr.bf16.mxu0 0
    %1423 = vmatpush1.bf16.msra.mxu0 %v1413
    %1424 = vmatprep.subr.bf16.mxu0 0
    %1425 = vmatpush1.bf16.msra.mxu0 %v1412
    %1426 = vmatprep.subr.bf16.mxu0 0
    %1427 = vmatpush1.bf16.msra.mxu0 %v1411
    %1428 = vmatprep.subr.bf16.mxu0 0
    %1429 = vmatpush1.bf16.msra.mxu0 %v1410
    %1430 = vmatprep.subr.bf16.mxu0 0
    %1431 = vmatpush1.bf16.msra.mxu0 %v1409
    %1432 = vmatprep.subr.bf16.mxu0 0
    %1433 = vmatpush1.bf16.msra.mxu0 %v1408
    %1434 = vmatprep.subr.bf16.mxu0 0
    %1435 = vmatpush1.bf16.msra.mxu0 %v1407
    %1436 = vmatprep.subr.bf16.mxu0 0
    %1437 = vmatpush1.bf16.msra.mxu0 %v1406
    %1438 = vmatprep.subr.bf16.mxu0 0
    %1439 = vmatpush2.bf16.msra.mxu0 0
    %1440 = vmatprep.subr.bf16.mxu0 0
    %1441 = vmatpush2.bf16.msra.mxu0 0
    %1442 = vmatprep.subr.bf16.mxu0 0
    %1443 = vmatpush2.bf16.msra.mxu0 0
    %1444 = vmatprep.subr.bf16.mxu0 0
    %1445 = vmatpush2.bf16.msra.mxu0 0
    %1446 = vmatprep.subr.bf16.mxu0 0
    %1447 = vmatpush2.bf16.msra.mxu0 0
    %1448 = vmatprep.subr.bf16.mxu0 0
    %1449 = vmatpush2.bf16.msra.mxu0 0
    %1450 = vmatprep.subr.bf16.mxu0 0
    %1451 = vmatpush2.bf16.msra.mxu0 0
    %1452 = vmatprep.subr.bf16.mxu0 0
    %1453 = vmatpush2.bf16.msra.mxu0 0
    %1454 = vmatprep.mubr.bf16.mxu0 0
    %1455 = vmatmul.mubr.bf16.gmra.mxu0 %v1350
    %v1456 = vpop.f32.mrf.mxu0
    %v1457 = vadd.f32 %v1372, %v1456
    %v1458 = vpop.f32.mrf.mxu0
    %v1459 = vpop.f32.mrf.mxu0
    %v1460 = vpop.f32.mrf.mxu0
    %1461 = vdwg.mxu0
    %1462 = vst [vmem:[#allocation11] sm:$0xff] %v1457
    // Predicated region
    $region282: #{tpu_custom_call.1} parent=1 // pred_check
      _
    $region283: #{tpu_custom_call.1} parent=1 // pred_check_branch
      %1464 = sbr.rel (0) target = $region285
    $region284: #{tpu_custom_call.1} parent=1 // pred_region
      %s1466 = ssub.s32 128, 128
      %1467 = vsyncadd [#allocation8], %s1466
      %s1469 = sshll.u32 [#allocation11], 4
      %s1470 = int_to_ptr.vmem [resolvable:$true] %s1469
      %1472 = dma.vmem_to_hbm [thread:$0]  %s1470, 128, %s6, [#allocation8]
    $region285: #{tpu_custom_call.1} parent=1 // pred_fallthru
      _
    // Predicated region
    $region286: #{tpu_custom_call.1} parent=1 // pred_check
      _
    $region287: #{tpu_custom_call.1} parent=1 // pred_check_branch
      %1474 = sbr.rel (0) target = $region289
    $region288: #{tpu_custom_call.1} parent=1 // pred_region
      %1475 = dma.done [#allocation8], 128
    $region289: #{tpu_custom_call.1} parent=1 // pred_fallthru
      _
    %1476 = vsyncpa [#allocation7], 1
    %1477 = vsyncpa [#allocation10], 1
    %1478 = vsyncpa [#allocation8], 1
  %1479 = vsyncmov [#allocation3]
  %s1480 = vpop.sfrf %1479
  %p1481 = scmp.eq.s32.totalorder %s1480, 0
  %p1482 = pneg %p1481
  %1484 = shalt.err (%p1482)
  %s1485 = scalar_lea.sflag [#allocation3], 1
  %1486 = vsyncmov %s1485
  %s1487 = vpop.sfrf %1486
  %p1488 = scmp.eq.s32.totalorder %s1487, 0
  %p1489 = pneg %p1488
  %1491 = shalt.err (%p1489)
  %s1492 = scalar_lea.sflag [#allocation3], 2
  %1493 = vsyncmov %s1492
  %s1494 = vpop.sfrf %1493
  %p1495 = scmp.eq.s32.totalorder %s1494, 0
  %p1496 = pneg %p1495
  %1498 = shalt.err (%p1496)
  %s1499 = scalar_lea.sflag [#allocation3], 3
  %1500 = vsyncmov %s1499
  %s1501 = vpop.sfrf %1500
  %p1502 = scmp.eq.s32.totalorder %s1501, 0
  %p1503 = pneg %p1502
  %1505 = shalt.err (%p1503)
  %s1506 = scalar_lea.sflag [#allocation3], 4
  %1507 = vsyncmov %s1506
  %s1508 = vpop.sfrf %1507
  %p1509 = scmp.eq.s32.totalorder %s1508, 0
  %p1510 = pneg %p1509
  %1512 = shalt.err (%p1510)
  %s1513 = scalar_lea.sflag [#allocation3], 5
  %1514 = vsyncmov %s1513
  %s1515 = vpop.sfrf %1514
  %p1516 = scmp.eq.s32.totalorder %s1515, 0
  %p1517 = pneg %p1516
  %1519 = shalt.err (%p1517)
  %s1520 = scalar_lea.sflag [#allocation3], 6
  %1521 = vsyncmov %s1520
  %s1522 = vpop.sfrf %1521
  %p1523 = scmp.eq.s32.totalorder %s1522, 0
  %p1524 = pneg %p1523
  %1526 = shalt.err (%p1524)
  %s1527 = scalar_lea.sflag [#allocation3], 7
  %1528 = vsyncmov %s1527
  %s1529 = vpop.sfrf %1528
  %p1530 = scmp.eq.s32.totalorder %s1529, 0
  %p1531 = pneg %p1530
  %1533 = shalt.err (%p1531)

</llo_original>
